<compile_context>
chip_gen: v5e
topology: v5e:2x2
jax: 0.10.0
libtpu: 0.0.40
codegen_flags: <defaults>
</compile_context>

<pallas_src>
import functools
from math import sqrt

import jax
import jax.numpy as jnp
from jax import lax
from jax.experimental import pallas as pl
from jax.experimental.pallas import tpu as pltpu


# ----------------------------- helpers -----------------------------

def _round_up(x, m):
    return (x + m - 1) // m * m


def _tile(dim, pref, align):
    """Tile size (<= pref, `align`-aligned) and the padded extent it divides."""
    t = min(pref, _round_up(dim, align))
    return t, _round_up(dim, t)


def _tile_min_steps(dim, pref, align, min_steps=2):
    """Like _tile, but split the dim so its grid axis has >= min_steps steps when
    large enough (keeps both v7x TensorCores busy on 'parallel' axes)."""
    t, dp = _tile(dim, pref, align)
    if dp // t < min_steps and dim >= min_steps * align:
        t = _round_up(-(-dim // min_steps), align)
        dp = _round_up(dim, t)
    return t, dp


# ----------------------------- tiled linear -----------------------------

def _linear_kernel(x_ref, w_ref, b_ref, o_ref, acc_ref, *, trans_lhs):
    @pl.when(pl.program_id(2) == 0)
    def _init():
        acc_ref[...] = jnp.zeros_like(acc_ref)

    x = x_ref[...]
    w = w_ref[...]
    if trans_lhs:
        # y[m, n] = sum_k x[k, m] * w[k, n]   (contraction dim leading on both)
        acc_ref[...] += lax.dot_general(x, w, (((0,), (0,)), ((), ())),
                                        preferred_element_type=jnp.float32)
    else:
        acc_ref[...] += jnp.dot(x, w, preferred_element_type=jnp.float32)

    @pl.when(pl.program_id(2) == pl.num_programs(2) - 1)
    def _finalize():
        o_ref[...] = (acc_ref[...] + b_ref[...]).astype(o_ref.dtype)


def pallas_linear(x, w, b, *, trans_lhs=False, out_dtype=jnp.float32,
                  tm=256, tn=256, tk=512, vmem_limit_bytes=None):
    """y = x @ w + b            (trans_lhs=False, x:(M,K))
       y = x.T @ w + b          (trans_lhs=True,  x:(K,M))
    w:(K,N), b:(N,).  Tiled (M,N,K) matmul, f32 dots, f32 VMEM accumulator."""
    if trans_lhs:
        K, M = x.shape
    else:
        M, K = x.shape
    N = w.shape[1]

    if trans_lhs:
        tm, Mp = _tile(M, tm, 128)            # M is the lane dim of x
        tk, Kp = _tile(K, tk, 8)
    else:
        tm, Mp = _tile_min_steps(M, tm, 8)    # >= 2 grid steps when possible
        tk, Kp = _tile(K, tk, 128)
    tn, Np = _tile(N, tn, 128)

    xf = x.astype(jnp.float32)
    wf = w.astype(jnp.float32)
    bf = b.astype(jnp.float32)
    if trans_lhs:
        if (Kp, Mp) != (K, M):
            xf = jnp.pad(xf, ((0, Kp - K), (0, Mp - M)))
        x_spec = pl.BlockSpec((tk, tm), lambda i, j, k: (k, i))
    else:
        if (Mp, Kp) != (M, K):
            xf = jnp.pad(xf, ((0, Mp - M), (0, Kp - K)))
        x_spec = pl.BlockSpec((tm, tk), lambda i, j, k: (i, k))
    if (Kp, Np) != (K, N):
        wf = jnp.pad(wf, ((0, Kp - K), (0, Np - N)))
    bf = jnp.pad(bf, (0, Np - N)).reshape(1, Np)

    kern = functools.partial(_linear_kernel, trans_lhs=trans_lhs)
    out = pl.pallas_call(
        kern,
        out_shape=jax.ShapeDtypeStruct((Mp, Np), out_dtype),
        grid_spec=pltpu.PrefetchScalarGridSpec(
            num_scalar_prefetch=0,
            grid=(Mp // tm, Np // tn, Kp // tk),
            in_specs=[
                x_spec,
                pl.BlockSpec((tk, tn), lambda i, j, k: (k, j)),
                pl.BlockSpec((1, tn), lambda i, j, k: (0, j)),
            ],
            out_specs=pl.BlockSpec((tm, tn), lambda i, j, k: (i, j)),
            scratch_shapes=[pltpu.VMEM((tm, tn), jnp.float32)],
        ),
        compiler_params=pltpu.CompilerParams(
            dimension_semantics=("parallel", "parallel", "arbitrary"),
            vmem_limit_bytes=vmem_limit_bytes),
    )(xf, wf, bf)

    if (Mp, Np) != (M, N):
        out = out[:M, :N]
    return out


# --------------------- patch embedding (pad + unfold + TokenEmbedding) ---------------------

def patch_embedding(series, w_conv, *, patch_len, stride, n_patches, d_model):
    """series:(BN, T) -> (BN*L, d_model).

    ReplicationPad1d((0, stride)) + unfold(patch_len, stride) via static XLA
    slices, then the Time-LLM TokenEmbedding value embedding (Conv1d k=3,
    circular padding over the patch axis, bias=False) as one lane-dense matmul
    on the stacked [x_{l-1} ; x_l ; x_{l+1}] features."""
    BN, T = series.shape
    padded = jnp.concatenate(
        [series, jnp.repeat(series[:, -1:], stride, axis=-1)], axis=-1)      # (BN, T+stride)
    patches = jnp.stack(
        [padded[:, l * stride: l * stride + patch_len] for l in range(n_patches)],
        axis=1)                                                              # (BN, L, P)
    prev_p = jnp.roll(patches, 1, axis=1)                                    # x_{l-1} (circular)
    next_p = jnp.roll(patches, -1, axis=1)                                   # x_{l+1} (circular)
    feats = jnp.concatenate([prev_p, patches, next_p], axis=-1)              # (BN, L, 3P)
    emb = pallas_linear(feats.reshape(BN * n_patches, 3 * patch_len), w_conv,
                        jnp.zeros((d_model,), jnp.float32))                  # (BN*L, d_model)
    return emb


# ------------- fused reprogramming layer (q-proj + attention + out-proj) -------------

def _reprog_kernel(x_ref, k_ref, v_ref, wq_ref, bq_ref, wo_ref, bo_ref, o_ref,
                   *, n_heads, d_keys):
    scale = 1.0 / sqrt(d_keys)
    x = x_ref[...]                                        # (TR, d_model) f32
    acc = jnp.zeros(o_ref.shape, jnp.float32)             # (TR, d_llm) accumulator
    for h in range(n_heads):                              # static unroll; leading-dim indexing only
        q = (jnp.dot(x, wq_ref[h], preferred_element_type=jnp.float32)
             + bq_ref[h]) * scale                         # (TR, E), softmax scale folded in
        s = lax.dot_general(q, k_ref[h], (((1,), (1,)), ((), ())),
                            preferred_element_type=jnp.float32)              # (TR, S)
        m = jnp.max(s, axis=-1, keepdims=True)
        e = jnp.exp(s - m)
        a = e / jnp.sum(e, axis=-1, keepdims=True)
        attn = jnp.dot(a, v_ref[h], preferred_element_type=jnp.float32)      # (TR, E)
        acc = acc + jnp.dot(attn, wo_ref[h], preferred_element_type=jnp.float32)
    o_ref[...] = (acc + bo_ref[...]).astype(o_ref.dtype)


def pallas_reprogramming(enc2d, k2d, v2d, wq, bq, wo, bo, *, n_heads, d_keys, tr=256):
    """enc2d:(R, d_model)  k2d/v2d:(S, H*E)  ->  (R, d_llm).

    Grid over row blocks only; k, v, w_q, w_o stay resident in VMEM across the
    grid (constant index_maps) and are passed head-major so per-head access is a
    free leading-dim index."""
    R, d_model = enc2d.shape
    S, HE = k2d.shape
    d_llm = wo.shape[1]
    H, E = n_heads, d_keys
    trr, Rp = _tile_min_steps(R, tr, 8)

    x = enc2d.astype(jnp.float32)
    if Rp != R:
        x = jnp.pad(x, ((0, Rp - R), (0, 0)))
    kh = jnp.transpose(k2d.astype(jnp.float32).reshape(S, H, E), (1, 0, 2))       # (H, S, E)
    vh = jnp.transpose(v2d.astype(jnp.float32).reshape(S, H, E), (1, 0, 2))       # (H, S, E)
    wqh = jnp.transpose(wq.astype(jnp.float32).reshape(d_model, H, E), (1, 0, 2))  # (H, dm, E)
    bqh = bq.astype(jnp.float32).reshape(H, 1, E)
    woh = wo.astype(jnp.float32).reshape(H, E, d_llm)                              # (H, E, d_llm)
    bof = bo.astype(jnp.float32).reshape(1, d_llm)

    # TODO(synk): on v7x (64 MiB VMEM), the constant-index-map operands below can be
    # marked pipeline_mode=pl.Buffered(1) to halve their resident footprint.
    kern = functools.partial(_reprog_kernel, n_heads=H, d_keys=E)
    out = pl.pallas_call(
        kern,
        out_shape=jax.ShapeDtypeStruct((Rp, d_llm), jnp.float32),
        grid_spec=pltpu.PrefetchScalarGridSpec(
            num_scalar_prefetch=0,
            grid=(Rp // trr,),
            in_specs=[
                pl.BlockSpec((trr, d_model), lambda i: (i, 0)),
                pl.BlockSpec((H, S, E), lambda i: (0, 0, 0)),
                pl.BlockSpec((H, S, E), lambda i: (0, 0, 0)),
                pl.BlockSpec((H, d_model, E), lambda i: (0, 0, 0)),
                pl.BlockSpec((H, 1, E), lambda i: (0, 0, 0)),
                pl.BlockSpec((H, E, d_llm), lambda i: (0, 0, 0)),
                pl.BlockSpec((1, d_llm), lambda i: (0, 0)),
            ],
            out_specs=pl.BlockSpec((trr, d_llm), lambda i: (i, 0)),
        ),
        compiler_params=pltpu.CompilerParams(dimension_semantics=("parallel",)),
    )(x, kh, vh, wqh, bqh, woh, bof)
    return out[:R] if Rp != R else out


# ----------------------------- model pieces -----------------------------

def calcute_lags(series, top_k):
    """series: (BN, T) -> top-k autocorrelation lags (BN, top_k) int32."""
    # TODO(synk): FFT has no Pallas equivalent; keep jnp.fft on the XLA side.
    T = series.shape[-1]
    q_fft = jnp.fft.rfft(series, axis=-1)
    res = q_fft * jnp.conj(q_fft)
    corr = jnp.fft.irfft(res, n=T, axis=-1)               # (BN, T)
    _, lags = lax.top_k(corr, top_k)                      # mean over size-1 channel axis = identity
    return lags


def init_params(cfg, key):
    ks = jax.random.split(key, 16)
    s = 0.02
    H, E = cfg["n_heads"], cfg["d_keys"]
    HE = H * E
    p = {
        # TokenEmbedding value embedding: Conv1d(patch_len->d_model, k=3, circular, bias=False)
        # stored as a single (3*patch_len, d_model) matmul weight.
        "w_pe": s * jax.random.normal(ks[0], (3 * cfg["patch_len"], cfg["d_model"]), jnp.float32),
        # frozen word embeddings + mapping layer (vocab -> num_tokens)
        "word_emb": s * jax.random.normal(ks[1], (cfg["vocab_size"], cfg["d_llm"]), jnp.float32),
        "w_map": s * jax.random.normal(ks[2], (cfg["vocab_size"], cfg["num_tokens"]), jnp.float32),
        "b_map": jnp.zeros((cfg["num_tokens"],), jnp.float32),
        # ReprogrammingLayer
        "w_q": s * jax.random.normal(ks[3], (cfg["d_model"], HE), jnp.float32),
        "b_q": jnp.zeros((HE,), jnp.float32),
        "w_k": s * jax.random.normal(ks[4], (cfg["d_llm"], HE), jnp.float32),
        "b_k": jnp.zeros((HE,), jnp.float32),
        "w_v": s * jax.random.normal(ks[5], (cfg["d_llm"], HE), jnp.float32),
        "b_v": jnp.zeros((HE,), jnp.float32),
        "w_o": s * jax.random.normal(ks[6], (HE, cfg["d_llm"]), jnp.float32),
        "b_o": jnp.zeros((cfg["d_llm"],), jnp.float32),
        # FlattenHead output projection (head_nf -> pred_len)
        "w_head": s * jax.random.normal(ks[7], (cfg["head_nf"], cfg["pred_len"]), jnp.float32),
        "b_head": jnp.zeros((cfg["pred_len"],), jnp.float32),
        # deterministic stand-in for the tokenized-prompt embedding path
        "w_prompt": s * jax.random.normal(ks[8], (9, cfg["d_llm"]), jnp.float32),
        "prompt_pos": s * jax.random.normal(ks[9], (cfg["prompt_len"], cfg["d_llm"]), jnp.float32),
    }
    return p


def timellm_forward(params, x_enc, cfg):
    B, T, N = x_enc.shape
    eps = 1e-5
    x_enc = x_enc.astype(jnp.float32)

    # ---- Normalize (RevIN, non-affine) 'norm' ----
    means = jnp.mean(x_enc, axis=1, keepdims=True)                    # (B,1,N)
    stdev = jnp.sqrt(jnp.var(x_enc, axis=1, keepdims=True) + eps)     # (B,1,N)
    x = (x_enc - means) / stdev                                       # (B,T,N)

    series = jnp.transpose(x, (0, 2, 1)).reshape(B * N, T)            # (BN,T)

    # ---- prompt statistics ----
    min_values = jnp.min(series, axis=1, keepdims=True)               # (BN,1)
    max_values = jnp.max(series, axis=1, keepdims=True)               # (BN,1)
    medians = jnp.sort(series, axis=1)[:, (T - 1) // 2][:, None]      # (BN,1) lower median
    lags = calcute_lags(series, cfg["top_k"])                         # (BN,5)
    trends = jnp.sum(jnp.diff(series, axis=1), axis=1, keepdims=True) # (BN,1)

    # TODO(synk): tokenizer + frozen-LLM input-embedding lookup of the natural-language
    # prompt has no Pallas equivalent; use a deterministic embedding of the numeric stats.
    stats = jnp.concatenate(
        [min_values, max_values, medians, trends, lags.astype(jnp.float32) / T], axis=-1)
    prompt_embeddings = (
        jnp.tanh(stats @ params["w_prompt"])[:, None, :] + params["prompt_pos"][None]
    )                                                                 # (BN,P,d_llm) f32

    # ---- source embeddings: mapping_layer(word_embeddings.T).T ----
    # transposed-LHS matmul (contract over the vocab dim of both operands) avoids
    # materializing a (vocab x num_tokens) transpose in HBM; only the small
    # (d_llm x num_tokens) result is transposed.
    src_t = pallas_linear(params["word_emb"], params["w_map"], params["b_map"],
                          trans_lhs=True, tm=512, tn=1024, tk=1024,
                          vmem_limit_bytes=48 * 1024 * 1024)          # (d_llm, num_tokens)
    source_embeddings = src_t.T                                       # (num_tokens, d_llm)

    # ---- PatchEmbedding (pad + unfold + TokenEmbedding; dropout is identity in eval) ----
    L = cfg["patch_nums"]
    enc2d = patch_embedding(series, params["w_pe"], patch_len=cfg["patch_len"],
                            stride=cfg["stride"], n_patches=L,
                            d_model=cfg["d_model"])                   # (BN*L, d_model)

    # ---- k / v projections of the source embeddings (batch-independent, computed once) ----
    k2d = pallas_linear(source_embeddings, params["w_k"], params["b_k"])   # (S, H*E)
    v2d = pallas_linear(source_embeddings, params["w_v"], params["b_v"])   # (S, H*E)

    # ---- fused ReprogrammingLayer (q-proj + multi-head attention + out-proj) ----
    enc_out2d = pallas_reprogramming(enc2d, k2d, v2d,
                                     params["w_q"], params["b_q"],
                                     params["w_o"], params["b_o"],
                                     n_heads=cfg["n_heads"], d_keys=cfg["d_keys"])
    enc_out = enc_out2d.reshape(B * N, L, cfg["d_llm"])               # (BN,L,d_llm) f32

    # ---- concat prompt + patch tokens, run LLM backbone ----
    llama_enc_out = jnp.concatenate([prompt_embeddings, enc_out], axis=1)  # (BN,P+L,d_llm)
    # TODO(synk): frozen pretrained LLM backbone (LLaMA/GPT2/BERT) forward cannot be
    # reproduced from this module; use an identity pass-through on the embedded sequence.
    dec_out = llama_enc_out[:, :, : cfg["d_ff"]]                      # (BN,P+L,d_ff)
    dec_out = dec_out.reshape(B, N, dec_out.shape[-2], dec_out.shape[-1])
    dec_out = jnp.transpose(dec_out, (0, 1, 3, 2))                    # (B,N,d_ff,P+L)
    dec_out = dec_out[:, :, :, -L:]                                   # (B,N,d_ff,L)

    # ---- FlattenHead ----
    flat = dec_out.reshape(B * N, cfg["head_nf"])                     # flatten(-2)
    head = pallas_linear(flat, params["w_head"], params["b_head"])
    head = head.reshape(B, N, cfg["pred_len"])

    dec_out = jnp.transpose(head, (0, 2, 1))                          # (B,pred_len,N)

    # ---- Normalize 'denorm' ----
    dec_out = dec_out * stdev + means
    return dec_out[:, -cfg["pred_len"]:, :]


# ----------------------------- main -----------------------------

if __name__ == "__main__":
    B, T, N = 2, 32, 4
    cfg = dict(
        seq_len=T,
        pred_len=8,
        enc_in=N,
        d_model=32,
        n_heads=4,
        d_ff=32,
        d_llm=64,
        patch_len=16,
        stride=8,
        top_k=5,
        vocab_size=128,   # synthetic (real vocab is LLM-sized)
        num_tokens=64,    # module uses 1000; shrunk for the small test
        prompt_len=8,
    )
    cfg["d_keys"] = cfg["d_ff"]  # ReprogrammingLayer(d_model, n_heads, d_keys=d_ff, d_llm)
    cfg["patch_nums"] = int((cfg["seq_len"] - cfg["patch_len"]) / cfg["stride"] + 2)
    cfg["head_nf"] = cfg["d_ff"] * cfg["patch_nums"]

    key = jax.random.PRNGKey(0)
    k_param, k_x = jax.random.split(key)
    params = init_params(cfg, k_param)
    x = jax.random.normal(k_x, (B, T, N), jnp.float32)

    fwd = jax.jit(lambda p, xx: timellm_forward(p, xx, cfg))
    out = fwd(params, x)
    out = jax.block_until_ready(out)
    assert out.shape == (B, cfg["pred_len"], N), out.shape
    assert jnp.all(jnp.isfinite(out))
    print("KERNEL_OK")
</pallas_src>

<mosaic_0001>
module attributes {stable_mosaic.version = 11 : i64} {
  func.func @_linear_kernel(%arg0: i32, %arg1: i32, %arg2: i32, %arg3: memref<16x128xf32, #tpu.memory_space<vmem>>, %arg4: memref<128x128xf32, #tpu.memory_space<vmem>>, %arg5: memref<1x128xf32, #tpu.memory_space<vmem>>, %arg6: memref<16x128xf32, #tpu.memory_space<vmem>>, %arg7: memref<16x128xf32, #tpu.memory_space<vmem>>) attributes {dimension_semantics = [#tpu.dimension_semantics<parallel>, #tpu.dimension_semantics<parallel>, #tpu.dimension_semantics<arbitrary>], iteration_bounds = array<i64: 2, 1, 1>, scalar_prefetch = 0 : i64, scratch_operands = 1 : i64, tpu.core_type = #tpu.core_type<tc>, window_params = [{transform_indices = @transform_0, window_bounds = array<i64: 16, 128>}, {transform_indices = @transform_1, window_bounds = array<i64: 128, 128>}, {transform_indices = @transform_2, window_bounds = array<i64: 1, 128>}, {transform_indices = @transform_3, window_bounds = array<i64: 16, 128>}]} {
    %c0_i32 = arith.constant 0 : i32
    %0 = arith.cmpi eq, %arg2, %c0_i32 : i32
    %1 = arith.extui %0 : i1 to i32
    %c0_i32_0 = arith.constant 0 : i32
    %2 = arith.cmpi ne, %1, %c0_i32_0 : i32
    scf.if %2 {
      %cst_10 = arith.constant 0.000000e+00 : f32
      %12 = vector.broadcast %cst_10 : f32 to vector<16x128xf32>
      %c0_11 = arith.constant 0 : index
      %c0_12 = arith.constant 0 : index
      %13 = vector.load %arg7[%c0_11, %c0_12] : memref<16x128xf32, #tpu.memory_space<vmem>>, vector<16x128xf32>
      tpu.vector_store %arg7[%c0_11, %c0_12], %12 {strides = array<i32>} : memref<16x128xf32, #tpu.memory_space<vmem>>, vector<16x128xf32>,
    } else {
    }
    %c0 = arith.constant 0 : index
    %c0_1 = arith.constant 0 : index
    %3 = vector.load %arg3[%c0, %c0_1] : memref<16x128xf32, #tpu.memory_space<vmem>>, vector<16x128xf32>
    %c0_2 = arith.constant 0 : index
    %c0_3 = arith.constant 0 : index
    %4 = vector.load %arg4[%c0_2, %c0_3] : memref<128x128xf32, #tpu.memory_space<vmem>>, vector<128x128xf32>
    %c0_4 = arith.constant 0 : index
    %c0_5 = arith.constant 0 : index
    %5 = vector.load %arg7[%c0_4, %c0_5] : memref<16x128xf32, #tpu.memory_space<vmem>>, vector<16x128xf32>
    %cst = arith.constant dense<0.000000e+00> : vector<16x128xf32>
    %6 = tpu.matmul %3, %4, %cst {dimension_numbers = #tpu.dot_dimension_numbers<[1], [0], [0], [1], [0, 0, 1, 1], [], []>} : vector<16x128xf32>, vector<128x128xf32>, vector<16x128xf32> -> vector<16x128xf32>
    %7 = arith.addf %5, %6 : vector<16x128xf32>
    %c0_6 = arith.constant 0 : index
    %c0_7 = arith.constant 0 : index
    %8 = vector.load %arg7[%c0_6, %c0_7] : memref<16x128xf32, #tpu.memory_space<vmem>>, vector<16x128xf32>
    tpu.vector_store %arg7[%c0_6, %c0_7], %7 {strides = array<i32>} : memref<16x128xf32, #tpu.memory_space<vmem>>, vector<16x128xf32>,
    %c0_i32_8 = arith.constant 0 : i32
    %9 = arith.cmpi eq, %arg2, %c0_i32_8 : i32
    %10 = arith.extui %9 : i1 to i32
    %c0_i32_9 = arith.constant 0 : i32
    %11 = arith.cmpi ne, %10, %c0_i32_9 : i32
    scf.if %11 {
      %c0_10 = arith.constant 0 : index
      %c0_11 = arith.constant 0 : index
      %12 = vector.load %arg7[%c0_10, %c0_11] : memref<16x128xf32, #tpu.memory_space<vmem>>, vector<16x128xf32>
      %c0_12 = arith.constant 0 : index
      %c0_13 = arith.constant 0 : index
      %13 = vector.load %arg5[%c0_12, %c0_13] : memref<1x128xf32, #tpu.memory_space<vmem>>, vector<1x128xf32>
      %14 = vector.broadcast %13 : vector<1x128xf32> to vector<16x128xf32>
      %15 = arith.addf %12, %14 : vector<16x128xf32>
      %c0_14 = arith.constant 0 : index
      %c0_15 = arith.constant 0 : index
      %16 = vector.load %arg6[%c0_14, %c0_15] : memref<16x128xf32, #tpu.memory_space<vmem>>, vector<16x128xf32>
      tpu.vector_store %arg6[%c0_14, %c0_15], %15 {strides = array<i32>} : memref<16x128xf32, #tpu.memory_space<vmem>>, vector<16x128xf32>,
    } else {
    }
    return
  }
  func.func @transform_0(%arg0: i32, %arg1: i32, %arg2: i32) -> (i32, i32) {
    %c0_i32 = arith.constant 0 : i32
    return %arg0, %arg2 : i32, i32
  }
  func.func @transform_1(%arg0: i32, %arg1: i32, %arg2: i32) -> (i32, i32) {
    %c0_i32 = arith.constant 0 : i32
    return %arg2, %arg1 : i32, i32
  }
  func.func @transform_2(%arg0: i32, %arg1: i32, %arg2: i32) -> (i32, i32) {
    %c0_i32 = arith.constant 0 : i32
    %c0_i32_0 = arith.constant 0 : i32
    return %c0_i32, %arg1 : i32, i32
  }
  func.func @transform_3(%arg0: i32, %arg1: i32, %arg2: i32) -> (i32, i32) {
    %c0_i32 = arith.constant 0 : i32
    return %arg0, %arg1 : i32, i32
  }
}

module attributes {stable_mosaic.version = 11 : i64} {
  func.func @_linear_kernel(%arg0: i32, %arg1: i32, %arg2: i32, %arg3: memref<128x128xf32, #tpu.memory_space<vmem>>, %arg4: memref<128x128xf32, #tpu.memory_space<vmem>>, %arg5: memref<1x128xf32, #tpu.memory_space<vmem>>, %arg6: memref<128x128xf32, #tpu.memory_space<vmem>>, %arg7: memref<128x128xf32, #tpu.memory_space<vmem>>) attributes {dimension_semantics = [#tpu.dimension_semantics<parallel>, #tpu.dimension_semantics<parallel>, #tpu.dimension_semantics<arbitrary>], iteration_bounds = array<i64: 1, 1, 1>, scalar_prefetch = 0 : i64, scratch_operands = 1 : i64, tpu.core_type = #tpu.core_type<tc>, window_params = [{transform_indices = @transform_0, window_bounds = array<i64: 128, 128>}, {transform_indices = @transform_1, window_bounds = array<i64: 128, 128>}, {transform_indices = @transform_2, window_bounds = array<i64: 1, 128>}, {transform_indices = @transform_3, window_bounds = array<i64: 128, 128>}]} {
    %c0_i32 = arith.constant 0 : i32
    %0 = arith.cmpi eq, %arg2, %c0_i32 : i32
    %1 = arith.extui %0 : i1 to i32
    %c0_i32_0 = arith.constant 0 : i32
    %2 = arith.cmpi ne, %1, %c0_i32_0 : i32
    scf.if %2 {
      %cst_10 = arith.constant 0.000000e+00 : f32
      %12 = vector.broadcast %cst_10 : f32 to vector<128x128xf32>
      %c0_11 = arith.constant 0 : index
      %c0_12 = arith.constant 0 : index
      %13 = vector.load %arg7[%c0_11, %c0_12] : memref<128x128xf32, #tpu.memory_space<vmem>>, vector<128x128xf32>
      tpu.vector_store %arg7[%c0_11, %c0_12], %12 {strides = array<i32>} : memref<128x128xf32, #tpu.memory_space<vmem>>, vector<128x128xf32>,
    } else {
    }
    %c0 = arith.constant 0 : index
    %c0_1 = arith.constant 0 : index
    %3 = vector.load %arg3[%c0, %c0_1] : memref<128x128xf32, #tpu.memory_space<vmem>>, vector<128x128xf32>
    %c0_2 = arith.constant 0 : index
    %c0_3 = arith.constant 0 : index
    %4 = vector.load %arg4[%c0_2, %c0_3] : memref<128x128xf32, #tpu.memory_space<vmem>>, vector<128x128xf32>
    %c0_4 = arith.constant 0 : index
    %c0_5 = arith.constant 0 : index
    %5 = vector.load %arg7[%c0_4, %c0_5] : memref<128x128xf32, #tpu.memory_space<vmem>>, vector<128x128xf32>
    %cst = arith.constant dense<0.000000e+00> : vector<128x128xf32>
    %6 = tpu.matmul %3, %4, %cst {dimension_numbers = #tpu.dot_dimension_numbers<[0], [0], [1], [1], [0, 1, 1, 1], [], []>} : vector<128x128xf32>, vector<128x128xf32>, vector<128x128xf32> -> vector<128x128xf32>
    %7 = arith.addf %5, %6 : vector<128x128xf32>
    %c0_6 = arith.constant 0 : index
    %c0_7 = arith.constant 0 : index
    %8 = vector.load %arg7[%c0_6, %c0_7] : memref<128x128xf32, #tpu.memory_space<vmem>>, vector<128x128xf32>
    tpu.vector_store %arg7[%c0_6, %c0_7], %7 {strides = array<i32>} : memref<128x128xf32, #tpu.memory_space<vmem>>, vector<128x128xf32>,
    %c0_i32_8 = arith.constant 0 : i32
    %9 = arith.cmpi eq, %arg2, %c0_i32_8 : i32
    %10 = arith.extui %9 : i1 to i32
    %c0_i32_9 = arith.constant 0 : i32
    %11 = arith.cmpi ne, %10, %c0_i32_9 : i32
    scf.if %11 {
      %c0_10 = arith.constant 0 : index
      %c0_11 = arith.constant 0 : index
      %12 = vector.load %arg7[%c0_10, %c0_11] : memref<128x128xf32, #tpu.memory_space<vmem>>, vector<128x128xf32>
      %c0_12 = arith.constant 0 : index
      %c0_13 = arith.constant 0 : index
      %13 = vector.load %arg5[%c0_12, %c0_13] : memref<1x128xf32, #tpu.memory_space<vmem>>, vector<1x128xf32>
      %14 = vector.broadcast %13 : vector<1x128xf32> to vector<128x128xf32>
      %15 = arith.addf %12, %14 : vector<128x128xf32>
      %c0_14 = arith.constant 0 : index
      %c0_15 = arith.constant 0 : index
      %16 = vector.load %arg6[%c0_14, %c0_15] : memref<128x128xf32, #tpu.memory_space<vmem>>, vector<128x128xf32>
      tpu.vector_store %arg6[%c0_14, %c0_15], %15 {strides = array<i32>} : memref<128x128xf32, #tpu.memory_space<vmem>>, vector<128x128xf32>,
    } else {
    }
    return
  }
  func.func @transform_0(%arg0: i32, %arg1: i32, %arg2: i32) -> (i32, i32) {
    %c0_i32 = arith.constant 0 : i32
    return %arg2, %arg0 : i32, i32
  }
  func.func @transform_1(%arg0: i32, %arg1: i32, %arg2: i32) -> (i32, i32) {
    %c0_i32 = arith.constant 0 : i32
    return %arg2, %arg1 : i32, i32
  }
  func.func @transform_2(%arg0: i32, %arg1: i32, %arg2: i32) -> (i32, i32) {
    %c0_i32 = arith.constant 0 : i32
    %c0_i32_0 = arith.constant 0 : i32
    return %c0_i32, %arg1 : i32, i32
  }
  func.func @transform_3(%arg0: i32, %arg1: i32, %arg2: i32) -> (i32, i32) {
    %c0_i32 = arith.constant 0 : i32
    return %arg0, %arg1 : i32, i32
  }
}

module attributes {stable_mosaic.version = 11 : i64} {
  func.func @_linear_kernel(%arg0: i32, %arg1: i32, %arg2: i32, %arg3: memref<32x128xf32, #tpu.memory_space<vmem>>, %arg4: memref<128x128xf32, #tpu.memory_space<vmem>>, %arg5: memref<1x128xf32, #tpu.memory_space<vmem>>, %arg6: memref<32x128xf32, #tpu.memory_space<vmem>>, %arg7: memref<32x128xf32, #tpu.memory_space<vmem>>) attributes {dimension_semantics = [#tpu.dimension_semantics<parallel>, #tpu.dimension_semantics<parallel>, #tpu.dimension_semantics<arbitrary>], iteration_bounds = array<i64: 2, 1, 1>, scalar_prefetch = 0 : i64, scratch_operands = 1 : i64, tpu.core_type = #tpu.core_type<tc>, window_params = [{transform_indices = @transform_0, window_bounds = array<i64: 32, 128>}, {transform_indices = @transform_1, window_bounds = array<i64: 128, 128>}, {transform_indices = @transform_2, window_bounds = array<i64: 1, 128>}, {transform_indices = @transform_3, window_bounds = array<i64: 32, 128>}]} {
    %c0_i32 = arith.constant 0 : i32
    %0 = arith.cmpi eq, %arg2, %c0_i32 : i32
    %1 = arith.extui %0 : i1 to i32
    %c0_i32_0 = arith.constant 0 : i32
    %2 = arith.cmpi ne, %1, %c0_i32_0 : i32
    scf.if %2 {
      %cst_10 = arith.constant 0.000000e+00 : f32
      %12 = vector.broadcast %cst_10 : f32 to vector<32x128xf32>
      %c0_11 = arith.constant 0 : index
      %c0_12 = arith.constant 0 : index
      %13 = vector.load %arg7[%c0_11, %c0_12] : memref<32x128xf32, #tpu.memory_space<vmem>>, vector<32x128xf32>
      tpu.vector_store %arg7[%c0_11, %c0_12], %12 {strides = array<i32>} : memref<32x128xf32, #tpu.memory_space<vmem>>, vector<32x128xf32>,
    } else {
    }
    %c0 = arith.constant 0 : index
    %c0_1 = arith.constant 0 : index
    %3 = vector.load %arg3[%c0, %c0_1] : memref<32x128xf32, #tpu.memory_space<vmem>>, vector<32x128xf32>
    %c0_2 = arith.constant 0 : index
    %c0_3 = arith.constant 0 : index
    %4 = vector.load %arg4[%c0_2, %c0_3] : memref<128x128xf32, #tpu.memory_space<vmem>>, vector<128x128xf32>
    %c0_4 = arith.constant 0 : index
    %c0_5 = arith.constant 0 : index
    %5 = vector.load %arg7[%c0_4, %c0_5] : memref<32x128xf32, #tpu.memory_space<vmem>>, vector<32x128xf32>
    %cst = arith.constant dense<0.000000e+00> : vector<32x128xf32>
    %6 = tpu.matmul %3, %4, %cst {dimension_numbers = #tpu.dot_dimension_numbers<[1], [0], [0], [1], [0, 0, 1, 1], [], []>} : vector<32x128xf32>, vector<128x128xf32>, vector<32x128xf32> -> vector<32x128xf32>
    %7 = arith.addf %5, %6 : vector<32x128xf32>
    %c0_6 = arith.constant 0 : index
    %c0_7 = arith.constant 0 : index
    %8 = vector.load %arg7[%c0_6, %c0_7] : memref<32x128xf32, #tpu.memory_space<vmem>>, vector<32x128xf32>
    tpu.vector_store %arg7[%c0_6, %c0_7], %7 {strides = array<i32>} : memref<32x128xf32, #tpu.memory_space<vmem>>, vector<32x128xf32>,
    %c0_i32_8 = arith.constant 0 : i32
    %9 = arith.cmpi eq, %arg2, %c0_i32_8 : i32
    %10 = arith.extui %9 : i1 to i32
    %c0_i32_9 = arith.constant 0 : i32
    %11 = arith.cmpi ne, %10, %c0_i32_9 : i32
    scf.if %11 {
      %c0_10 = arith.constant 0 : index
      %c0_11 = arith.constant 0 : index
      %12 = vector.load %arg7[%c0_10, %c0_11] : memref<32x128xf32, #tpu.memory_space<vmem>>, vector<32x128xf32>
      %c0_12 = arith.constant 0 : index
      %c0_13 = arith.constant 0 : index
      %13 = vector.load %arg5[%c0_12, %c0_13] : memref<1x128xf32, #tpu.memory_space<vmem>>, vector<1x128xf32>
      %14 = vector.broadcast %13 : vector<1x128xf32> to vector<32x128xf32>
      %15 = arith.addf %12, %14 : vector<32x128xf32>
      %c0_14 = arith.constant 0 : index
      %c0_15 = arith.constant 0 : index
      %16 = vector.load %arg6[%c0_14, %c0_15] : memref<32x128xf32, #tpu.memory_space<vmem>>, vector<32x128xf32>
      tpu.vector_store %arg6[%c0_14, %c0_15], %15 {strides = array<i32>} : memref<32x128xf32, #tpu.memory_space<vmem>>, vector<32x128xf32>,
    } else {
    }
    return
  }
  func.func @transform_0(%arg0: i32, %arg1: i32, %arg2: i32) -> (i32, i32) {
    %c0_i32 = arith.constant 0 : i32
    return %arg0, %arg2 : i32, i32
  }
  func.func @transform_1(%arg0: i32, %arg1: i32, %arg2: i32) -> (i32, i32) {
    %c0_i32 = arith.constant 0 : i32
    return %arg2, %arg1 : i32, i32
  }
  func.func @transform_2(%arg0: i32, %arg1: i32, %arg2: i32) -> (i32, i32) {
    %c0_i32 = arith.constant 0 : i32
    %c0_i32_0 = arith.constant 0 : i32
    return %c0_i32, %arg1 : i32, i32
  }
  func.func @transform_3(%arg0: i32, %arg1: i32, %arg2: i32) -> (i32, i32) {
    %c0_i32 = arith.constant 0 : i32
    return %arg0, %arg1 : i32, i32
  }
}

module attributes {stable_mosaic.version = 11 : i64} {
  func.func @_reprog_kernel(%arg0: i32, %arg1: memref<16x32xf32, #tpu.memory_space<vmem>>, %arg2: memref<4x64x32xf32, #tpu.memory_space<vmem>>, %arg3: memref<4x64x32xf32, #tpu.memory_space<vmem>>, %arg4: memref<4x32x32xf32, #tpu.memory_space<vmem>>, %arg5: memref<4x1x32xf32, #tpu.memory_space<vmem>>, %arg6: memref<4x32x64xf32, #tpu.memory_space<vmem>>, %arg7: memref<1x64xf32, #tpu.memory_space<vmem>>, %arg8: memref<16x64xf32, #tpu.memory_space<vmem>>) attributes {dimension_semantics = [#tpu.dimension_semantics<parallel>], iteration_bounds = array<i64: 2>, scalar_prefetch = 0 : i64, scratch_operands = 0 : i64, tpu.core_type = #tpu.core_type<tc>, window_params = [{transform_indices = @transform_0, window_bounds = array<i64: 16, 32>}, {pipeline_mode = #tpu.pipeline_mode<synchronous>, transform_indices = @transform_1, window_bounds = array<i64: 4, 64, 32>}, {pipeline_mode = #tpu.pipeline_mode<synchronous>, transform_indices = @transform_2, window_bounds = array<i64: 4, 64, 32>}, {pipeline_mode = #tpu.pipeline_mode<synchronous>, transform_indices = @transform_3, window_bounds = array<i64: 4, 32, 32>}, {pipeline_mode = #tpu.pipeline_mode<synchronous>, transform_indices = @transform_4, window_bounds = array<i64: 4, 1, 32>}, {pipeline_mode = #tpu.pipeline_mode<synchronous>, transform_indices = @transform_5, window_bounds = array<i64: 4, 32, 64>}, {pipeline_mode = #tpu.pipeline_mode<synchronous>, transform_indices = @transform_6, window_bounds = array<i64: 1, 64>}, {transform_indices = @transform_7, window_bounds = array<i64: 16, 64>}]} {
    %c0 = arith.constant 0 : index
    %c0_0 = arith.constant 0 : index
    %0 = vector.load %arg1[%c0, %c0_0] : memref<16x32xf32, #tpu.memory_space<vmem>>, vector<16x32xf32>
    %cst = arith.constant 0.000000e+00 : f32
    %1 = vector.broadcast %cst : f32 to vector<16x64xf32>
    %c0_1 = arith.constant 0 : index
    %c0_2 = arith.constant 0 : index
    %c0_3 = arith.constant 0 : index
    %2 = vector.load %arg4[%c0_1, %c0_2, %c0_3] : memref<4x32x32xf32, #tpu.memory_space<vmem>>, vector<1x32x32xf32>
    %3 = vector.shape_cast %2 : vector<1x32x32xf32> to vector<32x32xf32>
    %cst_4 = arith.constant dense<0.000000e+00> : vector<16x32xf32>
    %4 = tpu.matmul %0, %3, %cst_4 {dimension_numbers = #tpu.dot_dimension_numbers<[1], [0], [0], [1], [0, 0, 1, 1], [], []>} : vector<16x32xf32>, vector<32x32xf32>, vector<16x32xf32> -> vector<16x32xf32>
    %c0_5 = arith.constant 0 : index
    %c0_6 = arith.constant 0 : index
    %c0_7 = arith.constant 0 : index
    %5 = vector.load %arg5[%c0_5, %c0_6, %c0_7] : memref<4x1x32xf32, #tpu.memory_space<vmem>>, vector<1x1x32xf32>
    %6 = vector.shape_cast %5 : vector<1x1x32xf32> to vector<1x32xf32>
    %7 = vector.broadcast %6 : vector<1x32xf32> to vector<16x32xf32>
    %8 = arith.addf %4, %7 : vector<16x32xf32>
    %cst_8 = arith.constant 0.176776692 : f32
    %9 = vector.broadcast %cst_8 : f32 to vector<16x32xf32>
    %10 = arith.mulf %8, %9 : vector<16x32xf32>
    %c0_9 = arith.constant 0 : index
    %c0_10 = arith.constant 0 : index
    %c0_11 = arith.constant 0 : index
    %11 = vector.load %arg2[%c0_9, %c0_10, %c0_11] : memref<4x64x32xf32, #tpu.memory_space<vmem>>, vector<1x64x32xf32>
    %12 = vector.shape_cast %11 : vector<1x64x32xf32> to vector<64x32xf32>
    %cst_12 = arith.constant dense<0.000000e+00> : vector<16x64xf32>
    %13 = tpu.matmul %10, %12, %cst_12 {dimension_numbers = #tpu.dot_dimension_numbers<[1], [1], [0], [0], [0, 0, 1, 0], [], []>} : vector<16x32xf32>, vector<64x32xf32>, vector<16x64xf32> -> vector<16x64xf32>
    %cst_13 = arith.constant dense<0xFF800000> : vector<16xf32>
    %14 = vector.multi_reduction <maximumf>, %13, %cst_13 [1] : vector<16x64xf32> to vector<16xf32>
    %15 = vector.shape_cast %14 : vector<16xf32> to vector<16x1xf32>
    %16 = vector.broadcast %15 : vector<16x1xf32> to vector<16x64xf32>
    %17 = arith.subf %13, %16 : vector<16x64xf32>
    %18 = math.exp %17 : vector<16x64xf32>
    %cst_14 = arith.constant dense<0.000000e+00> : vector<16xf32>
    %19 = vector.multi_reduction <add>, %18, %cst_14 [1] : vector<16x64xf32> to vector<16xf32>
    %20 = vector.shape_cast %19 : vector<16xf32> to vector<16x1xf32>
    %21 = vector.broadcast %20 : vector<16x1xf32> to vector<16x64xf32>
    %22 = arith.divf %18, %21 : vector<16x64xf32>
    %c0_15 = arith.constant 0 : index
    %c0_16 = arith.constant 0 : index
    %c0_17 = arith.constant 0 : index
    %23 = vector.load %arg3[%c0_15, %c0_16, %c0_17] : memref<4x64x32xf32, #tpu.memory_space<vmem>>, vector<1x64x32xf32>
    %24 = vector.shape_cast %23 : vector<1x64x32xf32> to vector<64x32xf32>
    %cst_18 = arith.constant dense<0.000000e+00> : vector<16x32xf32>
    %25 = tpu.matmul %22, %24, %cst_18 {dimension_numbers = #tpu.dot_dimension_numbers<[1], [0], [0], [1], [0, 0, 1, 1], [], []>} : vector<16x64xf32>, vector<64x32xf32>, vector<16x32xf32> -> vector<16x32xf32>
    %c0_19 = arith.constant 0 : index
    %c0_20 = arith.constant 0 : index
    %c0_21 = arith.constant 0 : index
    %26 = vector.load %arg6[%c0_19, %c0_20, %c0_21] : memref<4x32x64xf32, #tpu.memory_space<vmem>>, vector<1x32x64xf32>
    %27 = vector.shape_cast %26 : vector<1x32x64xf32> to vector<32x64xf32>
    %cst_22 = arith.constant dense<0.000000e+00> : vector<16x64xf32>
    %28 = tpu.matmul %25, %27, %cst_22 {dimension_numbers = #tpu.dot_dimension_numbers<[1], [0], [0], [1], [0, 0, 1, 1], [], []>} : vector<16x32xf32>, vector<32x64xf32>, vector<16x64xf32> -> vector<16x64xf32>
    %29 = arith.addf %1, %28 : vector<16x64xf32>
    %c1 = arith.constant 1 : index
    %c0_23 = arith.constant 0 : index
    %c0_24 = arith.constant 0 : index
    %30 = vector.load %arg4[%c1, %c0_23, %c0_24] : memref<4x32x32xf32, #tpu.memory_space<vmem>>, vector<1x32x32xf32>
    %31 = vector.shape_cast %30 : vector<1x32x32xf32> to vector<32x32xf32>
    %cst_25 = arith.constant dense<0.000000e+00> : vector<16x32xf32>
    %32 = tpu.matmul %0, %31, %cst_25 {dimension_numbers = #tpu.dot_dimension_numbers<[1], [0], [0], [1], [0, 0, 1, 1], [], []>} : vector<16x32xf32>, vector<32x32xf32>, vector<16x32xf32> -> vector<16x32xf32>
    %c1_26 = arith.constant 1 : index
    %c0_27 = arith.constant 0 : index
    %c0_28 = arith.constant 0 : index
    %33 = vector.load %arg5[%c1_26, %c0_27, %c0_28] : memref<4x1x32xf32, #tpu.memory_space<vmem>>, vector<1x1x32xf32>
    %34 = vector.shape_cast %33 : vector<1x1x32xf32> to vector<1x32xf32>
    %35 = vector.broadcast %34 : vector<1x32xf32> to vector<16x32xf32>
    %36 = arith.addf %32, %35 : vector<16x32xf32>
    %cst_29 = arith.constant 0.176776692 : f32
    %37 = vector.broadcast %cst_29 : f32 to vector<16x32xf32>
    %38 = arith.mulf %36, %37 : vector<16x32xf32>
    %c1_30 = arith.constant 1 : index
    %c0_31 = arith.constant 0 : index
    %c0_32 = arith.constant 0 : index
    %39 = vector.load %arg2[%c1_30, %c0_31, %c0_32] : memref<4x64x32xf32, #tpu.memory_space<vmem>>, vector<1x64x32xf32>
    %40 = vector.shape_cast %39 : vector<1x64x32xf32> to vector<64x32xf32>
    %cst_33 = arith.constant dense<0.000000e+00> : vector<16x64xf32>
    %41 = tpu.matmul %38, %40, %cst_33 {dimension_numbers = #tpu.dot_dimension_numbers<[1], [1], [0], [0], [0, 0, 1, 0], [], []>} : vector<16x32xf32>, vector<64x32xf32>, vector<16x64xf32> -> vector<16x64xf32>
    %cst_34 = arith.constant dense<0xFF800000> : vector<16xf32>
    %42 = vector.multi_reduction <maximumf>, %41, %cst_34 [1] : vector<16x64xf32> to vector<16xf32>
    %43 = vector.shape_cast %42 : vector<16xf32> to vector<16x1xf32>
    %44 = vector.broadcast %43 : vector<16x1xf32> to vector<16x64xf32>
    %45 = arith.subf %41, %44 : vector<16x64xf32>
    %46 = math.exp %45 : vector<16x64xf32>
    %cst_35 = arith.constant dense<0.000000e+00> : vector<16xf32>
    %47 = vector.multi_reduction <add>, %46, %cst_35 [1] : vector<16x64xf32> to vector<16xf32>
    %48 = vector.shape_cast %47 : vector<16xf32> to vector<16x1xf32>
    %49 = vector.broadcast %48 : vector<16x1xf32> to vector<16x64xf32>
    %50 = arith.divf %46, %49 : vector<16x64xf32>
    %c1_36 = arith.constant 1 : index
    %c0_37 = arith.constant 0 : index
    %c0_38 = arith.constant 0 : index
    %51 = vector.load %arg3[%c1_36, %c0_37, %c0_38] : memref<4x64x32xf32, #tpu.memory_space<vmem>>, vector<1x64x32xf32>
    %52 = vector.shape_cast %51 : vector<1x64x32xf32> to vector<64x32xf32>
    %cst_39 = arith.constant dense<0.000000e+00> : vector<16x32xf32>
    %53 = tpu.matmul %50, %52, %cst_39 {dimension_numbers = #tpu.dot_dimension_numbers<[1], [0], [0], [1], [0, 0, 1, 1], [], []>} : vector<16x64xf32>, vector<64x32xf32>, vector<16x32xf32> -> vector<16x32xf32>
    %c1_40 = arith.constant 1 : index
    %c0_41 = arith.constant 0 : index
    %c0_42 = arith.constant 0 : index
    %54 = vector.load %arg6[%c1_40, %c0_41, %c0_42] : memref<4x32x64xf32, #tpu.memory_space<vmem>>, vector<1x32x64xf32>
    %55 = vector.shape_cast %54 : vector<1x32x64xf32> to vector<32x64xf32>
    %cst_43 = arith.constant dense<0.000000e+00> : vector<16x64xf32>
    %56 = tpu.matmul %53, %55, %cst_43 {dimension_numbers = #tpu.dot_dimension_numbers<[1], [0], [0], [1], [0, 0, 1, 1], [], []>} : vector<16x32xf32>, vector<32x64xf32>, vector<16x64xf32> -> vector<16x64xf32>
    %57 = arith.addf %29, %56 : vector<16x64xf32>
    %c2 = arith.constant 2 : index
    %c0_44 = arith.constant 0 : index
    %c0_45 = arith.constant 0 : index
    %58 = vector.load %arg4[%c2, %c0_44, %c0_45] : memref<4x32x32xf32, #tpu.memory_space<vmem>>, vector<1x32x32xf32>
    %59 = vector.shape_cast %58 : vector<1x32x32xf32> to vector<32x32xf32>
    %cst_46 = arith.constant dense<0.000000e+00> : vector<16x32xf32>
    %60 = tpu.matmul %0, %59, %cst_46 {dimension_numbers = #tpu.dot_dimension_numbers<[1], [0], [0], [1], [0, 0, 1, 1], [], []>} : vector<16x32xf32>, vector<32x32xf32>, vector<16x32xf32> -> vector<16x32xf32>
    %c2_47 = arith.constant 2 : index
    %c0_48 = arith.constant 0 : index
    %c0_49 = arith.constant 0 : index
    %61 = vector.load %arg5[%c2_47, %c0_48, %c0_49] : memref<4x1x32xf32, #tpu.memory_space<vmem>>, vector<1x1x32xf32>
    %62 = vector.shape_cast %61 : vector<1x1x32xf32> to vector<1x32xf32>
    %63 = vector.broadcast %62 : vector<1x32xf32> to vector<16x32xf32>
    %64 = arith.addf %60, %63 : vector<16x32xf32>
    %cst_50 = arith.constant 0.176776692 : f32
    %65 = vector.broadcast %cst_50 : f32 to vector<16x32xf32>
    %66 = arith.mulf %64, %65 : vector<16x32xf32>
    %c2_51 = arith.constant 2 : index
    %c0_52 = arith.constant 0 : index
    %c0_53 = arith.constant 0 : index
    %67 = vector.load %arg2[%c2_51, %c0_52, %c0_53] : memref<4x64x32xf32, #tpu.memory_space<vmem>>, vector<1x64x32xf32>
    %68 = vector.shape_cast %67 : vector<1x64x32xf32> to vector<64x32xf32>
    %cst_54 = arith.constant dense<0.000000e+00> : vector<16x64xf32>
    %69 = tpu.matmul %66, %68, %cst_54 {dimension_numbers = #tpu.dot_dimension_numbers<[1], [1], [0], [0], [0, 0, 1, 0], [], []>} : vector<16x32xf32>, vector<64x32xf32>, vector<16x64xf32> -> vector<16x64xf32>
    %cst_55 = arith.constant dense<0xFF800000> : vector<16xf32>
    %70 = vector.multi_reduction <maximumf>, %69, %cst_55 [1] : vector<16x64xf32> to vector<16xf32>
    %71 = vector.shape_cast %70 : vector<16xf32> to vector<16x1xf32>
    %72 = vector.broadcast %71 : vector<16x1xf32> to vector<16x64xf32>
    %73 = arith.subf %69, %72 : vector<16x64xf32>
    %74 = math.exp %73 : vector<16x64xf32>
    %cst_56 = arith.constant dense<0.000000e+00> : vector<16xf32>
    %75 = vector.multi_reduction <add>, %74, %cst_56 [1] : vector<16x64xf32> to vector<16xf32>
    %76 = vector.shape_cast %75 : vector<16xf32> to vector<16x1xf32>
    %77 = vector.broadcast %76 : vector<16x1xf32> to vector<16x64xf32>
    %78 = arith.divf %74, %77 : vector<16x64xf32>
    %c2_57 = arith.constant 2 : index
    %c0_58 = arith.constant 0 : index
    %c0_59 = arith.constant 0 : index
    %79 = vector.load %arg3[%c2_57, %c0_58, %c0_59] : memref<4x64x32xf32, #tpu.memory_space<vmem>>, vector<1x64x32xf32>
    %80 = vector.shape_cast %79 : vector<1x64x32xf32> to vector<64x32xf32>
    %cst_60 = arith.constant dense<0.000000e+00> : vector<16x32xf32>
    %81 = tpu.matmul %78, %80, %cst_60 {dimension_numbers = #tpu.dot_dimension_numbers<[1], [0], [0], [1], [0, 0, 1, 1], [], []>} : vector<16x64xf32>, vector<64x32xf32>, vector<16x32xf32> -> vector<16x32xf32>
    %c2_61 = arith.constant 2 : index
    %c0_62 = arith.constant 0 : index
    %c0_63 = arith.constant 0 : index
    %82 = vector.load %arg6[%c2_61, %c0_62, %c0_63] : memref<4x32x64xf32, #tpu.memory_space<vmem>>, vector<1x32x64xf32>
    %83 = vector.shape_cast %82 : vector<1x32x64xf32> to vector<32x64xf32>
    %cst_64 = arith.constant dense<0.000000e+00> : vector<16x64xf32>
    %84 = tpu.matmul %81, %83, %cst_64 {dimension_numbers = #tpu.dot_dimension_numbers<[1], [0], [0], [1], [0, 0, 1, 1], [], []>} : vector<16x32xf32>, vector<32x64xf32>, vector<16x64xf32> -> vector<16x64xf32>
    %85 = arith.addf %57, %84 : vector<16x64xf32>
    %c3 = arith.constant 3 : index
    %c0_65 = arith.constant 0 : index
    %c0_66 = arith.constant 0 : index
    %86 = vector.load %arg4[%c3, %c0_65, %c0_66] : memref<4x32x32xf32, #tpu.memory_space<vmem>>, vector<1x32x32xf32>
    %87 = vector.shape_cast %86 : vector<1x32x32xf32> to vector<32x32xf32>
    %cst_67 = arith.constant dense<0.000000e+00> : vector<16x32xf32>
    %88 = tpu.matmul %0, %87, %cst_67 {dimension_numbers = #tpu.dot_dimension_numbers<[1], [0], [0], [1], [0, 0, 1, 1], [], []>} : vector<16x32xf32>, vector<32x32xf32>, vector<16x32xf32> -> vector<16x32xf32>
    %c3_68 = arith.constant 3 : index
    %c0_69 = arith.constant 0 : index
    %c0_70 = arith.constant 0 : index
    %89 = vector.load %arg5[%c3_68, %c0_69, %c0_70] : memref<4x1x32xf32, #tpu.memory_space<vmem>>, vector<1x1x32xf32>
    %90 = vector.shape_cast %89 : vector<1x1x32xf32> to vector<1x32xf32>
    %91 = vector.broadcast %90 : vector<1x32xf32> to vector<16x32xf32>
    %92 = arith.addf %88, %91 : vector<16x32xf32>
    %cst_71 = arith.constant 0.176776692 : f32
    %93 = vector.broadcast %cst_71 : f32 to vector<16x32xf32>
    %94 = arith.mulf %92, %93 : vector<16x32xf32>
    %c3_72 = arith.constant 3 : index
    %c0_73 = arith.constant 0 : index
    %c0_74 = arith.constant 0 : index
    %95 = vector.load %arg2[%c3_72, %c0_73, %c0_74] : memref<4x64x32xf32, #tpu.memory_space<vmem>>, vector<1x64x32xf32>
    %96 = vector.shape_cast %95 : vector<1x64x32xf32> to vector<64x32xf32>
    %cst_75 = arith.constant dense<0.000000e+00> : vector<16x64xf32>
    %97 = tpu.matmul %94, %96, %cst_75 {dimension_numbers = #tpu.dot_dimension_numbers<[1], [1], [0], [0], [0, 0, 1, 0], [], []>} : vector<16x32xf32>, vector<64x32xf32>, vector<16x64xf32> -> vector<16x64xf32>
    %cst_76 = arith.constant dense<0xFF800000> : vector<16xf32>
    %98 = vector.multi_reduction <maximumf>, %97, %cst_76 [1] : vector<16x64xf32> to vector<16xf32>
    %99 = vector.shape_cast %98 : vector<16xf32> to vector<16x1xf32>
    %100 = vector.broadcast %99 : vector<16x1xf32> to vector<16x64xf32>
    %101 = arith.subf %97, %100 : vector<16x64xf32>
    %102 = math.exp %101 : vector<16x64xf32>
    %cst_77 = arith.constant dense<0.000000e+00> : vector<16xf32>
    %103 = vector.multi_reduction <add>, %102, %cst_77 [1] : vector<16x64xf32> to vector<16xf32>
    %104 = vector.shape_cast %103 : vector<16xf32> to vector<16x1xf32>
    %105 = vector.broadcast %104 : vector<16x1xf32> to vector<16x64xf32>
    %106 = arith.divf %102, %105 : vector<16x64xf32>
    %c3_78 = arith.constant 3 : index
    %c0_79 = arith.constant 0 : index
    %c0_80 = arith.constant 0 : index
    %107 = vector.load %arg3[%c3_78, %c0_79, %c0_80] : memref<4x64x32xf32, #tpu.memory_space<vmem>>, vector<1x64x32xf32>
    %108 = vector.shape_cast %107 : vector<1x64x32xf32> to vector<64x32xf32>
    %cst_81 = arith.constant dense<0.000000e+00> : vector<16x32xf32>
    %109 = tpu.matmul %106, %108, %cst_81 {dimension_numbers = #tpu.dot_dimension_numbers<[1], [0], [0], [1], [0, 0, 1, 1], [], []>} : vector<16x64xf32>, vector<64x32xf32>, vector<16x32xf32> -> vector<16x32xf32>
    %c3_82 = arith.constant 3 : index
    %c0_83 = arith.constant 0 : index
    %c0_84 = arith.constant 0 : index
    %110 = vector.load %arg6[%c3_82, %c0_83, %c0_84] : memref<4x32x64xf32, #tpu.memory_space<vmem>>, vector<1x32x64xf32>
    %111 = vector.shape_cast %110 : vector<1x32x64xf32> to vector<32x64xf32>
    %cst_85 = arith.constant dense<0.000000e+00> : vector<16x64xf32>
    %112 = tpu.matmul %109, %111, %cst_85 {dimension_numbers = #tpu.dot_dimension_numbers<[1], [0], [0], [1], [0, 0, 1, 1], [], []>} : vector<16x32xf32>, vector<32x64xf32>, vector<16x64xf32> -> vector<16x64xf32>
    %113 = arith.addf %85, %112 : vector<16x64xf32>
    %c0_86 = arith.constant 0 : index
    %c0_87 = arith.constant 0 : index
    %114 = vector.load %arg7[%c0_86, %c0_87] : memref<1x64xf32, #tpu.memory_space<vmem>>, vector<1x64xf32>
    %115 = vector.broadcast %114 : vector<1x64xf32> to vector<16x64xf32>
    %116 = arith.addf %113, %115 : vector<16x64xf32>
    %c0_88 = arith.constant 0 : index
    %c0_89 = arith.constant 0 : index
    %117 = vector.load %arg8[%c0_88, %c0_89] : memref<16x64xf32, #tpu.memory_space<vmem>>, vector<16x64xf32>
    tpu.vector_store %arg8[%c0_88, %c0_89], %116 {strides = array<i32>} : memref<16x64xf32, #tpu.memory_space<vmem>>, vector<16x64xf32>,
    return
  }
  func.func @transform_0(%arg0: i32) -> (i32, i32) {
    %c0_i32 = arith.constant 0 : i32
    %c0_i32_0 = arith.constant 0 : i32
    return %arg0, %c0_i32 : i32, i32
  }
  func.func @transform_1(%arg0: i32) -> (i32, i32, i32) {
    %c0_i32 = arith.constant 0 : i32
    %c0_i32_0 = arith.constant 0 : i32
    %c0_i32_1 = arith.constant 0 : i32
    %c0_i32_2 = arith.constant 0 : i32
    return %c0_i32, %c0_i32_0, %c0_i32_1 : i32, i32, i32
  }
  func.func @transform_2(%arg0: i32) -> (i32, i32, i32) {
    %c0_i32 = arith.constant 0 : i32
    %c0_i32_0 = arith.constant 0 : i32
    %c0_i32_1 = arith.constant 0 : i32
    %c0_i32_2 = arith.constant 0 : i32
    return %c0_i32, %c0_i32_0, %c0_i32_1 : i32, i32, i32
  }
  func.func @transform_3(%arg0: i32) -> (i32, i32, i32) {
    %c0_i32 = arith.constant 0 : i32
    %c0_i32_0 = arith.constant 0 : i32
    %c0_i32_1 = arith.constant 0 : i32
    %c0_i32_2 = arith.constant 0 : i32
    return %c0_i32, %c0_i32_0, %c0_i32_1 : i32, i32, i32
  }
  func.func @transform_4(%arg0: i32) -> (i32, i32, i32) {
    %c0_i32 = arith.constant 0 : i32
    %c0_i32_0 = arith.constant 0 : i32
    %c0_i32_1 = arith.constant 0 : i32
    %c0_i32_2 = arith.constant 0 : i32
    return %c0_i32, %c0_i32_0, %c0_i32_1 : i32, i32, i32
  }
  func.func @transform_5(%arg0: i32) -> (i32, i32, i32) {
    %c0_i32 = arith.constant 0 : i32
    %c0_i32_0 = arith.constant 0 : i32
    %c0_i32_1 = arith.constant 0 : i32
    %c0_i32_2 = arith.constant 0 : i32
    return %c0_i32, %c0_i32_0, %c0_i32_1 : i32, i32, i32
  }
  func.func @transform_6(%arg0: i32) -> (i32, i32) {
    %c0_i32 = arith.constant 0 : i32
    %c0_i32_0 = arith.constant 0 : i32
    %c0_i32_1 = arith.constant 0 : i32
    return %c0_i32, %c0_i32_0 : i32, i32
  }
  func.func @transform_7(%arg0: i32) -> (i32, i32) {
    %c0_i32 = arith.constant 0 : i32
    %c0_i32_0 = arith.constant 0 : i32
    return %arg0, %c0_i32 : i32, i32
  }
}

module attributes {stable_mosaic.version = 11 : i64} {
  func.func @_linear_kernel(%arg0: i32, %arg1: i32, %arg2: i32, %arg3: memref<8x128xf32, #tpu.memory_space<vmem>>, %arg4: memref<128x128xf32, #tpu.memory_space<vmem>>, %arg5: memref<1x128xf32, #tpu.memory_space<vmem>>, %arg6: memref<8x128xf32, #tpu.memory_space<vmem>>, %arg7: memref<8x128xf32, #tpu.memory_space<vmem>>) attributes {dimension_semantics = [#tpu.dimension_semantics<parallel>, #tpu.dimension_semantics<parallel>, #tpu.dimension_semantics<arbitrary>], iteration_bounds = array<i64: 1, 1, 1>, scalar_prefetch = 0 : i64, scratch_operands = 1 : i64, tpu.core_type = #tpu.core_type<tc>, window_params = [{transform_indices = @transform_0, window_bounds = array<i64: 8, 128>}, {transform_indices = @transform_1, window_bounds = array<i64: 128, 128>}, {transform_indices = @transform_2, window_bounds = array<i64: 1, 128>}, {transform_indices = @transform_3, window_bounds = array<i64: 8, 128>}]} {
    %c0_i32 = arith.constant 0 : i32
    %0 = arith.cmpi eq, %arg2, %c0_i32 : i32
    %1 = arith.extui %0 : i1 to i32
    %c0_i32_0 = arith.constant 0 : i32
    %2 = arith.cmpi ne, %1, %c0_i32_0 : i32
    scf.if %2 {
      %cst_10 = arith.constant 0.000000e+00 : f32
      %12 = vector.broadcast %cst_10 : f32 to vector<8x128xf32>
      %c0_11 = arith.constant 0 : index
      %c0_12 = arith.constant 0 : index
      %13 = vector.load %arg7[%c0_11, %c0_12] : memref<8x128xf32, #tpu.memory_space<vmem>>, vector<8x128xf32>
      tpu.vector_store %arg7[%c0_11, %c0_12], %12 {strides = array<i32>} : memref<8x128xf32, #tpu.memory_space<vmem>>, vector<8x128xf32>,
    } else {
    }
    %c0 = arith.constant 0 : index
    %c0_1 = arith.constant 0 : index
    %3 = vector.load %arg3[%c0, %c0_1] : memref<8x128xf32, #tpu.memory_space<vmem>>, vector<8x128xf32>
    %c0_2 = arith.constant 0 : index
    %c0_3 = arith.constant 0 : index
    %4 = vector.load %arg4[%c0_2, %c0_3] : memref<128x128xf32, #tpu.memory_space<vmem>>, vector<128x128xf32>
    %c0_4 = arith.constant 0 : index
    %c0_5 = arith.constant 0 : index
    %5 = vector.load %arg7[%c0_4, %c0_5] : memref<8x128xf32, #tpu.memory_space<vmem>>, vector<8x128xf32>
    %cst = arith.constant dense<0.000000e+00> : vector<8x128xf32>
    %6 = tpu.matmul %3, %4, %cst {dimension_numbers = #tpu.dot_dimension_numbers<[1], [0], [0], [1], [0, 0, 1, 1], [], []>} : vector<8x128xf32>, vector<128x128xf32>, vector<8x128xf32> -> vector<8x128xf32>
    %7 = arith.addf %5, %6 : vector<8x128xf32>
    %c0_6 = arith.constant 0 : index
    %c0_7 = arith.constant 0 : index
    %8 = vector.load %arg7[%c0_6, %c0_7] : memref<8x128xf32, #tpu.memory_space<vmem>>, vector<8x128xf32>
    tpu.vector_store %arg7[%c0_6, %c0_7], %7 {strides = array<i32>} : memref<8x128xf32, #tpu.memory_space<vmem>>, vector<8x128xf32>,
    %c0_i32_8 = arith.constant 0 : i32
    %9 = arith.cmpi eq, %arg2, %c0_i32_8 : i32
    %10 = arith.extui %9 : i1 to i32
    %c0_i32_9 = arith.constant 0 : i32
    %11 = arith.cmpi ne, %10, %c0_i32_9 : i32
    scf.if %11 {
      %c0_10 = arith.constant 0 : index
      %c0_11 = arith.constant 0 : index
      %12 = vector.load %arg7[%c0_10, %c0_11] : memref<8x128xf32, #tpu.memory_space<vmem>>, vector<8x128xf32>
      %c0_12 = arith.constant 0 : index
      %c0_13 = arith.constant 0 : index
      %13 = vector.load %arg5[%c0_12, %c0_13] : memref<1x128xf32, #tpu.memory_space<vmem>>, vector<1x128xf32>
      %14 = vector.broadcast %13 : vector<1x128xf32> to vector<8x128xf32>
      %15 = arith.addf %12, %14 : vector<8x128xf32>
      %c0_14 = arith.constant 0 : index
      %c0_15 = arith.constant 0 : index
      %16 = vector.load %arg6[%c0_14, %c0_15] : memref<8x128xf32, #tpu.memory_space<vmem>>, vector<8x128xf32>
      tpu.vector_store %arg6[%c0_14, %c0_15], %15 {strides = array<i32>} : memref<8x128xf32, #tpu.memory_space<vmem>>, vector<8x128xf32>,
    } else {
    }
    return
  }
  func.func @transform_0(%arg0: i32, %arg1: i32, %arg2: i32) -> (i32, i32) {
    %c0_i32 = arith.constant 0 : i32
    return %arg0, %arg2 : i32, i32
  }
  func.func @transform_1(%arg0: i32, %arg1: i32, %arg2: i32) -> (i32, i32) {
    %c0_i32 = arith.constant 0 : i32
    return %arg2, %arg1 : i32, i32
  }
  func.func @transform_2(%arg0: i32, %arg1: i32, %arg2: i32) -> (i32, i32) {
    %c0_i32 = arith.constant 0 : i32
    %c0_i32_0 = arith.constant 0 : i32
    return %c0_i32, %arg1 : i32, i32
  }
  func.func @transform_3(%arg0: i32, %arg1: i32, %arg2: i32) -> (i32, i32) {
    %c0_i32 = arith.constant 0 : i32
    return %arg0, %arg1 : i32, i32
  }
}

</mosaic_0001>

<llo_original>
// kernel: _lambda_.6
$region0: #{_lambda_.6}
  #allocation0 [shape = 'u32[]', space=smem, size = 0x4, offset = 0x4, fixed_abs, tag = 'smem constant byte address 0x4 - core index']
  #allocation1 [shape = 'u32[72,128]{1,0:T(1,128)}', space=vmem, size = 0x9000, scoped, tag = 'internal scratch']
  #allocation2 [shape = 'f32[16,128]{1,0:T(8,128)}', space=vmem, size = 0x2000, scoped, tag = 'scratch operand']
  %s0 = inlined_call_operand.vmem [shape: f32[32,128], index: 0, kind: input, shape index: {}]
  %s1 = inlined_call_operand.vmem [shape: f32[128,128], index: 1, kind: input, shape index: {}]
  %s2 = inlined_call_operand.vmem [shape: f32[1,128], index: 2, kind: input, shape index: {}]
  %s3 = inlined_call_operand.vmem [shape: f32[32,128], index: 3, kind: output, shape index: {}]
  %s4 = sld [smem:[#allocation0]]
  $region53: #{_lambda_.6} parent=0
    _
  %s6 = ssub.s32 1, %s4
  %s7 = scalar_select 0, %s6, %s4
  loop: start=0, step=1, limit=4
  $region2: #{_lambda_.6} parent=0 // loop_pre_header
    _
  $region3: #{_lambda_.6} parent=0 // loop_header
    %s9 = sphi 0, %s13
    %p10 = scmp.ge.s32.totalorder %s9, 4
    %s16 = sphi 0, %s35
    %s17 = sphi 0, %s31
    %s18 = sphi 0, %s27
    %s19 = sphi 0, %s16
    %s20 = sphi 0, %s17
    %s21 = sphi 0, %s18
    %s22 = sphi 0, %s19
    %s23 = sphi 0, %s20
    %s24 = sphi 0, %s21
    %s40 = sphi 0, %s42
    %s43 = sphi 0, %s40
    %s44 = sphi 0, %s43
    %s60 = sphi 0, %s44
    %s68 = sphi 0, %s70
    %s71 = sphi 0, %s68
    %s72 = sphi 0, %s71
    %s88 = sphi 0, %s72
    %s94 = sphi 0, %s96
    %s97 = sphi 0, %s94
    %s98 = sphi 0, %s97
    %s114 = sphi 0, %s98
    %s122 = sphi 0, %s124
    %s125 = sphi 0, %s122
    %s126 = sphi 0, %s125
    %s142 = sphi 0, %s126
  $region4: #{_lambda_.6} parent=0 // loop_header_branch
    %12 = sbr.rel (%p10) target = $region8
  $region5: #{_lambda_.6} parent=0 // loop_body
    %s14 = ssub.s32 %s9, 1
    %s15 = ssub.s32 %s9, 2
    %s25 = sadd.s32 1, %s18
    %p26 = scmp.ge.s32.totalorder %s25, 1
    %s27 = scalar_select %p26, 0, %s25
    %s28 = sadd.s32 1, %s17
    %s29 = scalar_select %p26, %s28, %s17
    %p30 = scmp.ge.s32.totalorder %s29, 1
    %s31 = scalar_select %p30, 0, %s29
    %s32 = sadd.s32 1, %s16
    %s33 = scalar_select %p30, %s32, %s16
    %p34 = scmp.ge.s32.totalorder %s33, 2
    %s35 = scalar_select %p34, 0, %s33
    %s36 = ssub.s32 %s16, %s35
    %s37 = ssub.s32 %s18, %s27
    %s38 = sor.u32 %s36, %s37
    %p39 = scmp.eq.s32.totalorder %s38, 0
    %s41 = sadd.s32 %s40, 1
    %s42 = scalar_select %p39, %s40, %s41
    %p45 = pneg %p39
    %p46 = scmp.eq.s32.totalorder %s9, 1
    %p47 = por %p45, %p46
    %p48 = scmp.ne.s32.totalorder %s40, %s43
    %p49 = scmp.eq.s32.totalorder %s9, 0
    %p50 = por %p48, %p49
    %p51 = scmp.ne.s32.totalorder %s40, %s43
    %p52 = scmp.eq.s32.totalorder %s14, 1
    %p53 = por %p51, %p52
    %p54 = scmp.ne.s32.totalorder %s43, %s44
    %p55 = scmp.eq.s32.totalorder %s14, 0
    %p56 = por %p54, %p55
    %p57 = scmp.ne.s32.totalorder %s43, %s44
    %p58 = scmp.eq.s32.totalorder %s15, 1
    %p59 = por %p57, %p58
    %p61 = scmp.ne.s32.totalorder %s44, %s60
    %p62 = scmp.eq.s32.totalorder %s15, 0
    %p63 = por %p61, %p62
    %s64 = ssub.s32 %s18, %s27
    %s65 = ssub.s32 %s17, %s31
    %s66 = sor.u32 %s64, %s65
    %p67 = scmp.eq.s32.totalorder %s66, 0
    %s69 = sadd.s32 %s68, 1
    %s70 = scalar_select %p67, %s68, %s69
    %p73 = pneg %p67
    %p74 = scmp.eq.s32.totalorder %s9, 1
    %p75 = por %p73, %p74
    %p76 = scmp.ne.s32.totalorder %s68, %s71
    %p77 = scmp.eq.s32.totalorder %s9, 0
    %p78 = por %p76, %p77
    %p79 = scmp.ne.s32.totalorder %s68, %s71
    %p80 = scmp.eq.s32.totalorder %s14, 1
    %p81 = por %p79, %p80
    %p82 = scmp.ne.s32.totalorder %s71, %s72
    %p83 = scmp.eq.s32.totalorder %s14, 0
    %p84 = por %p82, %p83
    %p85 = scmp.ne.s32.totalorder %s71, %s72
    %p86 = scmp.eq.s32.totalorder %s15, 1
    %p87 = por %p85, %p86
    %p89 = scmp.ne.s32.totalorder %s72, %s88
    %p90 = scmp.eq.s32.totalorder %s15, 0
    %p91 = por %p89, %p90
    %s92 = ssub.s32 %s17, %s31
    %p93 = scmp.eq.s32.totalorder %s92, 0
    %s95 = sadd.s32 %s94, 1
    %s96 = scalar_select %p93, %s94, %s95
    %p99 = pneg %p93
    %p100 = scmp.eq.s32.totalorder %s9, 1
    %p101 = por %p99, %p100
    %p102 = scmp.ne.s32.totalorder %s94, %s97
    %p103 = scmp.eq.s32.totalorder %s9, 0
    %p104 = por %p102, %p103
    %p105 = scmp.ne.s32.totalorder %s94, %s97
    %p106 = scmp.eq.s32.totalorder %s14, 1
    %p107 = por %p105, %p106
    %p108 = scmp.ne.s32.totalorder %s97, %s98
    %p109 = scmp.eq.s32.totalorder %s14, 0
    %p110 = por %p108, %p109
    %p111 = scmp.ne.s32.totalorder %s97, %s98
    %p112 = scmp.eq.s32.totalorder %s15, 1
    %p113 = por %p111, %p112
    %p115 = scmp.ne.s32.totalorder %s98, %s114
    %p116 = scmp.eq.s32.totalorder %s15, 0
    %p117 = por %p115, %p116
    %s118 = ssub.s32 %s16, %s35
    %s119 = ssub.s32 %s17, %s31
    %s120 = sor.u32 %s118, %s119
    %p121 = scmp.eq.s32.totalorder %s120, 0
    %s123 = sadd.s32 %s122, 1
    %s124 = scalar_select %p121, %s122, %s123
    %p127 = pneg %p121
    %p128 = scmp.eq.s32.totalorder %s9, 1
    %p129 = por %p127, %p128
    %p130 = scmp.ne.s32.totalorder %s122, %s125
    %p131 = scmp.eq.s32.totalorder %s9, 0
    %p132 = por %p130, %p131
    %p133 = scmp.ne.s32.totalorder %s122, %s125
    %p134 = scmp.eq.s32.totalorder %s14, 1
    %p135 = por %p133, %p134
    %p136 = scmp.ne.s32.totalorder %s125, %s126
    %p137 = scmp.eq.s32.totalorder %s14, 0
    %p138 = por %p136, %p137
    %p139 = scmp.ne.s32.totalorder %s125, %s126
    %p140 = scmp.eq.s32.totalorder %s15, 1
    %p141 = por %p139, %p140
    %p143 = scmp.ne.s32.totalorder %s126, %s142
    %p144 = scmp.eq.s32.totalorder %s15, 0
    %p145 = por %p143, %p144
    %p146 = scmp.le.s32.totalorder 1, %s9
    %p147 = scmp.lt.s32.totalorder %s9, 3
    %p148 = pnand %p146, %p147
    %p149 = pneg %p148
    // Predicated region
    $region9: #{_lambda_.6} parent=5 // pred_check
      _
    $region10: #{_lambda_.6} parent=5 // pred_check_branch
      %151 = sbr.rel (%p148) target = $region12
    $region11: #{_lambda_.6} parent=5 // pred_region
      %s152 = ssub.s32 %s9, 1
      // Predicated region
      $region13: #{_lambda_.6} parent=11 // pred_check
        %p153 = pneg %p84
      $region14: #{_lambda_.6} parent=11 // pred_check_branch
        %155 = sbr.rel (%p153) target = $region16
      $region15: #{_lambda_.6} parent=11 // pred_region
        %s156 = smul.u32 16, %s21
        %p157 = scmp.lt.s32.totalorder %s156, 15
        %s158 = scalar_select %p157, %s156, 15
        %p159 = scmp.lt.s32.totalorder %s20, 0
        %s160 = scalar_select %p159, %s20, 0
        %s161 = sadd.s32 %s160, %s158
        %s162 = smul.addr %s161, 8
        %s163 = scalar_lea.vmem %s1, %s162
        %s164 = smul.u32 16, %s21
      $region16: #{_lambda_.6} parent=11 // pred_fallthru
        _
      // Predicated region
      $region17: #{_lambda_.6} parent=11 // pred_check
        %p165 = pneg %p110
      $region18: #{_lambda_.6} parent=11 // pred_check_branch
        %167 = sbr.rel (%p165) target = $region20
      $region19: #{_lambda_.6} parent=11 // pred_region
        %p168 = scmp.lt.s32.totalorder %s20, 0
        %s169 = scalar_select %p168, %s20, 0
        %s170 = scalar_lea.vmem %s2, %s169
      $region20: #{_lambda_.6} parent=11 // pred_fallthru
        _
    $region12: #{_lambda_.6} parent=5 // pred_fallthru
      _
    %p171 = scmp.lt.s32.totalorder %s9, 2
    // Predicated region
    $region21: #{_lambda_.6} parent=5 // pred_check
      %p172 = pneg %p171
    $region22: #{_lambda_.6} parent=5 // pred_check_branch
      %174 = sbr.rel (%p172) target = $region24
    $region23: #{_lambda_.6} parent=5 // pred_region
      // Predicated region
      $region25: #{_lambda_.6} parent=23 // pred_check
        %p175 = pneg %p50
      $region26: #{_lambda_.6} parent=23 // pred_check_branch
        %177 = sbr.rel (%p175) target = $region28
      $region27: #{_lambda_.6} parent=23 // pred_region
        %s178 = smul.u32 2, %s16
        %p179 = scmp.lt.s32.totalorder %s178, 3
        %s180 = scalar_select %p179, %s178, 3
        %p181 = scmp.lt.s32.totalorder %s18, 0
        %s182 = scalar_select %p181, %s18, 0
        %s183 = sadd.s32 %s182, %s180
        %s184 = smul.addr %s183, 8
        %s185 = scalar_lea.vmem %s0, %s184
        %s186 = smul.u32 2, %s16
      $region28: #{_lambda_.6} parent=23 // pred_fallthru
        _
    $region24: #{_lambda_.6} parent=5 // pred_fallthru
      _
    %p187 = scmp.le.s32.totalorder 1, %s9
    %p188 = scmp.lt.s32.totalorder %s9, 3
    %p189 = pnand %p187, %p188
    %p190 = pneg %p189
    // Predicated region
    $region29: #{_lambda_.6} parent=5 // pred_check
      _
    $region30: #{_lambda_.6} parent=5 // pred_check_branch
      %192 = sbr.rel (%p189) target = $region32
    $region31: #{_lambda_.6} parent=5 // pred_region
      %s193 = ssub.s32 %s9, 1
      %s194 = smul.u32 2, %s19
      %p195 = scmp.lt.s32.totalorder %s194, 3
      %s196 = scalar_select %p195, %s194, 3
      %p197 = scmp.lt.s32.totalorder %s21, 0
      %s198 = scalar_select %p197, %s21, 0
      %s199 = sadd.s32 %s198, %s196
      %s200 = smul.addr %s199, 8
      %s201 = scalar_lea.vmem %s0, %s200
      %p202 = pneg %p56
      %p203 = pneg %p53
      %s204 = smul.u32 16, %s21
      %p205 = scmp.lt.s32.totalorder %s204, 15
      %s206 = scalar_select %p205, %s204, 15
      %p207 = scmp.lt.s32.totalorder %s20, 0
      %s208 = scalar_select %p207, %s20, 0
      %s209 = sadd.s32 %s208, %s206
      %s210 = smul.addr %s209, 8
      %s211 = scalar_lea.vmem %s1, %s210
      %p212 = pneg %p84
      %p213 = pneg %p81
      %p214 = scmp.lt.s32.totalorder %s20, 0
      %s215 = scalar_select %p214, %s20, 0
      %s216 = scalar_lea.vmem %s2, %s215
      %p217 = pneg %p110
      %p218 = pneg %p107
      %p219 = pneg %p138
      %p220 = pneg %p135
      %s221 = smul.u32 2, %s19
      %p222 = scmp.lt.s32.totalorder %s221, 3
      %s223 = scalar_select %p222, %s221, 3
      %p224 = scmp.lt.s32.totalorder %s20, 0
      %s225 = scalar_select %p224, %s20, 0
      %s226 = sadd.s32 %s225, %s223
      %s227 = smul.addr %s226, 8
      %s228 = scalar_lea.vmem %s3, %s227
      %s229 = smul.u32 2, %s19
      %p230 = scmp.lt.s32.totalorder %s229, 3
      %s231 = scalar_select %p230, %s229, 3
      %p232 = scmp.lt.s32.totalorder %s21, 0
      %s233 = scalar_select %p232, %s21, 0
      %s234 = sadd.s32 %s233, %s231
      %s235 = smul.addr %s234, 8
      %s236 = scalar_lea.vmem %s0, %s235
      %s237 = smul.u32 2, %s19
      %s238 = smul.u32 16, %s21
      %p239 = scmp.lt.s32.totalorder %s238, 15
      %s240 = scalar_select %p239, %s238, 15
      %p241 = scmp.lt.s32.totalorder %s20, 0
      %s242 = scalar_select %p241, %s20, 0
      %s243 = sadd.s32 %s242, %s240
      %s244 = smul.addr %s243, 8
      %s245 = scalar_lea.vmem %s1, %s244
      %s246 = smul.u32 16, %s21
      %p247 = scmp.lt.s32.totalorder %s20, 0
      %s248 = scalar_select %p247, %s20, 0
      %s249 = scalar_lea.vmem %s2, %s248
      %s250 = smul.u32 2, %s19
      %p251 = scmp.lt.s32.totalorder %s250, 3
      %s252 = scalar_select %p251, %s250, 3
      %p253 = scmp.lt.s32.totalorder %s20, 0
      %s254 = scalar_select %p253, %s20, 0
      %s255 = sadd.s32 %s254, %s252
      %s256 = smul.addr %s255, 8
      %s257 = scalar_lea.vmem %s3, %s256
      %s258 = smul.u32 2, %s19
      %p259 = scmp.eq.s32.totalorder %s21, 0
      // Predicated region
      $region33: #{_lambda_.6} parent=31 // pred_check
        %p260 = pneg %p259
      $region34: #{_lambda_.6} parent=31 // pred_check_branch
        %262 = sbr.rel (%p260) target = $region36
      $region35: #{_lambda_.6} parent=31 // pred_region
        %263 = vst [vmem:[#allocation2] sm:$0xff] 0.0
        %264 = vst [vmem:[#allocation2 + $0x8] sm:$0xff] 0.0
      $region36: #{_lambda_.6} parent=31 // pred_fallthru
        _
      %v265 = vld [vmem:[%s236] sm:$0xff]
      %v266 = vld [vmem:[%s236 + $0x8] sm:$0xff]
      %v267 = vld [vmem:[%s245] sm:$0xff]
      %v268 = vld [vmem:[%s245 + $0x8] sm:$0xff]
      %v269 = vld [vmem:[%s245 + $0x10] sm:$0xff]
      %v270 = vld [vmem:[%s245 + $0x18] sm:$0xff]
      %v271 = vld [vmem:[%s245 + $0x20] sm:$0xff]
      %v272 = vld [vmem:[%s245 + $0x28] sm:$0xff]
      %v273 = vld [vmem:[%s245 + $0x30] sm:$0xff]
      %v274 = vld [vmem:[%s245 + $0x38] sm:$0xff]
      %v275 = vld [vmem:[%s245 + $0x40] sm:$0xff]
      %v276 = vld [vmem:[%s245 + $0x48] sm:$0xff]
      %v277 = vld [vmem:[%s245 + $0x50] sm:$0xff]
      %v278 = vld [vmem:[%s245 + $0x58] sm:$0xff]
      %v279 = vld [vmem:[%s245 + $0x60] sm:$0xff]
      %v280 = vld [vmem:[%s245 + $0x68] sm:$0xff]
      %v281 = vld [vmem:[%s245 + $0x70] sm:$0xff]
      %v282 = vld [vmem:[%s245 + $0x78] sm:$0xff]
      %v283 = vld [vmem:[#allocation2] sm:$0xff]
      %v284 = vld [vmem:[#allocation2 + $0x8] sm:$0xff]
      %285 = vmatpush.msra.mxu0 %v282
      %286 = vmatpush.msra.mxu0 %v281
      %287 = vmatpush.msra.mxu0 %v280
      %288 = vmatpush.msra.mxu0 %v279
      %289 = vmatpush.msra.mxu0 %v278
      %290 = vmatpush.msra.mxu0 %v277
      %291 = vmatpush.msra.mxu0 %v276
      %292 = vmatpush.msra.mxu0 %v275
      %293 = vmatpush.msra.mxu0 %v274
      %294 = vmatpush.msra.mxu0 %v273
      %295 = vmatpush.msra.mxu0 %v272
      %296 = vmatpush.msra.mxu0 %v271
      %297 = vmatpush.msra.mxu0 %v270
      %298 = vmatpush.msra.mxu0 %v269
      %299 = vmatpush.msra.mxu0 %v268
      %300 = vmatpush.msra.mxu0 %v267
      %301 = vmatmul.f32.gmra.mxu0 %v265
      %v302 = vpop.f32.mrf.mxu0
      %v303 = vadd.f32 0.0, %v302
      %304 = vmatmul.f32.gmra.mxu0 %v266
      %v305 = vpop.f32.mrf.mxu0
      %v306 = vadd.f32 0.0, %v305
      %307 = vdwg.mxu0
      %v308 = vadd.f32 %v283, %v303
      %v309 = vadd.f32 %v284, %v306
      %310 = vst [vmem:[#allocation2] sm:$0xff] %v308
      %311 = vst [vmem:[#allocation2 + $0x8] sm:$0xff] %v309
      // Predicated region
      $region37: #{_lambda_.6} parent=31 // pred_check
        %p312 = pneg %p259
      $region38: #{_lambda_.6} parent=31 // pred_check_branch
        %314 = sbr.rel (%p312) target = $region40
      $region39: #{_lambda_.6} parent=31 // pred_region
        %v315 = vld [vmem:[#allocation2] sm:$0xff]
        %v316 = vld [vmem:[#allocation2 + $0x8] sm:$0xff]
        %v317 = vld [vmem:[%s249] sm:$0x1]
        %v319 = vperm.slane %v317, 0
        %v321 = vadd.f32 %v315, %v319
        %v322 = vadd.f32 %v316, %v319
        %323 = vst [vmem:[%s257] sm:$0xff] %v321
        %324 = vst [vmem:[%s257 + $0x8] sm:$0xff] %v322
      $region40: #{_lambda_.6} parent=31 // pred_fallthru
        _
      %s325 = smul.u32 2, %s19
      %p326 = scmp.lt.s32.totalorder %s325, 3
      %s327 = scalar_select %p326, %s325, 3
      %p328 = scmp.lt.s32.totalorder %s20, 0
      %s329 = scalar_select %p328, %s20, 0
      %s330 = sadd.s32 %s329, %s327
      %s331 = smul.addr %s330, 8
      %s332 = scalar_lea.vmem %s3, %s331
      // Predicated region
      $region41: #{_lambda_.6} parent=31 // pred_check
        %p333 = pneg %p135
      $region42: #{_lambda_.6} parent=31 // pred_check_branch
        %335 = sbr.rel (%p333) target = $region44
      $region43: #{_lambda_.6} parent=31 // pred_region
        %s336 = smul.u32 2, %s19
      $region44: #{_lambda_.6} parent=31 // pred_fallthru
        _
    $region32: #{_lambda_.6} parent=5 // pred_fallthru
      _
    %p337 = scmp.le.s32.totalorder 2, %s9
    // Predicated region
    $region45: #{_lambda_.6} parent=5 // pred_check
      %p338 = pneg %p337
    $region46: #{_lambda_.6} parent=5 // pred_check_branch
      %340 = sbr.rel (%p338) target = $region48
    $region47: #{_lambda_.6} parent=5 // pred_region
      %s341 = ssub.s32 %s9, 2
      // Predicated region
      $region49: #{_lambda_.6} parent=47 // pred_check
        %p342 = pneg %p141
      $region50: #{_lambda_.6} parent=47 // pred_check_branch
        %344 = sbr.rel (%p342) target = $region52
      $region51: #{_lambda_.6} parent=47 // pred_region
        %s345 = smul.u32 2, %s22
        %p346 = scmp.lt.s32.totalorder %s345, 3
        %s347 = scalar_select %p346, %s345, 3
        %p348 = scmp.lt.s32.totalorder %s23, 0
        %s349 = scalar_select %p348, %s23, 0
        %s350 = sadd.s32 %s349, %s347
        %s351 = smul.addr %s350, 8
        %s352 = scalar_lea.vmem %s3, %s351
      $region52: #{_lambda_.6} parent=47 // pred_fallthru
        _
    $region48: #{_lambda_.6} parent=5 // pred_fallthru
      _
  $region6: #{_lambda_.6} parent=0 // loop_footer
    %s13 = sadd.s32 1, %s9
  $region7: #{_lambda_.6} parent=0 // loop_footer_branch
    %8 = sbr.rel target = $region3
  $region8: #{_lambda_.6} parent=0 // loop_exit
    _

// kernel: _lambda_.8
$region0: #{_lambda_.8}
  #allocation0 [shape = 'u32[]', space=smem, size = 0x4, offset = 0x4, fixed_abs, tag = 'smem constant byte address 0x4 - core index']
  #allocation1 [shape = 'u32[72,128]{1,0:T(1,128)}', space=vmem, size = 0x9000, scoped, tag = 'internal scratch']
  #allocation2 [shape = 'f32[32,128]{1,0:T(8,128)}', space=vmem, size = 0x4000, scoped, tag = 'scratch operand']
  %s0 = inlined_call_operand.vmem [shape: f32[64,128], index: 0, kind: input, shape index: {}]
  %s1 = inlined_call_operand.vmem [shape: f32[128,128], index: 1, kind: input, shape index: {}]
  %s2 = inlined_call_operand.vmem [shape: f32[1,128], index: 2, kind: input, shape index: {}]
  %s3 = inlined_call_operand.vmem [shape: f32[64,128], index: 3, kind: output, shape index: {}]
  %s4 = sld [smem:[#allocation0]]
  $region53: #{_lambda_.8} parent=0
    _
  %s6 = ssub.s32 1, %s4
  %s7 = scalar_select 0, %s6, %s4
  loop: start=0, step=1, limit=4
  $region2: #{_lambda_.8} parent=0 // loop_pre_header
    _
  $region3: #{_lambda_.8} parent=0 // loop_header
    %s9 = sphi 0, %s13
    %p10 = scmp.ge.s32.totalorder %s9, 4
    %s16 = sphi 0, %s35
    %s17 = sphi 0, %s31
    %s18 = sphi 0, %s27
    %s19 = sphi 0, %s16
    %s20 = sphi 0, %s17
    %s21 = sphi 0, %s18
    %s22 = sphi 0, %s19
    %s23 = sphi 0, %s20
    %s24 = sphi 0, %s21
    %s40 = sphi 0, %s42
    %s43 = sphi 0, %s40
    %s44 = sphi 0, %s43
    %s60 = sphi 0, %s44
    %s68 = sphi 0, %s70
    %s71 = sphi 0, %s68
    %s72 = sphi 0, %s71
    %s88 = sphi 0, %s72
    %s94 = sphi 0, %s96
    %s97 = sphi 0, %s94
    %s98 = sphi 0, %s97
    %s114 = sphi 0, %s98
    %s122 = sphi 0, %s124
    %s125 = sphi 0, %s122
    %s126 = sphi 0, %s125
    %s142 = sphi 0, %s126
  $region4: #{_lambda_.8} parent=0 // loop_header_branch
    %12 = sbr.rel (%p10) target = $region8
  $region5: #{_lambda_.8} parent=0 // loop_body
    %s14 = ssub.s32 %s9, 1
    %s15 = ssub.s32 %s9, 2
    %s25 = sadd.s32 1, %s18
    %p26 = scmp.ge.s32.totalorder %s25, 1
    %s27 = scalar_select %p26, 0, %s25
    %s28 = sadd.s32 1, %s17
    %s29 = scalar_select %p26, %s28, %s17
    %p30 = scmp.ge.s32.totalorder %s29, 1
    %s31 = scalar_select %p30, 0, %s29
    %s32 = sadd.s32 1, %s16
    %s33 = scalar_select %p30, %s32, %s16
    %p34 = scmp.ge.s32.totalorder %s33, 2
    %s35 = scalar_select %p34, 0, %s33
    %s36 = ssub.s32 %s16, %s35
    %s37 = ssub.s32 %s18, %s27
    %s38 = sor.u32 %s36, %s37
    %p39 = scmp.eq.s32.totalorder %s38, 0
    %s41 = sadd.s32 %s40, 1
    %s42 = scalar_select %p39, %s40, %s41
    %p45 = pneg %p39
    %p46 = scmp.eq.s32.totalorder %s9, 1
    %p47 = por %p45, %p46
    %p48 = scmp.ne.s32.totalorder %s40, %s43
    %p49 = scmp.eq.s32.totalorder %s9, 0
    %p50 = por %p48, %p49
    %p51 = scmp.ne.s32.totalorder %s40, %s43
    %p52 = scmp.eq.s32.totalorder %s14, 1
    %p53 = por %p51, %p52
    %p54 = scmp.ne.s32.totalorder %s43, %s44
    %p55 = scmp.eq.s32.totalorder %s14, 0
    %p56 = por %p54, %p55
    %p57 = scmp.ne.s32.totalorder %s43, %s44
    %p58 = scmp.eq.s32.totalorder %s15, 1
    %p59 = por %p57, %p58
    %p61 = scmp.ne.s32.totalorder %s44, %s60
    %p62 = scmp.eq.s32.totalorder %s15, 0
    %p63 = por %p61, %p62
    %s64 = ssub.s32 %s18, %s27
    %s65 = ssub.s32 %s17, %s31
    %s66 = sor.u32 %s64, %s65
    %p67 = scmp.eq.s32.totalorder %s66, 0
    %s69 = sadd.s32 %s68, 1
    %s70 = scalar_select %p67, %s68, %s69
    %p73 = pneg %p67
    %p74 = scmp.eq.s32.totalorder %s9, 1
    %p75 = por %p73, %p74
    %p76 = scmp.ne.s32.totalorder %s68, %s71
    %p77 = scmp.eq.s32.totalorder %s9, 0
    %p78 = por %p76, %p77
    %p79 = scmp.ne.s32.totalorder %s68, %s71
    %p80 = scmp.eq.s32.totalorder %s14, 1
    %p81 = por %p79, %p80
    %p82 = scmp.ne.s32.totalorder %s71, %s72
    %p83 = scmp.eq.s32.totalorder %s14, 0
    %p84 = por %p82, %p83
    %p85 = scmp.ne.s32.totalorder %s71, %s72
    %p86 = scmp.eq.s32.totalorder %s15, 1
    %p87 = por %p85, %p86
    %p89 = scmp.ne.s32.totalorder %s72, %s88
    %p90 = scmp.eq.s32.totalorder %s15, 0
    %p91 = por %p89, %p90
    %s92 = ssub.s32 %s17, %s31
    %p93 = scmp.eq.s32.totalorder %s92, 0
    %s95 = sadd.s32 %s94, 1
    %s96 = scalar_select %p93, %s94, %s95
    %p99 = pneg %p93
    %p100 = scmp.eq.s32.totalorder %s9, 1
    %p101 = por %p99, %p100
    %p102 = scmp.ne.s32.totalorder %s94, %s97
    %p103 = scmp.eq.s32.totalorder %s9, 0
    %p104 = por %p102, %p103
    %p105 = scmp.ne.s32.totalorder %s94, %s97
    %p106 = scmp.eq.s32.totalorder %s14, 1
    %p107 = por %p105, %p106
    %p108 = scmp.ne.s32.totalorder %s97, %s98
    %p109 = scmp.eq.s32.totalorder %s14, 0
    %p110 = por %p108, %p109
    %p111 = scmp.ne.s32.totalorder %s97, %s98
    %p112 = scmp.eq.s32.totalorder %s15, 1
    %p113 = por %p111, %p112
    %p115 = scmp.ne.s32.totalorder %s98, %s114
    %p116 = scmp.eq.s32.totalorder %s15, 0
    %p117 = por %p115, %p116
    %s118 = ssub.s32 %s16, %s35
    %s119 = ssub.s32 %s17, %s31
    %s120 = sor.u32 %s118, %s119
    %p121 = scmp.eq.s32.totalorder %s120, 0
    %s123 = sadd.s32 %s122, 1
    %s124 = scalar_select %p121, %s122, %s123
    %p127 = pneg %p121
    %p128 = scmp.eq.s32.totalorder %s9, 1
    %p129 = por %p127, %p128
    %p130 = scmp.ne.s32.totalorder %s122, %s125
    %p131 = scmp.eq.s32.totalorder %s9, 0
    %p132 = por %p130, %p131
    %p133 = scmp.ne.s32.totalorder %s122, %s125
    %p134 = scmp.eq.s32.totalorder %s14, 1
    %p135 = por %p133, %p134
    %p136 = scmp.ne.s32.totalorder %s125, %s126
    %p137 = scmp.eq.s32.totalorder %s14, 0
    %p138 = por %p136, %p137
    %p139 = scmp.ne.s32.totalorder %s125, %s126
    %p140 = scmp.eq.s32.totalorder %s15, 1
    %p141 = por %p139, %p140
    %p143 = scmp.ne.s32.totalorder %s126, %s142
    %p144 = scmp.eq.s32.totalorder %s15, 0
    %p145 = por %p143, %p144
    %p146 = scmp.le.s32.totalorder 1, %s9
    %p147 = scmp.lt.s32.totalorder %s9, 3
    %p148 = pnand %p146, %p147
    %p149 = pneg %p148
    // Predicated region
    $region9: #{_lambda_.8} parent=5 // pred_check
      _
    $region10: #{_lambda_.8} parent=5 // pred_check_branch
      %151 = sbr.rel (%p148) target = $region12
    $region11: #{_lambda_.8} parent=5 // pred_region
      %s152 = ssub.s32 %s9, 1
      // Predicated region
      $region13: #{_lambda_.8} parent=11 // pred_check
        %p153 = pneg %p84
      $region14: #{_lambda_.8} parent=11 // pred_check_branch
        %155 = sbr.rel (%p153) target = $region16
      $region15: #{_lambda_.8} parent=11 // pred_region
        %s156 = smul.u32 16, %s21
        %p157 = scmp.lt.s32.totalorder %s156, 15
        %s158 = scalar_select %p157, %s156, 15
        %p159 = scmp.lt.s32.totalorder %s20, 0
        %s160 = scalar_select %p159, %s20, 0
        %s161 = sadd.s32 %s160, %s158
        %s162 = smul.addr %s161, 8
        %s163 = scalar_lea.vmem %s1, %s162
        %s164 = smul.u32 16, %s21
      $region16: #{_lambda_.8} parent=11 // pred_fallthru
        _
      // Predicated region
      $region17: #{_lambda_.8} parent=11 // pred_check
        %p165 = pneg %p110
      $region18: #{_lambda_.8} parent=11 // pred_check_branch
        %167 = sbr.rel (%p165) target = $region20
      $region19: #{_lambda_.8} parent=11 // pred_region
        %p168 = scmp.lt.s32.totalorder %s20, 0
        %s169 = scalar_select %p168, %s20, 0
        %s170 = scalar_lea.vmem %s2, %s169
      $region20: #{_lambda_.8} parent=11 // pred_fallthru
        _
    $region12: #{_lambda_.8} parent=5 // pred_fallthru
      _
    %p171 = scmp.lt.s32.totalorder %s9, 2
    // Predicated region
    $region21: #{_lambda_.8} parent=5 // pred_check
      %p172 = pneg %p171
    $region22: #{_lambda_.8} parent=5 // pred_check_branch
      %174 = sbr.rel (%p172) target = $region24
    $region23: #{_lambda_.8} parent=5 // pred_region
      // Predicated region
      $region25: #{_lambda_.8} parent=23 // pred_check
        %p175 = pneg %p50
      $region26: #{_lambda_.8} parent=23 // pred_check_branch
        %177 = sbr.rel (%p175) target = $region28
      $region27: #{_lambda_.8} parent=23 // pred_region
        %s178 = smul.u32 4, %s16
        %p179 = scmp.lt.s32.totalorder %s178, 7
        %s180 = scalar_select %p179, %s178, 7
        %p181 = scmp.lt.s32.totalorder %s18, 0
        %s182 = scalar_select %p181, %s18, 0
        %s183 = sadd.s32 %s182, %s180
        %s184 = smul.addr %s183, 8
        %s185 = scalar_lea.vmem %s0, %s184
        %s186 = smul.u32 4, %s16
      $region28: #{_lambda_.8} parent=23 // pred_fallthru
        _
    $region24: #{_lambda_.8} parent=5 // pred_fallthru
      _
    %p187 = scmp.le.s32.totalorder 1, %s9
    %p188 = scmp.lt.s32.totalorder %s9, 3
    %p189 = pnand %p187, %p188
    %p190 = pneg %p189
    // Predicated region
    $region29: #{_lambda_.8} parent=5 // pred_check
      _
    $region30: #{_lambda_.8} parent=5 // pred_check_branch
      %192 = sbr.rel (%p189) target = $region32
    $region31: #{_lambda_.8} parent=5 // pred_region
      %s193 = ssub.s32 %s9, 1
      %s194 = smul.u32 4, %s19
      %p195 = scmp.lt.s32.totalorder %s194, 7
      %s196 = scalar_select %p195, %s194, 7
      %p197 = scmp.lt.s32.totalorder %s21, 0
      %s198 = scalar_select %p197, %s21, 0
      %s199 = sadd.s32 %s198, %s196
      %s200 = smul.addr %s199, 8
      %s201 = scalar_lea.vmem %s0, %s200
      %p202 = pneg %p56
      %p203 = pneg %p53
      %s204 = smul.u32 16, %s21
      %p205 = scmp.lt.s32.totalorder %s204, 15
      %s206 = scalar_select %p205, %s204, 15
      %p207 = scmp.lt.s32.totalorder %s20, 0
      %s208 = scalar_select %p207, %s20, 0
      %s209 = sadd.s32 %s208, %s206
      %s210 = smul.addr %s209, 8
      %s211 = scalar_lea.vmem %s1, %s210
      %p212 = pneg %p84
      %p213 = pneg %p81
      %p214 = scmp.lt.s32.totalorder %s20, 0
      %s215 = scalar_select %p214, %s20, 0
      %s216 = scalar_lea.vmem %s2, %s215
      %p217 = pneg %p110
      %p218 = pneg %p107
      %p219 = pneg %p138
      %p220 = pneg %p135
      %s221 = smul.u32 4, %s19
      %p222 = scmp.lt.s32.totalorder %s221, 7
      %s223 = scalar_select %p222, %s221, 7
      %p224 = scmp.lt.s32.totalorder %s20, 0
      %s225 = scalar_select %p224, %s20, 0
      %s226 = sadd.s32 %s225, %s223
      %s227 = smul.addr %s226, 8
      %s228 = scalar_lea.vmem %s3, %s227
      %s229 = smul.u32 4, %s19
      %p230 = scmp.lt.s32.totalorder %s229, 7
      %s231 = scalar_select %p230, %s229, 7
      %p232 = scmp.lt.s32.totalorder %s21, 0
      %s233 = scalar_select %p232, %s21, 0
      %s234 = sadd.s32 %s233, %s231
      %s235 = smul.addr %s234, 8
      %s236 = scalar_lea.vmem %s0, %s235
      %s237 = smul.u32 4, %s19
      %s238 = smul.u32 16, %s21
      %p239 = scmp.lt.s32.totalorder %s238, 15
      %s240 = scalar_select %p239, %s238, 15
      %p241 = scmp.lt.s32.totalorder %s20, 0
      %s242 = scalar_select %p241, %s20, 0
      %s243 = sadd.s32 %s242, %s240
      %s244 = smul.addr %s243, 8
      %s245 = scalar_lea.vmem %s1, %s244
      %s246 = smul.u32 16, %s21
      %p247 = scmp.lt.s32.totalorder %s20, 0
      %s248 = scalar_select %p247, %s20, 0
      %s249 = scalar_lea.vmem %s2, %s248
      %s250 = smul.u32 4, %s19
      %p251 = scmp.lt.s32.totalorder %s250, 7
      %s252 = scalar_select %p251, %s250, 7
      %p253 = scmp.lt.s32.totalorder %s20, 0
      %s254 = scalar_select %p253, %s20, 0
      %s255 = sadd.s32 %s254, %s252
      %s256 = smul.addr %s255, 8
      %s257 = scalar_lea.vmem %s3, %s256
      %s258 = smul.u32 4, %s19
      %p259 = scmp.eq.s32.totalorder %s21, 0
      // Predicated region
      $region33: #{_lambda_.8} parent=31 // pred_check
        %p260 = pneg %p259
      $region34: #{_lambda_.8} parent=31 // pred_check_branch
        %262 = sbr.rel (%p260) target = $region36
      $region35: #{_lambda_.8} parent=31 // pred_region
        %263 = vst [vmem:[#allocation2] sm:$0xff] 0.0
        %264 = vst [vmem:[#allocation2 + $0x8] sm:$0xff] 0.0
        %265 = vst [vmem:[#allocation2 + $0x10] sm:$0xff] 0.0
        %266 = vst [vmem:[#allocation2 + $0x18] sm:$0xff] 0.0
      $region36: #{_lambda_.8} parent=31 // pred_fallthru
        _
      %v267 = vld [vmem:[%s236] sm:$0xff]
      %v268 = vld [vmem:[%s236 + $0x8] sm:$0xff]
      %v269 = vld [vmem:[%s236 + $0x10] sm:$0xff]
      %v270 = vld [vmem:[%s236 + $0x18] sm:$0xff]
      %v271 = vld [vmem:[%s245] sm:$0xff]
      %v272 = vld [vmem:[%s245 + $0x8] sm:$0xff]
      %v273 = vld [vmem:[%s245 + $0x10] sm:$0xff]
      %v274 = vld [vmem:[%s245 + $0x18] sm:$0xff]
      %v275 = vld [vmem:[%s245 + $0x20] sm:$0xff]
      %v276 = vld [vmem:[%s245 + $0x28] sm:$0xff]
      %v277 = vld [vmem:[%s245 + $0x30] sm:$0xff]
      %v278 = vld [vmem:[%s245 + $0x38] sm:$0xff]
      %v279 = vld [vmem:[%s245 + $0x40] sm:$0xff]
      %v280 = vld [vmem:[%s245 + $0x48] sm:$0xff]
      %v281 = vld [vmem:[%s245 + $0x50] sm:$0xff]
      %v282 = vld [vmem:[%s245 + $0x58] sm:$0xff]
      %v283 = vld [vmem:[%s245 + $0x60] sm:$0xff]
      %v284 = vld [vmem:[%s245 + $0x68] sm:$0xff]
      %v285 = vld [vmem:[%s245 + $0x70] sm:$0xff]
      %v286 = vld [vmem:[%s245 + $0x78] sm:$0xff]
      %v287 = vld [vmem:[#allocation2] sm:$0xff]
      %v288 = vld [vmem:[#allocation2 + $0x8] sm:$0xff]
      %v289 = vld [vmem:[#allocation2 + $0x10] sm:$0xff]
      %v290 = vld [vmem:[#allocation2 + $0x18] sm:$0xff]
      %291 = vmatpush.msra.mxu0 %v286
      %292 = vmatpush.msra.mxu0 %v285
      %293 = vmatpush.msra.mxu0 %v284
      %294 = vmatpush.msra.mxu0 %v283
      %295 = vmatpush.msra.mxu0 %v282
      %296 = vmatpush.msra.mxu0 %v281
      %297 = vmatpush.msra.mxu0 %v280
      %298 = vmatpush.msra.mxu0 %v279
      %299 = vmatpush.msra.mxu0 %v278
      %300 = vmatpush.msra.mxu0 %v277
      %301 = vmatpush.msra.mxu0 %v276
      %302 = vmatpush.msra.mxu0 %v275
      %303 = vmatpush.msra.mxu0 %v274
      %304 = vmatpush.msra.mxu0 %v273
      %305 = vmatpush.msra.mxu0 %v272
      %306 = vmatpush.msra.mxu0 %v271
      %307 = vmatmul.f32.gmra.mxu0 %v267
      %v308 = vpop.f32.mrf.mxu0
      %v309 = vadd.f32 0.0, %v308
      %310 = vmatmul.f32.gmra.mxu0 %v268
      %v311 = vpop.f32.mrf.mxu0
      %v312 = vadd.f32 0.0, %v311
      %313 = vmatmul.f32.gmra.mxu0 %v269
      %v314 = vpop.f32.mrf.mxu0
      %v315 = vadd.f32 0.0, %v314
      %316 = vmatmul.f32.gmra.mxu0 %v270
      %v317 = vpop.f32.mrf.mxu0
      %v318 = vadd.f32 0.0, %v317
      %319 = vdwg.mxu0
      %v320 = vadd.f32 %v287, %v309
      %v321 = vadd.f32 %v288, %v312
      %v322 = vadd.f32 %v289, %v315
      %v323 = vadd.f32 %v290, %v318
      %324 = vst [vmem:[#allocation2] sm:$0xff] %v320
      %325 = vst [vmem:[#allocation2 + $0x8] sm:$0xff] %v321
      %326 = vst [vmem:[#allocation2 + $0x10] sm:$0xff] %v322
      %327 = vst [vmem:[#allocation2 + $0x18] sm:$0xff] %v323
      // Predicated region
      $region37: #{_lambda_.8} parent=31 // pred_check
        %p328 = pneg %p259
      $region38: #{_lambda_.8} parent=31 // pred_check_branch
        %330 = sbr.rel (%p328) target = $region40
      $region39: #{_lambda_.8} parent=31 // pred_region
        %v331 = vld [vmem:[#allocation2] sm:$0xff]
        %v332 = vld [vmem:[#allocation2 + $0x8] sm:$0xff]
        %v333 = vld [vmem:[#allocation2 + $0x10] sm:$0xff]
        %v334 = vld [vmem:[#allocation2 + $0x18] sm:$0xff]
        %v335 = vld [vmem:[%s249] sm:$0x1]
        %v337 = vperm.slane %v335, 0
        %v339 = vadd.f32 %v331, %v337
        %v340 = vadd.f32 %v332, %v337
        %v341 = vadd.f32 %v333, %v337
        %v342 = vadd.f32 %v334, %v337
        %343 = vst [vmem:[%s257] sm:$0xff] %v339
        %344 = vst [vmem:[%s257 + $0x8] sm:$0xff] %v340
        %345 = vst [vmem:[%s257 + $0x10] sm:$0xff] %v341
        %346 = vst [vmem:[%s257 + $0x18] sm:$0xff] %v342
      $region40: #{_lambda_.8} parent=31 // pred_fallthru
        _
      %s347 = smul.u32 4, %s19
      %p348 = scmp.lt.s32.totalorder %s347, 7
      %s349 = scalar_select %p348, %s347, 7
      %p350 = scmp.lt.s32.totalorder %s20, 0
      %s351 = scalar_select %p350, %s20, 0
      %s352 = sadd.s32 %s351, %s349
      %s353 = smul.addr %s352, 8
      %s354 = scalar_lea.vmem %s3, %s353
      // Predicated region
      $region41: #{_lambda_.8} parent=31 // pred_check
        %p355 = pneg %p135
      $region42: #{_lambda_.8} parent=31 // pred_check_branch
        %357 = sbr.rel (%p355) target = $region44
      $region43: #{_lambda_.8} parent=31 // pred_region
        %s358 = smul.u32 4, %s19
      $region44: #{_lambda_.8} parent=31 // pred_fallthru
        _
    $region32: #{_lambda_.8} parent=5 // pred_fallthru
      _
    %p359 = scmp.le.s32.totalorder 2, %s9
    // Predicated region
    $region45: #{_lambda_.8} parent=5 // pred_check
      %p360 = pneg %p359
    $region46: #{_lambda_.8} parent=5 // pred_check_branch
      %362 = sbr.rel (%p360) target = $region48
    $region47: #{_lambda_.8} parent=5 // pred_region
      %s363 = ssub.s32 %s9, 2
      // Predicated region
      $region49: #{_lambda_.8} parent=47 // pred_check
        %p364 = pneg %p141
      $region50: #{_lambda_.8} parent=47 // pred_check_branch
        %366 = sbr.rel (%p364) target = $region52
      $region51: #{_lambda_.8} parent=47 // pred_region
        %s367 = smul.u32 4, %s22
        %p368 = scmp.lt.s32.totalorder %s367, 7
        %s369 = scalar_select %p368, %s367, 7
        %p370 = scmp.lt.s32.totalorder %s23, 0
        %s371 = scalar_select %p370, %s23, 0
        %s372 = sadd.s32 %s371, %s369
        %s373 = smul.addr %s372, 8
        %s374 = scalar_lea.vmem %s3, %s373
      $region52: #{_lambda_.8} parent=47 // pred_fallthru
        _
    $region48: #{_lambda_.8} parent=5 // pred_fallthru
      _
  $region6: #{_lambda_.8} parent=0 // loop_footer
    %s13 = sadd.s32 1, %s9
  $region7: #{_lambda_.8} parent=0 // loop_footer_branch
    %8 = sbr.rel target = $region3
  $region8: #{_lambda_.8} parent=0 // loop_exit
    _

// kernel: _lambda_.7
$region0: #{_lambda_.7}
  #allocation0 [shape = 'u32[]', space=smem, size = 0x4, offset = 0x4, fixed_abs, tag = 'smem constant byte address 0x4 - core index']
  #allocation1 [shape = 'u32[72,128]{1,0:T(1,128)}', space=vmem, size = 0x9000, scoped, tag = 'internal scratch']
  #allocation2 [shape = 'f32[128,128]{1,0:T(8,128)}', space=vmem, size = 0x10000, scoped, tag = 'scratch operand']
  %s0 = inlined_call_operand.vmem [shape: f32[128,128], index: 0, kind: input, shape index: {}]
  %s1 = inlined_call_operand.vmem [shape: f32[128,128], index: 1, kind: input, shape index: {}]
  %s2 = inlined_call_operand.vmem [shape: f32[1,128], index: 2, kind: input, shape index: {}]
  %s3 = inlined_call_operand.vmem [shape: f32[128,128], index: 3, kind: output, shape index: {}]
  %s4 = sld [smem:[#allocation0]]
  $region30: #{_lambda_.7} parent=0
    _
  %s6 = ssub.s32 1, %s4
  %s7 = scalar_select 0, %s6, %s4
  // Predicated region
  $region2: #{_lambda_.7} parent=0 // pred_check
    _
  $region3: #{_lambda_.7} parent=0 // pred_check_branch
    %9 = sbr.rel (0) target = $region5
  $region4: #{_lambda_.7} parent=0 // pred_region
    _
  $region5: #{_lambda_.7} parent=0 // pred_fallthru
    _
  // Predicated region
  $region6: #{_lambda_.7} parent=0 // pred_check
    _
  $region7: #{_lambda_.7} parent=0 // pred_check_branch
    %11 = sbr.rel (0) target = $region9
  $region8: #{_lambda_.7} parent=0 // pred_region
    _
  $region9: #{_lambda_.7} parent=0 // pred_fallthru
    _
  // Predicated region
  $region10: #{_lambda_.7} parent=0 // pred_check
    _
  $region11: #{_lambda_.7} parent=0 // pred_check_branch
    %13 = sbr.rel (0) target = $region13
  $region12: #{_lambda_.7} parent=0 // pred_region
    _
  $region13: #{_lambda_.7} parent=0 // pred_fallthru
    _
  %p14 = scmp.eq.s32.totalorder 0, 0
  // Predicated region
  $region14: #{_lambda_.7} parent=0 // pred_check
    %p15 = pneg %p14
  $region15: #{_lambda_.7} parent=0 // pred_check_branch
    %17 = sbr.rel (%p15) target = $region17
  $region16: #{_lambda_.7} parent=0 // pred_region
    %18 = vst [vmem:[#allocation2] sm:$0xff] 0.0
    %19 = vst [vmem:[#allocation2 + $0x8] sm:$0xff] 0.0
    %20 = vst [vmem:[#allocation2 + $0x10] sm:$0xff] 0.0
    %21 = vst [vmem:[#allocation2 + $0x18] sm:$0xff] 0.0
    %22 = vst [vmem:[#allocation2 + $0x20] sm:$0xff] 0.0
    %23 = vst [vmem:[#allocation2 + $0x28] sm:$0xff] 0.0
    %24 = vst [vmem:[#allocation2 + $0x30] sm:$0xff] 0.0
    %25 = vst [vmem:[#allocation2 + $0x38] sm:$0xff] 0.0
    %26 = vst [vmem:[#allocation2 + $0x40] sm:$0xff] 0.0
    %27 = vst [vmem:[#allocation2 + $0x48] sm:$0xff] 0.0
    %28 = vst [vmem:[#allocation2 + $0x50] sm:$0xff] 0.0
    %29 = vst [vmem:[#allocation2 + $0x58] sm:$0xff] 0.0
    %30 = vst [vmem:[#allocation2 + $0x60] sm:$0xff] 0.0
    %31 = vst [vmem:[#allocation2 + $0x68] sm:$0xff] 0.0
    %32 = vst [vmem:[#allocation2 + $0x70] sm:$0xff] 0.0
    %33 = vst [vmem:[#allocation2 + $0x78] sm:$0xff] 0.0
  $region17: #{_lambda_.7} parent=0 // pred_fallthru
    _
  %v34 = vld [vmem:[%s0] sm:$0xff]
  %v35 = vld [vmem:[%s0 + $0x8] sm:$0xff]
  %v36 = vld [vmem:[%s0 + $0x10] sm:$0xff]
  %v37 = vld [vmem:[%s0 + $0x18] sm:$0xff]
  %v38 = vld [vmem:[%s0 + $0x20] sm:$0xff]
  %v39 = vld [vmem:[%s0 + $0x28] sm:$0xff]
  %v40 = vld [vmem:[%s0 + $0x30] sm:$0xff]
  %v41 = vld [vmem:[%s0 + $0x38] sm:$0xff]
  %v42 = vld [vmem:[%s0 + $0x40] sm:$0xff]
  %v43 = vld [vmem:[%s0 + $0x48] sm:$0xff]
  %v44 = vld [vmem:[%s0 + $0x50] sm:$0xff]
  %v45 = vld [vmem:[%s0 + $0x58] sm:$0xff]
  %v46 = vld [vmem:[%s0 + $0x60] sm:$0xff]
  %v47 = vld [vmem:[%s0 + $0x68] sm:$0xff]
  %v48 = vld [vmem:[%s0 + $0x70] sm:$0xff]
  %v49 = vld [vmem:[%s0 + $0x78] sm:$0xff]
  %v50 = vld [vmem:[%s1] sm:$0xff]
  %v51 = vld [vmem:[%s1 + $0x8] sm:$0xff]
  %v52 = vld [vmem:[%s1 + $0x10] sm:$0xff]
  %v53 = vld [vmem:[%s1 + $0x18] sm:$0xff]
  %v54 = vld [vmem:[%s1 + $0x20] sm:$0xff]
  %v55 = vld [vmem:[%s1 + $0x28] sm:$0xff]
  %v56 = vld [vmem:[%s1 + $0x30] sm:$0xff]
  %v57 = vld [vmem:[%s1 + $0x38] sm:$0xff]
  %v58 = vld [vmem:[%s1 + $0x40] sm:$0xff]
  %v59 = vld [vmem:[%s1 + $0x48] sm:$0xff]
  %v60 = vld [vmem:[%s1 + $0x50] sm:$0xff]
  %v61 = vld [vmem:[%s1 + $0x58] sm:$0xff]
  %v62 = vld [vmem:[%s1 + $0x60] sm:$0xff]
  %v63 = vld [vmem:[%s1 + $0x68] sm:$0xff]
  %v64 = vld [vmem:[%s1 + $0x70] sm:$0xff]
  %v65 = vld [vmem:[%s1 + $0x78] sm:$0xff]
  %v66 = vld [vmem:[#allocation2] sm:$0xff]
  %v67 = vld [vmem:[#allocation2 + $0x8] sm:$0xff]
  %v68 = vld [vmem:[#allocation2 + $0x10] sm:$0xff]
  %v69 = vld [vmem:[#allocation2 + $0x18] sm:$0xff]
  %v70 = vld [vmem:[#allocation2 + $0x20] sm:$0xff]
  %v71 = vld [vmem:[#allocation2 + $0x28] sm:$0xff]
  %v72 = vld [vmem:[#allocation2 + $0x30] sm:$0xff]
  %v73 = vld [vmem:[#allocation2 + $0x38] sm:$0xff]
  %v74 = vld [vmem:[#allocation2 + $0x40] sm:$0xff]
  %v75 = vld [vmem:[#allocation2 + $0x48] sm:$0xff]
  %v76 = vld [vmem:[#allocation2 + $0x50] sm:$0xff]
  %v77 = vld [vmem:[#allocation2 + $0x58] sm:$0xff]
  %v78 = vld [vmem:[#allocation2 + $0x60] sm:$0xff]
  %v79 = vld [vmem:[#allocation2 + $0x68] sm:$0xff]
  %v80 = vld [vmem:[#allocation2 + $0x70] sm:$0xff]
  %v81 = vld [vmem:[#allocation2 + $0x78] sm:$0xff]
  %82 = vxpose.xlu0.b32.start [1/16] %v34, 128
  %83 = vxpose.xlu0.b32.cont [2/16] %v35, 128
  %84 = vxpose.xlu0.b32.cont [3/16] %v36, 128
  %85 = vxpose.xlu0.b32.cont [4/16] %v37, 128
  %86 = vxpose.xlu0.b32.cont [5/16] %v38, 128
  %87 = vxpose.xlu0.b32.cont [6/16] %v39, 128
  %88 = vxpose.xlu0.b32.cont [7/16] %v40, 128
  %89 = vxpose.xlu0.b32.cont [8/16] %v41, 128
  %90 = vxpose.xlu0.b32.cont [9/16] %v42, 128
  %91 = vxpose.xlu0.b32.cont [10/16] %v43, 128
  %92 = vxpose.xlu0.b32.cont [11/16] %v44, 128
  %93 = vxpose.xlu0.b32.cont [12/16] %v45, 128
  %94 = vxpose.xlu0.b32.cont [13/16] %v46, 128
  %95 = vxpose.xlu0.b32.cont [14/16] %v47, 128
  %96 = vxpose.xlu0.b32.cont [15/16] %v48, 128
  %97 = vxpose.xlu0.b32.end [16/16] %v49, 128
  %v98 = vpop.trf.xlu0
  %v99 = vpop.trf.xlu0
  %v100 = vpop.trf.xlu0
  %v101 = vpop.trf.xlu0
  %v102 = vpop.trf.xlu0
  %v103 = vpop.trf.xlu0
  %v104 = vpop.trf.xlu0
  %v105 = vpop.trf.xlu0
  %v106 = vpop.trf.xlu0
  %v107 = vpop.trf.xlu0
  %v108 = vpop.trf.xlu0
  %v109 = vpop.trf.xlu0
  %v110 = vpop.trf.xlu0
  %v111 = vpop.trf.xlu0
  %v112 = vpop.trf.xlu0
  %v113 = vpop.trf.xlu0
  %114 = vmatpush.msra.mxu0 %v65
  %115 = vmatpush.msra.mxu0 %v64
  %116 = vmatpush.msra.mxu0 %v63
  %117 = vmatpush.msra.mxu0 %v62
  %118 = vmatpush.msra.mxu0 %v61
  %119 = vmatpush.msra.mxu0 %v60
  %120 = vmatpush.msra.mxu0 %v59
  %121 = vmatpush.msra.mxu0 %v58
  %122 = vmatpush.msra.mxu0 %v57
  %123 = vmatpush.msra.mxu0 %v56
  %124 = vmatpush.msra.mxu0 %v55
  %125 = vmatpush.msra.mxu0 %v54
  %126 = vmatpush.msra.mxu0 %v53
  %127 = vmatpush.msra.mxu0 %v52
  %128 = vmatpush.msra.mxu0 %v51
  %129 = vmatpush.msra.mxu0 %v50
  %130 = vmatmul.f32.gmra.mxu0 %v98
  %v131 = vpop.f32.mrf.mxu0
  %v132 = vadd.f32 0.0, %v131
  %133 = vmatmul.f32.gmra.mxu0 %v99
  %v134 = vpop.f32.mrf.mxu0
  %v135 = vadd.f32 0.0, %v134
  %136 = vmatmul.f32.gmra.mxu0 %v100
  %v137 = vpop.f32.mrf.mxu0
  %v138 = vadd.f32 0.0, %v137
  %139 = vmatmul.f32.gmra.mxu0 %v101
  %v140 = vpop.f32.mrf.mxu0
  %v141 = vadd.f32 0.0, %v140
  %142 = vmatmul.f32.gmra.mxu0 %v102
  %v143 = vpop.f32.mrf.mxu0
  %v144 = vadd.f32 0.0, %v143
  %145 = vmatmul.f32.gmra.mxu0 %v103
  %v146 = vpop.f32.mrf.mxu0
  %v147 = vadd.f32 0.0, %v146
  %148 = vmatmul.f32.gmra.mxu0 %v104
  %v149 = vpop.f32.mrf.mxu0
  %v150 = vadd.f32 0.0, %v149
  %151 = vmatmul.f32.gmra.mxu0 %v105
  %v152 = vpop.f32.mrf.mxu0
  %v153 = vadd.f32 0.0, %v152
  %154 = vmatmul.f32.gmra.mxu0 %v106
  %v155 = vpop.f32.mrf.mxu0
  %v156 = vadd.f32 0.0, %v155
  %157 = vmatmul.f32.gmra.mxu0 %v107
  %v158 = vpop.f32.mrf.mxu0
  %v159 = vadd.f32 0.0, %v158
  %160 = vmatmul.f32.gmra.mxu0 %v108
  %v161 = vpop.f32.mrf.mxu0
  %v162 = vadd.f32 0.0, %v161
  %163 = vmatmul.f32.gmra.mxu0 %v109
  %v164 = vpop.f32.mrf.mxu0
  %v165 = vadd.f32 0.0, %v164
  %166 = vmatmul.f32.gmra.mxu0 %v110
  %v167 = vpop.f32.mrf.mxu0
  %v168 = vadd.f32 0.0, %v167
  %169 = vmatmul.f32.gmra.mxu0 %v111
  %v170 = vpop.f32.mrf.mxu0
  %v171 = vadd.f32 0.0, %v170
  %172 = vmatmul.f32.gmra.mxu0 %v112
  %v173 = vpop.f32.mrf.mxu0
  %v174 = vadd.f32 0.0, %v173
  %175 = vmatmul.f32.gmra.mxu0 %v113
  %v176 = vpop.f32.mrf.mxu0
  %v177 = vadd.f32 0.0, %v176
  %178 = vdwg.mxu0
  %v179 = vadd.f32 %v66, %v132
  %v180 = vadd.f32 %v67, %v135
  %v181 = vadd.f32 %v68, %v138
  %v182 = vadd.f32 %v69, %v141
  %v183 = vadd.f32 %v70, %v144
  %v184 = vadd.f32 %v71, %v147
  %v185 = vadd.f32 %v72, %v150
  %v186 = vadd.f32 %v73, %v153
  %v187 = vadd.f32 %v74, %v156
  %v188 = vadd.f32 %v75, %v159
  %v189 = vadd.f32 %v76, %v162
  %v190 = vadd.f32 %v77, %v165
  %v191 = vadd.f32 %v78, %v168
  %v192 = vadd.f32 %v79, %v171
  %v193 = vadd.f32 %v80, %v174
  %v194 = vadd.f32 %v81, %v177
  %195 = vst [vmem:[#allocation2] sm:$0xff] %v179
  %196 = vst [vmem:[#allocation2 + $0x8] sm:$0xff] %v180
  %197 = vst [vmem:[#allocation2 + $0x10] sm:$0xff] %v181
  %198 = vst [vmem:[#allocation2 + $0x18] sm:$0xff] %v182
  %199 = vst [vmem:[#allocation2 + $0x20] sm:$0xff] %v183
  %200 = vst [vmem:[#allocation2 + $0x28] sm:$0xff] %v184
  %201 = vst [vmem:[#allocation2 + $0x30] sm:$0xff] %v185
  %202 = vst [vmem:[#allocation2 + $0x38] sm:$0xff] %v186
  %203 = vst [vmem:[#allocation2 + $0x40] sm:$0xff] %v187
  %204 = vst [vmem:[#allocation2 + $0x48] sm:$0xff] %v188
  %205 = vst [vmem:[#allocation2 + $0x50] sm:$0xff] %v189
  %206 = vst [vmem:[#allocation2 + $0x58] sm:$0xff] %v190
  %207 = vst [vmem:[#allocation2 + $0x60] sm:$0xff] %v191
  %208 = vst [vmem:[#allocation2 + $0x68] sm:$0xff] %v192
  %209 = vst [vmem:[#allocation2 + $0x70] sm:$0xff] %v193
  %210 = vst [vmem:[#allocation2 + $0x78] sm:$0xff] %v194
  // Predicated region
  $region18: #{_lambda_.7} parent=0 // pred_check
    %p211 = pneg %p14
  $region19: #{_lambda_.7} parent=0 // pred_check_branch
    %213 = sbr.rel (%p211) target = $region21
  $region20: #{_lambda_.7} parent=0 // pred_region
    %v214 = vld [vmem:[#allocation2] sm:$0xff]
    %v215 = vld [vmem:[#allocation2 + $0x8] sm:$0xff]
    %v216 = vld [vmem:[#allocation2 + $0x10] sm:$0xff]
    %v217 = vld [vmem:[#allocation2 + $0x18] sm:$0xff]
    %v218 = vld [vmem:[#allocation2 + $0x20] sm:$0xff]
    %v219 = vld [vmem:[#allocation2 + $0x28] sm:$0xff]
    %v220 = vld [vmem:[#allocation2 + $0x30] sm:$0xff]
    %v221 = vld [vmem:[#allocation2 + $0x38] sm:$0xff]
    %v222 = vld [vmem:[#allocation2 + $0x40] sm:$0xff]
    %v223 = vld [vmem:[#allocation2 + $0x48] sm:$0xff]
    %v224 = vld [vmem:[#allocation2 + $0x50] sm:$0xff]
    %v225 = vld [vmem:[#allocation2 + $0x58] sm:$0xff]
    %v226 = vld [vmem:[#allocation2 + $0x60] sm:$0xff]
    %v227 = vld [vmem:[#allocation2 + $0x68] sm:$0xff]
    %v228 = vld [vmem:[#allocation2 + $0x70] sm:$0xff]
    %v229 = vld [vmem:[#allocation2 + $0x78] sm:$0xff]
    %v230 = vld [vmem:[%s2] sm:$0x1]
    %v232 = vperm.slane %v230, 0
    %v234 = vadd.f32 %v214, %v232
    %v235 = vadd.f32 %v215, %v232
    %v236 = vadd.f32 %v216, %v232
    %v237 = vadd.f32 %v217, %v232
    %v238 = vadd.f32 %v218, %v232
    %v239 = vadd.f32 %v219, %v232
    %v240 = vadd.f32 %v220, %v232
    %v241 = vadd.f32 %v221, %v232
    %v242 = vadd.f32 %v222, %v232
    %v243 = vadd.f32 %v223, %v232
    %v244 = vadd.f32 %v224, %v232
    %v245 = vadd.f32 %v225, %v232
    %v246 = vadd.f32 %v226, %v232
    %v247 = vadd.f32 %v227, %v232
    %v248 = vadd.f32 %v228, %v232
    %v249 = vadd.f32 %v229, %v232
    %250 = vst [vmem:[%s3] sm:$0xff] %v234
    %251 = vst [vmem:[%s3 + $0x8] sm:$0xff] %v235
    %252 = vst [vmem:[%s3 + $0x10] sm:$0xff] %v236
    %253 = vst [vmem:[%s3 + $0x18] sm:$0xff] %v237
    %254 = vst [vmem:[%s3 + $0x20] sm:$0xff] %v238
    %255 = vst [vmem:[%s3 + $0x28] sm:$0xff] %v239
    %256 = vst [vmem:[%s3 + $0x30] sm:$0xff] %v240
    %257 = vst [vmem:[%s3 + $0x38] sm:$0xff] %v241
    %258 = vst [vmem:[%s3 + $0x40] sm:$0xff] %v242
    %259 = vst [vmem:[%s3 + $0x48] sm:$0xff] %v243
    %260 = vst [vmem:[%s3 + $0x50] sm:$0xff] %v244
    %261 = vst [vmem:[%s3 + $0x58] sm:$0xff] %v245
    %262 = vst [vmem:[%s3 + $0x60] sm:$0xff] %v246
    %263 = vst [vmem:[%s3 + $0x68] sm:$0xff] %v247
    %264 = vst [vmem:[%s3 + $0x70] sm:$0xff] %v248
    %265 = vst [vmem:[%s3 + $0x78] sm:$0xff] %v249
  $region21: #{_lambda_.7} parent=0 // pred_fallthru
    _
  // Predicated region
  $region22: #{_lambda_.7} parent=0 // pred_check
    _
  $region23: #{_lambda_.7} parent=0 // pred_check_branch
    %267 = sbr.rel (0) target = $region25
  $region24: #{_lambda_.7} parent=0 // pred_region
    _
  $region25: #{_lambda_.7} parent=0 // pred_fallthru
    _
  // Predicated region
  $region26: #{_lambda_.7} parent=0 // pred_check
    _
  $region27: #{_lambda_.7} parent=0 // pred_check_branch
    %269 = sbr.rel (0) target = $region29
  $region28: #{_lambda_.7} parent=0 // pred_region
    _
  $region29: #{_lambda_.7} parent=0 // pred_fallthru
    _

// kernel: reverse.0
$region0: #{reverse.0}
  %s0 = inlined_call_operand.vmem [shape: f32[8,15], index: 0, kind: input, shape index: {}]
  %s1 = inlined_call_operand.vmem [shape: f32[8,15], index: 1, kind: output, shape index: {}]
  %v2 = vlaneseq
  %v3 = vsub.s32 14, %v2
  %4 = vset.pattern.permute.xlu0 %v3
  $region1: #{reverse.0} parent=0
    #allocation0 [shape = 'u8[4096]{0}', space=vmem, size = 0x1000, scoped, tag = 'operand span for operand 0']
    #allocation1 [shape = 'u8[4096]{0}', space=vmem, size = 0x1000, scoped, tag = 'operand span for operand 1']
    // Predicated region
    $region2: #{reverse.0} parent=1 // pred_check
      _
    $region3: #{reverse.0} parent=1 // pred_check_branch
      %6 = sbr.rel (0) target = $region5
    $region4: #{reverse.0} parent=1 // pred_region
      // Predicated region
      $region6: #{reverse.0} parent=4 // pred_check
        _
      $region7: #{reverse.0} parent=4 // pred_check_branch
        %8 = sbr.rel (0) target = $region9
      $region8: #{reverse.0} parent=4 // pred_region
        // Predicated region
        $region21: #{reverse.0} parent=8 // pred_check
          _
        $region22: #{reverse.0} parent=8 // pred_check_branch
          %24 = sbr.rel (0) target = $region24
        $region23: #{reverse.0} parent=8 // pred_region
          loop: start=0, step=1, limit=1
          $region25: #{reverse.0} parent=23 // loop_pre_header
            _
          $region26: #{reverse.0} parent=23 // loop_header
            %s26 = sphi 0, %s30
            %p27 = scmp.ge.s32.totalorder %s26, 1
            %s31 = sphi %s0, %s0
            %s32 = sphi [#allocation0], [#allocation0]
          $region27: #{reverse.0} parent=23 // loop_header_branch
            %29 = sbr.rel (%p27) target = $region31
          $region28: #{reverse.0} parent=23 // loop_body
            %v33 = vld [vmem:[%s31] sm:$0xff]
            %34 = vst [vmem:[%s32] sm:$0xff] %v33
          $region29: #{reverse.0} parent=23 // loop_footer
            %s30 = sadd.s32 1, %s26
          $region30: #{reverse.0} parent=23 // loop_footer_branch
            %25 = sbr.rel target = $region26
          $region31: #{reverse.0} parent=23 // loop_exit
            _
        $region24: #{reverse.0} parent=8 // pred_fallthru
          _
        // Predicated region
        $region32: #{reverse.0} parent=8 // pred_check
          _
        $region33: #{reverse.0} parent=8 // pred_check_branch
          %36 = sbr.rel target = $region35
        $region34: #{reverse.0} parent=8 // pred_region
          _
        $region35: #{reverse.0} parent=8 // pred_fallthru
          _
      $region9: #{reverse.0} parent=4 // pred_fallthru
        _
      // Predicated region
      $region10: #{reverse.0} parent=4 // pred_check
        _
      $region11: #{reverse.0} parent=4 // pred_check_branch
        %10 = sbr.rel target = $region13
      $region12: #{reverse.0} parent=4 // pred_region
        %s12 = ssub.s32 256, 1
        loop: start=0, step=1, limit=1
        $region14: #{reverse.0} parent=12 // loop_pre_header
          _
        $region15: #{reverse.0} parent=12 // loop_header
          %s14 = sphi 0, %s18
          %p15 = scmp.ge.s32.totalorder %s14, 1
          %s19 = sphi %s0, %s0
          %s20 = sphi [#allocation0], [#allocation0]
        $region16: #{reverse.0} parent=12 // loop_header_branch
          %17 = sbr.rel (%p15) target = $region20
        $region17: #{reverse.0} parent=12 // loop_body
          %v21 = vld [vmem:[%s19] sm:%s12]
          %22 = vst [vmem:[%s20] sm:%s12] %v21
        $region18: #{reverse.0} parent=12 // loop_footer
          %s18 = sadd.s32 1, %s14
        $region19: #{reverse.0} parent=12 // loop_footer_branch
          %13 = sbr.rel target = $region15
        $region20: #{reverse.0} parent=12 // loop_exit
          _
      $region13: #{reverse.0} parent=4 // pred_fallthru
        _
    $region5: #{reverse.0} parent=1 // pred_fallthru
      _
    %37 = vnop
    %v38 = vld [vmem:[#allocation0] sm:$0xff]
    %39 = vperm.xlu0 %4, %v38
    %v40 = vpop.permute.xlu0 %39
    %41 = vst [vmem:[#allocation1] sm:$0xff] %v40
    // Predicated region
    $region36: #{reverse.0} parent=1 // pred_check
      _
    $region37: #{reverse.0} parent=1 // pred_check_branch
      %43 = sbr.rel (0) target = $region39
    $region38: #{reverse.0} parent=1 // pred_region
      // Predicated region
      $region40: #{reverse.0} parent=38 // pred_check
        _
      $region41: #{reverse.0} parent=38 // pred_check_branch
        %45 = sbr.rel (0) target = $region43
      $region42: #{reverse.0} parent=38 // pred_region
        // Predicated region
        $region55: #{reverse.0} parent=42 // pred_check
          _
        $region56: #{reverse.0} parent=42 // pred_check_branch
          %61 = sbr.rel (0) target = $region58
        $region57: #{reverse.0} parent=42 // pred_region
          loop: start=0, step=1, limit=1
          $region59: #{reverse.0} parent=57 // loop_pre_header
            _
          $region60: #{reverse.0} parent=57 // loop_header
            %s63 = sphi 0, %s67
            %p64 = scmp.ge.s32.totalorder %s63, 1
            %s68 = sphi [#allocation1], [#allocation1]
            %s69 = sphi %s1, %s1
          $region61: #{reverse.0} parent=57 // loop_header_branch
            %66 = sbr.rel (%p64) target = $region65
          $region62: #{reverse.0} parent=57 // loop_body
            %v70 = vld [vmem:[%s68] sm:$0xff]
            %71 = vst [vmem:[%s69] sm:$0xff] %v70
          $region63: #{reverse.0} parent=57 // loop_footer
            %s67 = sadd.s32 1, %s63
          $region64: #{reverse.0} parent=57 // loop_footer_branch
            %62 = sbr.rel target = $region60
          $region65: #{reverse.0} parent=57 // loop_exit
            _
        $region58: #{reverse.0} parent=42 // pred_fallthru
          _
        // Predicated region
        $region66: #{reverse.0} parent=42 // pred_check
          _
        $region67: #{reverse.0} parent=42 // pred_check_branch
          %73 = sbr.rel target = $region69
        $region68: #{reverse.0} parent=42 // pred_region
          _
        $region69: #{reverse.0} parent=42 // pred_fallthru
          _
      $region43: #{reverse.0} parent=38 // pred_fallthru
        _
      // Predicated region
      $region44: #{reverse.0} parent=38 // pred_check
        _
      $region45: #{reverse.0} parent=38 // pred_check_branch
        %47 = sbr.rel target = $region47
      $region46: #{reverse.0} parent=38 // pred_region
        %s49 = ssub.s32 256, 1
        loop: start=0, step=1, limit=1
        $region48: #{reverse.0} parent=46 // loop_pre_header
          _
        $region49: #{reverse.0} parent=46 // loop_header
          %s51 = sphi 0, %s55
          %p52 = scmp.ge.s32.totalorder %s51, 1
          %s56 = sphi [#allocation1], [#allocation1]
          %s57 = sphi %s1, %s1
        $region50: #{reverse.0} parent=46 // loop_header_branch
          %54 = sbr.rel (%p52) target = $region54
        $region51: #{reverse.0} parent=46 // loop_body
          %v58 = vld [vmem:[%s56] sm:%s49]
          %59 = vst [vmem:[%s57] sm:%s49] %v58
        $region52: #{reverse.0} parent=46 // loop_footer
          %s55 = sadd.s32 1, %s51
        $region53: #{reverse.0} parent=46 // loop_footer_branch
          %50 = sbr.rel target = $region49
        $region54: #{reverse.0} parent=46 // loop_exit
          _
      $region47: #{reverse.0} parent=38 // pred_fallthru
        _
    $region39: #{reverse.0} parent=1 // pred_fallthru
      _
    %74 = vnop

// kernel: _lambda_.10
$region0: #{_lambda_.10}
  #allocation0 [shape = 'u32[]', space=smem, size = 0x4, offset = 0x4, fixed_abs, tag = 'smem constant byte address 0x4 - core index']
  #allocation1 [shape = 'u32[72,128]{1,0:T(1,128)}', space=vmem, size = 0x9000, scoped, tag = 'internal scratch']
  %s0 = inlined_call_operand.vmem [shape: f32[32,32], index: 0, kind: input, shape index: {}]
  %s1 = inlined_call_operand.vmem [shape: f32[4,64,32], index: 1, kind: input, shape index: {}]
  %s2 = inlined_call_operand.vmem [shape: f32[4,64,32], index: 2, kind: input, shape index: {}]
  %s3 = inlined_call_operand.vmem [shape: f32[4,32,32], index: 3, kind: input, shape index: {}]
  %s4 = inlined_call_operand.vmem [shape: f32[4,1,32], index: 4, kind: input, shape index: {}]
  %s5 = inlined_call_operand.vmem [shape: f32[4,32,64], index: 5, kind: input, shape index: {}]
  %s6 = inlined_call_operand.vmem [shape: f32[1,64], index: 6, kind: input, shape index: {}]
  %s7 = inlined_call_operand.vmem [shape: f32[32,64], index: 7, kind: output, shape index: {}]
  %s8 = sld [smem:[#allocation0]]
  $region61: #{_lambda_.10} parent=0
    _
  %s10 = ssub.s32 1, %s8
  %s11 = scalar_select 0, %s10, %s8
  loop: start=0, step=1, limit=4
  $region2: #{_lambda_.10} parent=0 // loop_pre_header
    _
  $region3: #{_lambda_.10} parent=0 // loop_header
    %s13 = sphi 0, %s17
    %p14 = scmp.ge.s32.totalorder %s13, 4
    %s23 = sphi 0, %s25
    %s26 = sphi 0, %s23
    %s27 = sphi 0, %s26
    %s43 = sphi 0, %s27
    %s47 = sphi 0, %s47
    %s49 = sphi 0, %s47
    %s50 = sphi 0, %s49
    %s64 = sphi 0, %s50
    %s68 = sphi 0, %s68
    %s70 = sphi 0, %s68
    %s71 = sphi 0, %s70
    %s85 = sphi 0, %s71
    %s89 = sphi 0, %s89
    %s91 = sphi 0, %s89
    %s92 = sphi 0, %s91
    %s106 = sphi 0, %s92
    %s110 = sphi 0, %s110
    %s112 = sphi 0, %s110
    %s113 = sphi 0, %s112
    %s127 = sphi 0, %s113
    %s131 = sphi 0, %s131
    %s133 = sphi 0, %s131
    %s134 = sphi 0, %s133
    %s148 = sphi 0, %s134
    %s152 = sphi 0, %s152
    %s154 = sphi 0, %s152
    %s155 = sphi 0, %s154
    %s169 = sphi 0, %s155
    %s175 = sphi 0, %s177
    %s178 = sphi 0, %s175
    %s179 = sphi 0, %s178
    %s195 = sphi 0, %s179
  $region4: #{_lambda_.10} parent=0 // loop_header_branch
    %16 = sbr.rel (%p14) target = $region8
  $region5: #{_lambda_.10} parent=0 // loop_body
    %s18 = ssub.s32 %s13, 1
    %s19 = ssub.s32 %s13, 2
    %s20 = sadd.s32 %s13, 1
    %s21 = ssub.s32 %s13, %s20
    %p22 = scmp.eq.s32.totalorder %s21, 0
    %s24 = sadd.s32 %s23, 1
    %s25 = scalar_select %p22, %s23, %s24
    %p28 = pneg %p22
    %p29 = scmp.eq.s32.totalorder %s13, 1
    %p30 = por %p28, %p29
    %p31 = scmp.ne.s32.totalorder %s23, %s26
    %p32 = scmp.eq.s32.totalorder %s13, 0
    %p33 = por %p31, %p32
    %p34 = scmp.ne.s32.totalorder %s23, %s26
    %p35 = scmp.eq.s32.totalorder %s18, 1
    %p36 = por %p34, %p35
    %p37 = scmp.ne.s32.totalorder %s26, %s27
    %p38 = scmp.eq.s32.totalorder %s18, 0
    %p39 = por %p37, %p38
    %p40 = scmp.ne.s32.totalorder %s26, %s27
    %p41 = scmp.eq.s32.totalorder %s19, 1
    %p42 = por %p40, %p41
    %p44 = scmp.ne.s32.totalorder %s27, %s43
    %p45 = scmp.eq.s32.totalorder %s19, 0
    %p46 = por %p44, %p45
    %s48 = sadd.s32 %s47, 1
    %p51 = scmp.eq.s32.totalorder %s13, 1
    %p52 = scmp.ne.s32.totalorder %s47, %s49
    %p53 = scmp.eq.s32.totalorder %s13, 0
    %p54 = por %p52, %p53
    %p55 = scmp.ne.s32.totalorder %s47, %s49
    %p56 = scmp.eq.s32.totalorder %s18, 1
    %p57 = por %p55, %p56
    %p58 = scmp.ne.s32.totalorder %s49, %s50
    %p59 = scmp.eq.s32.totalorder %s18, 0
    %p60 = por %p58, %p59
    %p61 = scmp.ne.s32.totalorder %s49, %s50
    %p62 = scmp.eq.s32.totalorder %s19, 1
    %p63 = por %p61, %p62
    %p65 = scmp.ne.s32.totalorder %s50, %s64
    %p66 = scmp.eq.s32.totalorder %s19, 0
    %p67 = por %p65, %p66
    %s69 = sadd.s32 %s68, 1
    %p72 = scmp.eq.s32.totalorder %s13, 1
    %p73 = scmp.ne.s32.totalorder %s68, %s70
    %p74 = scmp.eq.s32.totalorder %s13, 0
    %p75 = por %p73, %p74
    %p76 = scmp.ne.s32.totalorder %s68, %s70
    %p77 = scmp.eq.s32.totalorder %s18, 1
    %p78 = por %p76, %p77
    %p79 = scmp.ne.s32.totalorder %s70, %s71
    %p80 = scmp.eq.s32.totalorder %s18, 0
    %p81 = por %p79, %p80
    %p82 = scmp.ne.s32.totalorder %s70, %s71
    %p83 = scmp.eq.s32.totalorder %s19, 1
    %p84 = por %p82, %p83
    %p86 = scmp.ne.s32.totalorder %s71, %s85
    %p87 = scmp.eq.s32.totalorder %s19, 0
    %p88 = por %p86, %p87
    %s90 = sadd.s32 %s89, 1
    %p93 = scmp.eq.s32.totalorder %s13, 1
    %p94 = scmp.ne.s32.totalorder %s89, %s91
    %p95 = scmp.eq.s32.totalorder %s13, 0
    %p96 = por %p94, %p95
    %p97 = scmp.ne.s32.totalorder %s89, %s91
    %p98 = scmp.eq.s32.totalorder %s18, 1
    %p99 = por %p97, %p98
    %p100 = scmp.ne.s32.totalorder %s91, %s92
    %p101 = scmp.eq.s32.totalorder %s18, 0
    %p102 = por %p100, %p101
    %p103 = scmp.ne.s32.totalorder %s91, %s92
    %p104 = scmp.eq.s32.totalorder %s19, 1
    %p105 = por %p103, %p104
    %p107 = scmp.ne.s32.totalorder %s92, %s106
    %p108 = scmp.eq.s32.totalorder %s19, 0
    %p109 = por %p107, %p108
    %s111 = sadd.s32 %s110, 1
    %p114 = scmp.eq.s32.totalorder %s13, 1
    %p115 = scmp.ne.s32.totalorder %s110, %s112
    %p116 = scmp.eq.s32.totalorder %s13, 0
    %p117 = por %p115, %p116
    %p118 = scmp.ne.s32.totalorder %s110, %s112
    %p119 = scmp.eq.s32.totalorder %s18, 1
    %p120 = por %p118, %p119
    %p121 = scmp.ne.s32.totalorder %s112, %s113
    %p122 = scmp.eq.s32.totalorder %s18, 0
    %p123 = por %p121, %p122
    %p124 = scmp.ne.s32.totalorder %s112, %s113
    %p125 = scmp.eq.s32.totalorder %s19, 1
    %p126 = por %p124, %p125
    %p128 = scmp.ne.s32.totalorder %s113, %s127
    %p129 = scmp.eq.s32.totalorder %s19, 0
    %p130 = por %p128, %p129
    %s132 = sadd.s32 %s131, 1
    %p135 = scmp.eq.s32.totalorder %s13, 1
    %p136 = scmp.ne.s32.totalorder %s131, %s133
    %p137 = scmp.eq.s32.totalorder %s13, 0
    %p138 = por %p136, %p137
    %p139 = scmp.ne.s32.totalorder %s131, %s133
    %p140 = scmp.eq.s32.totalorder %s18, 1
    %p141 = por %p139, %p140
    %p142 = scmp.ne.s32.totalorder %s133, %s134
    %p143 = scmp.eq.s32.totalorder %s18, 0
    %p144 = por %p142, %p143
    %p145 = scmp.ne.s32.totalorder %s133, %s134
    %p146 = scmp.eq.s32.totalorder %s19, 1
    %p147 = por %p145, %p146
    %p149 = scmp.ne.s32.totalorder %s134, %s148
    %p150 = scmp.eq.s32.totalorder %s19, 0
    %p151 = por %p149, %p150
    %s153 = sadd.s32 %s152, 1
    %p156 = scmp.eq.s32.totalorder %s13, 1
    %p157 = scmp.ne.s32.totalorder %s152, %s154
    %p158 = scmp.eq.s32.totalorder %s13, 0
    %p159 = por %p157, %p158
    %p160 = scmp.ne.s32.totalorder %s152, %s154
    %p161 = scmp.eq.s32.totalorder %s18, 1
    %p162 = por %p160, %p161
    %p163 = scmp.ne.s32.totalorder %s154, %s155
    %p164 = scmp.eq.s32.totalorder %s18, 0
    %p165 = por %p163, %p164
    %p166 = scmp.ne.s32.totalorder %s154, %s155
    %p167 = scmp.eq.s32.totalorder %s19, 1
    %p168 = por %p166, %p167
    %p170 = scmp.ne.s32.totalorder %s155, %s169
    %p171 = scmp.eq.s32.totalorder %s19, 0
    %p172 = por %p170, %p171
    %s173 = ssub.s32 %s13, %s20
    %p174 = scmp.eq.s32.totalorder %s173, 0
    %s176 = sadd.s32 %s175, 1
    %s177 = scalar_select %p174, %s175, %s176
    %p180 = pneg %p174
    %p181 = scmp.eq.s32.totalorder %s13, 1
    %p182 = por %p180, %p181
    %p183 = scmp.ne.s32.totalorder %s175, %s178
    %p184 = scmp.eq.s32.totalorder %s13, 0
    %p185 = por %p183, %p184
    %p186 = scmp.ne.s32.totalorder %s175, %s178
    %p187 = scmp.eq.s32.totalorder %s18, 1
    %p188 = por %p186, %p187
    %p189 = scmp.ne.s32.totalorder %s178, %s179
    %p190 = scmp.eq.s32.totalorder %s18, 0
    %p191 = por %p189, %p190
    %p192 = scmp.ne.s32.totalorder %s178, %s179
    %p193 = scmp.eq.s32.totalorder %s19, 1
    %p194 = por %p192, %p193
    %p196 = scmp.ne.s32.totalorder %s179, %s195
    %p197 = scmp.eq.s32.totalorder %s19, 0
    %p198 = por %p196, %p197
    %p199 = scmp.le.s32.totalorder 1, %s13
    %p200 = scmp.lt.s32.totalorder %s13, 3
    %p201 = pnand %p199, %p200
    %p202 = pneg %p201
    // Predicated region
    $region9: #{_lambda_.10} parent=5 // pred_check
      _
    $region10: #{_lambda_.10} parent=5 // pred_check_branch
      %204 = sbr.rel (%p201) target = $region12
    $region11: #{_lambda_.10} parent=5 // pred_region
      %s205 = ssub.s32 %s13, 1
      // Predicated region
      $region13: #{_lambda_.10} parent=11 // pred_check
        %p206 = pneg %p60
      $region14: #{_lambda_.10} parent=11 // pred_check_branch
        %208 = sbr.rel (%p206) target = $region16
      $region15: #{_lambda_.10} parent=11 // pred_region
        _
      $region16: #{_lambda_.10} parent=11 // pred_fallthru
        _
      // Predicated region
      $region17: #{_lambda_.10} parent=11 // pred_check
        %p209 = pneg %p81
      $region18: #{_lambda_.10} parent=11 // pred_check_branch
        %211 = sbr.rel (%p209) target = $region20
      $region19: #{_lambda_.10} parent=11 // pred_region
        _
      $region20: #{_lambda_.10} parent=11 // pred_fallthru
        _
      // Predicated region
      $region21: #{_lambda_.10} parent=11 // pred_check
        %p212 = pneg %p102
      $region22: #{_lambda_.10} parent=11 // pred_check_branch
        %214 = sbr.rel (%p212) target = $region24
      $region23: #{_lambda_.10} parent=11 // pred_region
        _
      $region24: #{_lambda_.10} parent=11 // pred_fallthru
        _
      // Predicated region
      $region25: #{_lambda_.10} parent=11 // pred_check
        %p215 = pneg %p123
      $region26: #{_lambda_.10} parent=11 // pred_check_branch
        %217 = sbr.rel (%p215) target = $region28
      $region27: #{_lambda_.10} parent=11 // pred_region
        _
      $region28: #{_lambda_.10} parent=11 // pred_fallthru
        _
      // Predicated region
      $region29: #{_lambda_.10} parent=11 // pred_check
        %p218 = pneg %p144
      $region30: #{_lambda_.10} parent=11 // pred_check_branch
        %220 = sbr.rel (%p218) target = $region32
      $region31: #{_lambda_.10} parent=11 // pred_region
        _
      $region32: #{_lambda_.10} parent=11 // pred_fallthru
        _
      // Predicated region
      $region33: #{_lambda_.10} parent=11 // pred_check
        %p221 = pneg %p165
      $region34: #{_lambda_.10} parent=11 // pred_check_branch
        %223 = sbr.rel (%p221) target = $region36
      $region35: #{_lambda_.10} parent=11 // pred_region
        _
      $region36: #{_lambda_.10} parent=11 // pred_fallthru
        _
    $region12: #{_lambda_.10} parent=5 // pred_fallthru
      _
    %p224 = scmp.lt.s32.totalorder %s13, 2
    // Predicated region
    $region37: #{_lambda_.10} parent=5 // pred_check
      %p225 = pneg %p224
    $region38: #{_lambda_.10} parent=5 // pred_check_branch
      %227 = sbr.rel (%p225) target = $region40
    $region39: #{_lambda_.10} parent=5 // pred_region
      // Predicated region
      $region41: #{_lambda_.10} parent=39 // pred_check
        %p228 = pneg %p33
      $region42: #{_lambda_.10} parent=39 // pred_check_branch
        %230 = sbr.rel (%p228) target = $region44
      $region43: #{_lambda_.10} parent=39 // pred_region
        %s231 = smul.u32 2, %s13
        %p232 = scmp.lt.s32.totalorder %s231, 3
        %s233 = scalar_select %p232, %s231, 3
        %s234 = smul.addr %s233, 8
        %s235 = scalar_lea.vmem %s0, %s234
        %s236 = smul.u32 2, %s13
      $region44: #{_lambda_.10} parent=39 // pred_fallthru
        _
    $region40: #{_lambda_.10} parent=5 // pred_fallthru
      _
    %p237 = scmp.le.s32.totalorder 1, %s13
    %p238 = scmp.lt.s32.totalorder %s13, 3
    %p239 = pnand %p237, %p238
    %p240 = pneg %p239
    // Predicated region
    $region45: #{_lambda_.10} parent=5 // pred_check
      _
    $region46: #{_lambda_.10} parent=5 // pred_check_branch
      %242 = sbr.rel (%p239) target = $region48
    $region47: #{_lambda_.10} parent=5 // pred_region
      %s243 = ssub.s32 %s13, 1
      %s244 = smul.u32 2, %s18
      %p245 = scmp.lt.s32.totalorder %s244, 3
      %s246 = scalar_select %p245, %s244, 3
      %s247 = smul.addr %s246, 8
      %s248 = scalar_lea.vmem %s0, %s247
      %p249 = pneg %p39
      %p250 = pneg %p36
      %p251 = pneg %p60
      %p252 = pneg %p57
      %p253 = pneg %p81
      %p254 = pneg %p78
      %p255 = pneg %p102
      %p256 = pneg %p99
      %p257 = pneg %p123
      %p258 = pneg %p120
      %p259 = pneg %p144
      %p260 = pneg %p141
      %p261 = pneg %p165
      %p262 = pneg %p162
      %p263 = pneg %p191
      %p264 = pneg %p188
      %s265 = smul.u32 2, %s18
      %p266 = scmp.lt.s32.totalorder %s265, 3
      %s267 = scalar_select %p266, %s265, 3
      %s268 = smul.addr %s267, 8
      %s269 = scalar_lea.vmem %s7, %s268
      %s270 = smul.u32 2, %s18
      %p271 = scmp.lt.s32.totalorder %s270, 3
      %s272 = scalar_select %p271, %s270, 3
      %s273 = smul.addr %s272, 8
      %s274 = scalar_lea.vmem %s0, %s273
      %s275 = smul.u32 2, %s18
      %s276 = smul.u32 2, %s18
      %p277 = scmp.lt.s32.totalorder %s276, 3
      %s278 = scalar_select %p277, %s276, 3
      %s279 = smul.addr %s278, 8
      %s280 = scalar_lea.vmem %s7, %s279
      %s281 = smul.u32 2, %s18
      %v282 = vld [vmem:[%s274] sm:$0xff]
      %v283 = vld [vmem:[%s274 + $0x8] sm:$0xff]
      %v284 = vld [vmem:[%s3] sm:$0xff]
      %v285 = vld [vmem:[%s3 + $0x8] sm:$0xff]
      %v286 = vld [vmem:[%s3 + $0x10] sm:$0xff]
      %v287 = vld [vmem:[%s3 + $0x18] sm:$0xff]
      %v288 = vld [vmem:[%s4] sm:$0x1]
      %v290 = vperm.slane %v288, 0
      %vm292 = vcmask 261120
      %v294 = vsel %vm292, %v282, 0
      %v297 = vsel %vm292, %v283, 0
      %299 = vmatpush.msra.mxu0 0.0
      %300 = vmatpush.msra.mxu0 0.0
      %301 = vmatpush.msra.mxu0 0.0
      %302 = vmatpush.msra.mxu0 0.0
      %303 = vmatpush.msra.mxu0 0.0
      %304 = vmatpush.msra.mxu0 0.0
      %305 = vmatpush.msra.mxu0 0.0
      %306 = vmatpush.msra.mxu0 0.0
      %307 = vmatpush.msra.mxu0 0.0
      %308 = vmatpush.msra.mxu0 0.0
      %309 = vmatpush.msra.mxu0 0.0
      %310 = vmatpush.msra.mxu0 0.0
      %311 = vmatpush.msra.mxu0 %v287
      %312 = vmatpush.msra.mxu0 %v286
      %313 = vmatpush.msra.mxu0 %v285
      %314 = vmatpush.msra.mxu0 %v284
      %315 = vmatmul.f32.gmra.mxu0 %v294
      %v316 = vpop.f32.mrf.mxu0
      %v317 = vadd.f32 %v290, %v316
      %318 = vmatmul.f32.gmra.mxu0 %v297
      %v319 = vpop.f32.mrf.mxu0
      %v320 = vadd.f32 %v290, %v319
      %321 = vdwg.mxu0
      %v322 = vmul.f32 %v317, 0.17677669
      %v323 = vmul.f32 %v320, 0.17677669
      %v324 = vld [vmem:[%s1] sm:$0xff]
      %v325 = vld [vmem:[%s1 + $0x8] sm:$0xff]
      %v326 = vld [vmem:[%s1 + $0x10] sm:$0xff]
      %v327 = vld [vmem:[%s1 + $0x18] sm:$0xff]
      %v328 = vld [vmem:[%s1 + $0x20] sm:$0xff]
      %v329 = vld [vmem:[%s1 + $0x28] sm:$0xff]
      %v330 = vld [vmem:[%s1 + $0x30] sm:$0xff]
      %v331 = vld [vmem:[%s1 + $0x38] sm:$0xff]
      %v333 = vsel %vm292, %v322, 0
      %v336 = vsel %vm292, %v323, 0
      %v339 = vsel %vm292, %v324, 0
      %v342 = vsel %vm292, %v325, 0
      %v345 = vsel %vm292, %v326, 0
      %v348 = vsel %vm292, %v327, 0
      %v351 = vsel %vm292, %v328, 0
      %v354 = vsel %vm292, %v329, 0
      %v357 = vsel %vm292, %v330, 0
      %v360 = vsel %vm292, %v331, 0
      %362 = vmatpush.xpose.msra.mxu0 0.0
      %363 = vmatpush.xpose.msra.mxu0 0.0
      %364 = vmatpush.xpose.msra.mxu0 0.0
      %365 = vmatpush.xpose.msra.mxu0 0.0
      %366 = vmatpush.xpose.msra.mxu0 0.0
      %367 = vmatpush.xpose.msra.mxu0 0.0
      %368 = vmatpush.xpose.msra.mxu0 0.0
      %369 = vmatpush.xpose.msra.mxu0 0.0
      %370 = vmatpush.xpose.msra.mxu0 %v360
      %371 = vmatpush.xpose.msra.mxu0 %v357
      %372 = vmatpush.xpose.msra.mxu0 %v354
      %373 = vmatpush.xpose.msra.mxu0 %v351
      %374 = vmatpush.xpose.msra.mxu0 %v348
      %375 = vmatpush.xpose.msra.mxu0 %v345
      %376 = vmatpush.xpose.msra.mxu0 %v342
      %377 = vmatpush.xpose.msra.mxu0 %v339
      %378 = vmatmul.f32.gmra.mxu0 %v333
      %v379 = vpop.f32.mrf.mxu0
      %v380 = vadd.f32 0.0, %v379
      %381 = vmatmul.f32.gmra.mxu0 %v336
      %v382 = vpop.f32.mrf.mxu0
      %v383 = vadd.f32 0.0, %v382
      %384 = vdwg.mxu0
      %vm385 = vcmask 523264
      %v386 = vsel %vm385, %v380, -inf
      %387 = vmax.xlane.f32.xlu0 %v386
      %v388 = vpop.xlane.xlu0 %387
      %v389 = vsel %vm385, %v383, -inf
      %390 = vmax.xlane.f32.xlu0 %v389
      %v391 = vpop.xlane.xlu0 %390
      %v392 = vsub.f32 %v380, %v388
      %v393 = vsub.f32 %v383, %v391
      %v394 = vmul.f32 %v392, 1.442695
      %v395 = vpow.pop %v394
      %v396 = vmul.f32 %v393, 1.442695
      %v397 = vpow.pop %v396
      %v398 = vsel %vm385, %v395, 0.0
      %399 = vadd.xlane.f32.xlu0 %v398
      %v400 = vpop.xlane.xlu0 %399
      %v401 = vsel %vm385, %v397, 0.0
      %402 = vadd.xlane.f32.xlu0 %v401
      %v403 = vpop.xlane.xlu0 %402
      %v404 = vrcp.pop %v400
      %v405 = vmul.f32 %v400, %v404
      %v406 = vsub.f32 1.0, %v405
      %v407 = vmul.f32 %v404, %v406
      %v408 = vadd.f32 %v404, %v407
      %vm409 = vweird.f32 %v400
      %vm410 = vweird.f32 %v404
      %vm411 = vmor %vm409, %vm410
      %v412 = vsel %vm411, %v404, %v408
      %v413 = vand.u32 2147483647, %v400
      %vm414 = vcmp.eq.f32.partialorder %v413, 8.507059e+37
      %v415 = vand.u32 %v400, 2147483648
      %v416 = vor.u32 1.1754944e-38, %v415
      %v417 = vsel %vm414, %v416, %v412
      %v418 = vmul.f32 %v395, %v417
      %v419 = vrcp.pop %v403
      %v420 = vmul.f32 %v403, %v419
      %v421 = vsub.f32 1.0, %v420
      %v422 = vmul.f32 %v419, %v421
      %v423 = vadd.f32 %v419, %v422
      %vm424 = vweird.f32 %v403
      %vm425 = vweird.f32 %v419
      %vm426 = vmor %vm424, %vm425
      %v427 = vsel %vm426, %v419, %v423
      %v428 = vand.u32 2147483647, %v403
      %vm429 = vcmp.eq.f32.partialorder %v428, 8.507059e+37
      %v430 = vand.u32 %v403, 2147483648
      %v431 = vor.u32 1.1754944e-38, %v430
      %v432 = vsel %vm429, %v431, %v427
      %v433 = vmul.f32 %v397, %v432
      %v434 = vld [vmem:[%s2] sm:$0xff]
      %v435 = vld [vmem:[%s2 + $0x8] sm:$0xff]
      %v436 = vld [vmem:[%s2 + $0x10] sm:$0xff]
      %v437 = vld [vmem:[%s2 + $0x18] sm:$0xff]
      %v438 = vld [vmem:[%s2 + $0x20] sm:$0xff]
      %v439 = vld [vmem:[%s2 + $0x28] sm:$0xff]
      %v440 = vld [vmem:[%s2 + $0x30] sm:$0xff]
      %v441 = vld [vmem:[%s2 + $0x38] sm:$0xff]
      %v443 = vsel %vm385, %v418, 0
      %v446 = vsel %vm385, %v433, 0
      %448 = vmatpush.msra.mxu0 0.0
      %449 = vmatpush.msra.mxu0 0.0
      %450 = vmatpush.msra.mxu0 0.0
      %451 = vmatpush.msra.mxu0 0.0
      %452 = vmatpush.msra.mxu0 0.0
      %453 = vmatpush.msra.mxu0 0.0
      %454 = vmatpush.msra.mxu0 0.0
      %455 = vmatpush.msra.mxu0 0.0
      %456 = vmatpush.msra.mxu0 %v441
      %457 = vmatpush.msra.mxu0 %v440
      %458 = vmatpush.msra.mxu0 %v439
      %459 = vmatpush.msra.mxu0 %v438
      %460 = vmatpush.msra.mxu0 %v437
      %461 = vmatpush.msra.mxu0 %v436
      %462 = vmatpush.msra.mxu0 %v435
      %463 = vmatpush.msra.mxu0 %v434
      %464 = vmatmul.f32.gmra.mxu0 %v443
      %v465 = vpop.f32.mrf.mxu0
      %v466 = vadd.f32 0.0, %v465
      %467 = vmatmul.f32.gmra.mxu0 %v446
      %v468 = vpop.f32.mrf.mxu0
      %v469 = vadd.f32 0.0, %v468
      %470 = vdwg.mxu0
      %v471 = vld [vmem:[%s5] sm:$0xff]
      %v472 = vld [vmem:[%s5 + $0x8] sm:$0xff]
      %v473 = vld [vmem:[%s5 + $0x10] sm:$0xff]
      %v474 = vld [vmem:[%s5 + $0x18] sm:$0xff]
      %s475 = scalar_lea.vmem %s3, 32
      %v476 = vld [vmem:[%s475] sm:$0xff]
      %v477 = vld [vmem:[%s475 + $0x8] sm:$0xff]
      %v478 = vld [vmem:[%s475 + $0x10] sm:$0xff]
      %v479 = vld [vmem:[%s475 + $0x18] sm:$0xff]
      %s480 = scalar_lea.vmem %s4, 1
      %v481 = vld [vmem:[%s480] sm:$0x1]
      %v483 = vperm.slane %v481, 0
      %485 = vmatpush.msra.mxu0 0.0
      %486 = vmatpush.msra.mxu0 0.0
      %487 = vmatpush.msra.mxu0 0.0
      %488 = vmatpush.msra.mxu0 0.0
      %489 = vmatpush.msra.mxu0 0.0
      %490 = vmatpush.msra.mxu0 0.0
      %491 = vmatpush.msra.mxu0 0.0
      %492 = vmatpush.msra.mxu0 0.0
      %493 = vmatpush.msra.mxu0 0.0
      %494 = vmatpush.msra.mxu0 0.0
      %495 = vmatpush.msra.mxu0 0.0
      %496 = vmatpush.msra.mxu0 0.0
      %497 = vmatpush.msra.mxu0 %v479
      %498 = vmatpush.msra.mxu0 %v478
      %499 = vmatpush.msra.mxu0 %v477
      %500 = vmatpush.msra.mxu0 %v476
      %501 = vmatmul.f32.gmra.mxu0 %v294
      %v502 = vpop.f32.mrf.mxu0
      %v503 = vadd.f32 %v483, %v502
      %504 = vmatmul.f32.gmra.mxu0 %v297
      %v505 = vpop.f32.mrf.mxu0
      %v506 = vadd.f32 %v483, %v505
      %507 = vdwg.mxu0
      %v508 = vmul.f32 %v503, 0.17677669
      %v509 = vmul.f32 %v506, 0.17677669
      %s510 = scalar_lea.vmem %s1, 64
      %v511 = vld [vmem:[%s510] sm:$0xff]
      %v512 = vld [vmem:[%s510 + $0x8] sm:$0xff]
      %v513 = vld [vmem:[%s510 + $0x10] sm:$0xff]
      %v514 = vld [vmem:[%s510 + $0x18] sm:$0xff]
      %v515 = vld [vmem:[%s510 + $0x20] sm:$0xff]
      %v516 = vld [vmem:[%s510 + $0x28] sm:$0xff]
      %v517 = vld [vmem:[%s510 + $0x30] sm:$0xff]
      %v518 = vld [vmem:[%s510 + $0x38] sm:$0xff]
      %v520 = vsel %vm292, %v508, 0
      %v523 = vsel %vm292, %v509, 0
      %v526 = vsel %vm292, %v511, 0
      %v529 = vsel %vm292, %v512, 0
      %v532 = vsel %vm292, %v513, 0
      %v535 = vsel %vm292, %v514, 0
      %v538 = vsel %vm292, %v515, 0
      %v541 = vsel %vm292, %v516, 0
      %v544 = vsel %vm292, %v517, 0
      %v547 = vsel %vm292, %v518, 0
      %549 = vmatpush.xpose.msra.mxu0 0.0
      %550 = vmatpush.xpose.msra.mxu0 0.0
      %551 = vmatpush.xpose.msra.mxu0 0.0
      %552 = vmatpush.xpose.msra.mxu0 0.0
      %553 = vmatpush.xpose.msra.mxu0 0.0
      %554 = vmatpush.xpose.msra.mxu0 0.0
      %555 = vmatpush.xpose.msra.mxu0 0.0
      %556 = vmatpush.xpose.msra.mxu0 0.0
      %557 = vmatpush.xpose.msra.mxu0 %v547
      %558 = vmatpush.xpose.msra.mxu0 %v544
      %559 = vmatpush.xpose.msra.mxu0 %v541
      %560 = vmatpush.xpose.msra.mxu0 %v538
      %561 = vmatpush.xpose.msra.mxu0 %v535
      %562 = vmatpush.xpose.msra.mxu0 %v532
      %563 = vmatpush.xpose.msra.mxu0 %v529
      %564 = vmatpush.xpose.msra.mxu0 %v526
      %565 = vmatmul.f32.gmra.mxu0 %v520
      %v566 = vpop.f32.mrf.mxu0
      %v567 = vadd.f32 0.0, %v566
      %568 = vmatmul.f32.gmra.mxu0 %v523
      %v569 = vpop.f32.mrf.mxu0
      %v570 = vadd.f32 0.0, %v569
      %571 = vdwg.mxu0
      %v572 = vsel %vm385, %v567, -inf
      %573 = vmax.xlane.f32.xlu0 %v572
      %v574 = vpop.xlane.xlu0 %573
      %v575 = vsel %vm385, %v570, -inf
      %576 = vmax.xlane.f32.xlu0 %v575
      %v577 = vpop.xlane.xlu0 %576
      %v578 = vsub.f32 %v567, %v574
      %v579 = vsub.f32 %v570, %v577
      %v580 = vmul.f32 %v578, 1.442695
      %v581 = vpow.pop %v580
      %v582 = vmul.f32 %v579, 1.442695
      %v583 = vpow.pop %v582
      %v584 = vsel %vm385, %v581, 0.0
      %585 = vadd.xlane.f32.xlu0 %v584
      %v586 = vpop.xlane.xlu0 %585
      %v587 = vsel %vm385, %v583, 0.0
      %588 = vadd.xlane.f32.xlu0 %v587
      %v589 = vpop.xlane.xlu0 %588
      %v590 = vrcp.pop %v586
      %v591 = vmul.f32 %v586, %v590
      %v592 = vsub.f32 1.0, %v591
      %v593 = vmul.f32 %v590, %v592
      %v594 = vadd.f32 %v590, %v593
      %vm595 = vweird.f32 %v586
      %vm596 = vweird.f32 %v590
      %vm597 = vmor %vm595, %vm596
      %v598 = vsel %vm597, %v590, %v594
      %v599 = vand.u32 2147483647, %v586
      %vm600 = vcmp.eq.f32.partialorder %v599, 8.507059e+37
      %v601 = vand.u32 %v586, 2147483648
      %v602 = vor.u32 1.1754944e-38, %v601
      %v603 = vsel %vm600, %v602, %v598
      %v604 = vmul.f32 %v581, %v603
      %v605 = vrcp.pop %v589
      %v606 = vmul.f32 %v589, %v605
      %v607 = vsub.f32 1.0, %v606
      %v608 = vmul.f32 %v605, %v607
      %v609 = vadd.f32 %v605, %v608
      %vm610 = vweird.f32 %v589
      %vm611 = vweird.f32 %v605
      %vm612 = vmor %vm610, %vm611
      %v613 = vsel %vm612, %v605, %v609
      %v614 = vand.u32 2147483647, %v589
      %vm615 = vcmp.eq.f32.partialorder %v614, 8.507059e+37
      %v616 = vand.u32 %v589, 2147483648
      %v617 = vor.u32 1.1754944e-38, %v616
      %v618 = vsel %vm615, %v617, %v613
      %v619 = vmul.f32 %v583, %v618
      %s620 = scalar_lea.vmem %s2, 64
      %v621 = vld [vmem:[%s620] sm:$0xff]
      %v622 = vld [vmem:[%s620 + $0x8] sm:$0xff]
      %v623 = vld [vmem:[%s620 + $0x10] sm:$0xff]
      %v624 = vld [vmem:[%s620 + $0x18] sm:$0xff]
      %v625 = vld [vmem:[%s620 + $0x20] sm:$0xff]
      %v626 = vld [vmem:[%s620 + $0x28] sm:$0xff]
      %v627 = vld [vmem:[%s620 + $0x30] sm:$0xff]
      %v628 = vld [vmem:[%s620 + $0x38] sm:$0xff]
      %v630 = vsel %vm385, %v604, 0
      %v633 = vsel %vm385, %v619, 0
      %635 = vmatpush.msra.mxu0 0.0
      %636 = vmatpush.msra.mxu0 0.0
      %637 = vmatpush.msra.mxu0 0.0
      %638 = vmatpush.msra.mxu0 0.0
      %639 = vmatpush.msra.mxu0 0.0
      %640 = vmatpush.msra.mxu0 0.0
      %641 = vmatpush.msra.mxu0 0.0
      %642 = vmatpush.msra.mxu0 0.0
      %643 = vmatpush.msra.mxu0 %v628
      %644 = vmatpush.msra.mxu0 %v627
      %645 = vmatpush.msra.mxu0 %v626
      %646 = vmatpush.msra.mxu0 %v625
      %647 = vmatpush.msra.mxu0 %v624
      %648 = vmatpush.msra.mxu0 %v623
      %649 = vmatpush.msra.mxu0 %v622
      %650 = vmatpush.msra.mxu0 %v621
      %651 = vmatmul.f32.gmra.mxu0 %v630
      %v652 = vpop.f32.mrf.mxu0
      %v653 = vadd.f32 0.0, %v652
      %654 = vmatmul.f32.gmra.mxu0 %v633
      %v655 = vpop.f32.mrf.mxu0
      %v656 = vadd.f32 0.0, %v655
      %657 = vdwg.mxu0
      %s658 = scalar_lea.vmem %s5, 32
      %v659 = vld [vmem:[%s658] sm:$0xff]
      %v660 = vld [vmem:[%s658 + $0x8] sm:$0xff]
      %v661 = vld [vmem:[%s658 + $0x10] sm:$0xff]
      %v662 = vld [vmem:[%s658 + $0x18] sm:$0xff]
      %v664 = vsel %vm292, %v653, 0
      %v667 = vsel %vm292, %v656, 0
      %669 = vmatpush.msra.mxu0 0.0
      %670 = vmatpush.msra.mxu0 0.0
      %671 = vmatpush.msra.mxu0 0.0
      %672 = vmatpush.msra.mxu0 0.0
      %673 = vmatpush.msra.mxu0 0.0
      %674 = vmatpush.msra.mxu0 0.0
      %675 = vmatpush.msra.mxu0 0.0
      %676 = vmatpush.msra.mxu0 0.0
      %677 = vmatpush.msra.mxu0 0.0
      %678 = vmatpush.msra.mxu0 0.0
      %679 = vmatpush.msra.mxu0 0.0
      %680 = vmatpush.msra.mxu0 0.0
      %681 = vmatpush.msra.mxu0 %v662
      %682 = vmatpush.msra.mxu0 %v661
      %683 = vmatpush.msra.mxu0 %v660
      %684 = vmatpush.msra.mxu0 %v659
      %685 = vmatmul.f32.gmra.mxu0 %v664
      %v686 = vpop.f32.mrf.mxu0
      %v687 = vadd.f32 0.0, %v686
      %688 = vmatmul.f32.gmra.mxu0 %v667
      %v689 = vpop.f32.mrf.mxu0
      %v690 = vadd.f32 0.0, %v689
      %691 = vdwg.mxu0
      %v693 = vsel %vm292, %v466, 0
      %v696 = vsel %vm292, %v469, 0
      %698 = vmatpush.msra.mxu0 0.0
      %699 = vmatpush.msra.mxu0 0.0
      %700 = vmatpush.msra.mxu0 0.0
      %701 = vmatpush.msra.mxu0 0.0
      %702 = vmatpush.msra.mxu0 0.0
      %703 = vmatpush.msra.mxu0 0.0
      %704 = vmatpush.msra.mxu0 0.0
      %705 = vmatpush.msra.mxu0 0.0
      %706 = vmatpush.msra.mxu0 0.0
      %707 = vmatpush.msra.mxu0 0.0
      %708 = vmatpush.msra.mxu0 0.0
      %709 = vmatpush.msra.mxu0 0.0
      %710 = vmatpush.msra.mxu0 %v474
      %711 = vmatpush.msra.mxu0 %v473
      %712 = vmatpush.msra.mxu0 %v472
      %713 = vmatpush.msra.mxu0 %v471
      %714 = vmatmul.f32.gmra.mxu0 %v693
      %v715 = vpop.f32.mrf.mxu0
      %v716 = vadd.f32 %v687, %v715
      %717 = vmatmul.f32.gmra.mxu0 %v696
      %v718 = vpop.f32.mrf.mxu0
      %v719 = vadd.f32 %v690, %v718
      %720 = vdwg.mxu0
      %s721 = scalar_lea.vmem %s3, 64
      %v722 = vld [vmem:[%s721] sm:$0xff]
      %v723 = vld [vmem:[%s721 + $0x8] sm:$0xff]
      %v724 = vld [vmem:[%s721 + $0x10] sm:$0xff]
      %v725 = vld [vmem:[%s721 + $0x18] sm:$0xff]
      %s726 = scalar_lea.vmem %s4, 2
      %v727 = vld [vmem:[%s726] sm:$0x1]
      %v729 = vperm.slane %v727, 0
      %731 = vmatpush.msra.mxu0 0.0
      %732 = vmatpush.msra.mxu0 0.0
      %733 = vmatpush.msra.mxu0 0.0
      %734 = vmatpush.msra.mxu0 0.0
      %735 = vmatpush.msra.mxu0 0.0
      %736 = vmatpush.msra.mxu0 0.0
      %737 = vmatpush.msra.mxu0 0.0
      %738 = vmatpush.msra.mxu0 0.0
      %739 = vmatpush.msra.mxu0 0.0
      %740 = vmatpush.msra.mxu0 0.0
      %741 = vmatpush.msra.mxu0 0.0
      %742 = vmatpush.msra.mxu0 0.0
      %743 = vmatpush.msra.mxu0 %v725
      %744 = vmatpush.msra.mxu0 %v724
      %745 = vmatpush.msra.mxu0 %v723
      %746 = vmatpush.msra.mxu0 %v722
      %747 = vmatmul.f32.gmra.mxu0 %v294
      %v748 = vpop.f32.mrf.mxu0
      %v749 = vadd.f32 %v729, %v748
      %750 = vmatmul.f32.gmra.mxu0 %v297
      %v751 = vpop.f32.mrf.mxu0
      %v752 = vadd.f32 %v729, %v751
      %753 = vdwg.mxu0
      %v754 = vmul.f32 %v749, 0.17677669
      %v755 = vmul.f32 %v752, 0.17677669
      %s756 = scalar_lea.vmem %s1, 128
      %v757 = vld [vmem:[%s756] sm:$0xff]
      %v758 = vld [vmem:[%s756 + $0x8] sm:$0xff]
      %v759 = vld [vmem:[%s756 + $0x10] sm:$0xff]
      %v760 = vld [vmem:[%s756 + $0x18] sm:$0xff]
      %v761 = vld [vmem:[%s756 + $0x20] sm:$0xff]
      %v762 = vld [vmem:[%s756 + $0x28] sm:$0xff]
      %v763 = vld [vmem:[%s756 + $0x30] sm:$0xff]
      %v764 = vld [vmem:[%s756 + $0x38] sm:$0xff]
      %v766 = vsel %vm292, %v754, 0
      %v769 = vsel %vm292, %v755, 0
      %v772 = vsel %vm292, %v757, 0
      %v775 = vsel %vm292, %v758, 0
      %v778 = vsel %vm292, %v759, 0
      %v781 = vsel %vm292, %v760, 0
      %v784 = vsel %vm292, %v761, 0
      %v787 = vsel %vm292, %v762, 0
      %v790 = vsel %vm292, %v763, 0
      %v793 = vsel %vm292, %v764, 0
      %795 = vmatpush.xpose.msra.mxu0 0.0
      %796 = vmatpush.xpose.msra.mxu0 0.0
      %797 = vmatpush.xpose.msra.mxu0 0.0
      %798 = vmatpush.xpose.msra.mxu0 0.0
      %799 = vmatpush.xpose.msra.mxu0 0.0
      %800 = vmatpush.xpose.msra.mxu0 0.0
      %801 = vmatpush.xpose.msra.mxu0 0.0
      %802 = vmatpush.xpose.msra.mxu0 0.0
      %803 = vmatpush.xpose.msra.mxu0 %v793
      %804 = vmatpush.xpose.msra.mxu0 %v790
      %805 = vmatpush.xpose.msra.mxu0 %v787
      %806 = vmatpush.xpose.msra.mxu0 %v784
      %807 = vmatpush.xpose.msra.mxu0 %v781
      %808 = vmatpush.xpose.msra.mxu0 %v778
      %809 = vmatpush.xpose.msra.mxu0 %v775
      %810 = vmatpush.xpose.msra.mxu0 %v772
      %811 = vmatmul.f32.gmra.mxu0 %v766
      %v812 = vpop.f32.mrf.mxu0
      %v813 = vadd.f32 0.0, %v812
      %814 = vmatmul.f32.gmra.mxu0 %v769
      %v815 = vpop.f32.mrf.mxu0
      %v816 = vadd.f32 0.0, %v815
      %817 = vdwg.mxu0
      %v818 = vsel %vm385, %v813, -inf
      %819 = vmax.xlane.f32.xlu0 %v818
      %v820 = vpop.xlane.xlu0 %819
      %v821 = vsel %vm385, %v816, -inf
      %822 = vmax.xlane.f32.xlu0 %v821
      %v823 = vpop.xlane.xlu0 %822
      %v824 = vsub.f32 %v813, %v820
      %v825 = vsub.f32 %v816, %v823
      %v826 = vmul.f32 %v824, 1.442695
      %v827 = vpow.pop %v826
      %v828 = vmul.f32 %v825, 1.442695
      %v829 = vpow.pop %v828
      %v830 = vsel %vm385, %v827, 0.0
      %831 = vadd.xlane.f32.xlu0 %v830
      %v832 = vpop.xlane.xlu0 %831
      %v833 = vsel %vm385, %v829, 0.0
      %834 = vadd.xlane.f32.xlu0 %v833
      %v835 = vpop.xlane.xlu0 %834
      %v836 = vrcp.pop %v832
      %v837 = vmul.f32 %v832, %v836
      %v838 = vsub.f32 1.0, %v837
      %v839 = vmul.f32 %v836, %v838
      %v840 = vadd.f32 %v836, %v839
      %vm841 = vweird.f32 %v832
      %vm842 = vweird.f32 %v836
      %vm843 = vmor %vm841, %vm842
      %v844 = vsel %vm843, %v836, %v840
      %v845 = vand.u32 2147483647, %v832
      %vm846 = vcmp.eq.f32.partialorder %v845, 8.507059e+37
      %v847 = vand.u32 %v832, 2147483648
      %v848 = vor.u32 1.1754944e-38, %v847
      %v849 = vsel %vm846, %v848, %v844
      %v850 = vmul.f32 %v827, %v849
      %v851 = vrcp.pop %v835
      %v852 = vmul.f32 %v835, %v851
      %v853 = vsub.f32 1.0, %v852
      %v854 = vmul.f32 %v851, %v853
      %v855 = vadd.f32 %v851, %v854
      %vm856 = vweird.f32 %v835
      %vm857 = vweird.f32 %v851
      %vm858 = vmor %vm856, %vm857
      %v859 = vsel %vm858, %v851, %v855
      %v860 = vand.u32 2147483647, %v835
      %vm861 = vcmp.eq.f32.partialorder %v860, 8.507059e+37
      %v862 = vand.u32 %v835, 2147483648
      %v863 = vor.u32 1.1754944e-38, %v862
      %v864 = vsel %vm861, %v863, %v859
      %v865 = vmul.f32 %v829, %v864
      %s866 = scalar_lea.vmem %s2, 128
      %v867 = vld [vmem:[%s866] sm:$0xff]
      %v868 = vld [vmem:[%s866 + $0x8] sm:$0xff]
      %v869 = vld [vmem:[%s866 + $0x10] sm:$0xff]
      %v870 = vld [vmem:[%s866 + $0x18] sm:$0xff]
      %v871 = vld [vmem:[%s866 + $0x20] sm:$0xff]
      %v872 = vld [vmem:[%s866 + $0x28] sm:$0xff]
      %v873 = vld [vmem:[%s866 + $0x30] sm:$0xff]
      %v874 = vld [vmem:[%s866 + $0x38] sm:$0xff]
      %v876 = vsel %vm385, %v850, 0
      %v879 = vsel %vm385, %v865, 0
      %881 = vmatpush.msra.mxu0 0.0
      %882 = vmatpush.msra.mxu0 0.0
      %883 = vmatpush.msra.mxu0 0.0
      %884 = vmatpush.msra.mxu0 0.0
      %885 = vmatpush.msra.mxu0 0.0
      %886 = vmatpush.msra.mxu0 0.0
      %887 = vmatpush.msra.mxu0 0.0
      %888 = vmatpush.msra.mxu0 0.0
      %889 = vmatpush.msra.mxu0 %v874
      %890 = vmatpush.msra.mxu0 %v873
      %891 = vmatpush.msra.mxu0 %v872
      %892 = vmatpush.msra.mxu0 %v871
      %893 = vmatpush.msra.mxu0 %v870
      %894 = vmatpush.msra.mxu0 %v869
      %895 = vmatpush.msra.mxu0 %v868
      %896 = vmatpush.msra.mxu0 %v867
      %897 = vmatmul.f32.gmra.mxu0 %v876
      %v898 = vpop.f32.mrf.mxu0
      %v899 = vadd.f32 0.0, %v898
      %900 = vmatmul.f32.gmra.mxu0 %v879
      %v901 = vpop.f32.mrf.mxu0
      %v902 = vadd.f32 0.0, %v901
      %903 = vdwg.mxu0
      %s904 = scalar_lea.vmem %s5, 64
      %v905 = vld [vmem:[%s904] sm:$0xff]
      %v906 = vld [vmem:[%s904 + $0x8] sm:$0xff]
      %v907 = vld [vmem:[%s904 + $0x10] sm:$0xff]
      %v908 = vld [vmem:[%s904 + $0x18] sm:$0xff]
      %v910 = vsel %vm292, %v899, 0
      %v913 = vsel %vm292, %v902, 0
      %915 = vmatpush.msra.mxu0 0.0
      %916 = vmatpush.msra.mxu0 0.0
      %917 = vmatpush.msra.mxu0 0.0
      %918 = vmatpush.msra.mxu0 0.0
      %919 = vmatpush.msra.mxu0 0.0
      %920 = vmatpush.msra.mxu0 0.0
      %921 = vmatpush.msra.mxu0 0.0
      %922 = vmatpush.msra.mxu0 0.0
      %923 = vmatpush.msra.mxu0 0.0
      %924 = vmatpush.msra.mxu0 0.0
      %925 = vmatpush.msra.mxu0 0.0
      %926 = vmatpush.msra.mxu0 0.0
      %927 = vmatpush.msra.mxu0 %v908
      %928 = vmatpush.msra.mxu0 %v907
      %929 = vmatpush.msra.mxu0 %v906
      %930 = vmatpush.msra.mxu0 %v905
      %931 = vmatmul.f32.gmra.mxu0 %v910
      %v932 = vpop.f32.mrf.mxu0
      %v933 = vadd.f32 0.0, %v932
      %934 = vmatmul.f32.gmra.mxu0 %v913
      %v935 = vpop.f32.mrf.mxu0
      %v936 = vadd.f32 0.0, %v935
      %937 = vdwg.mxu0
      %v938 = vadd.f32 %v716, %v933
      %v939 = vadd.f32 %v719, %v936
      %s940 = scalar_lea.vmem %s3, 96
      %v941 = vld [vmem:[%s940] sm:$0xff]
      %v942 = vld [vmem:[%s940 + $0x8] sm:$0xff]
      %v943 = vld [vmem:[%s940 + $0x10] sm:$0xff]
      %v944 = vld [vmem:[%s940 + $0x18] sm:$0xff]
      %s945 = scalar_lea.vmem %s4, 3
      %v946 = vld [vmem:[%s945] sm:$0x1]
      %v948 = vperm.slane %v946, 0
      %950 = vmatpush.msra.mxu0 0.0
      %951 = vmatpush.msra.mxu0 0.0
      %952 = vmatpush.msra.mxu0 0.0
      %953 = vmatpush.msra.mxu0 0.0
      %954 = vmatpush.msra.mxu0 0.0
      %955 = vmatpush.msra.mxu0 0.0
      %956 = vmatpush.msra.mxu0 0.0
      %957 = vmatpush.msra.mxu0 0.0
      %958 = vmatpush.msra.mxu0 0.0
      %959 = vmatpush.msra.mxu0 0.0
      %960 = vmatpush.msra.mxu0 0.0
      %961 = vmatpush.msra.mxu0 0.0
      %962 = vmatpush.msra.mxu0 %v944
      %963 = vmatpush.msra.mxu0 %v943
      %964 = vmatpush.msra.mxu0 %v942
      %965 = vmatpush.msra.mxu0 %v941
      %966 = vmatmul.f32.gmra.mxu0 %v294
      %v967 = vpop.f32.mrf.mxu0
      %v968 = vadd.f32 %v948, %v967
      %969 = vmatmul.f32.gmra.mxu0 %v297
      %v970 = vpop.f32.mrf.mxu0
      %v971 = vadd.f32 %v948, %v970
      %972 = vdwg.mxu0
      %v973 = vmul.f32 %v968, 0.17677669
      %v974 = vmul.f32 %v971, 0.17677669
      %s975 = scalar_lea.vmem %s1, 192
      %v976 = vld [vmem:[%s975] sm:$0xff]
      %v977 = vld [vmem:[%s975 + $0x8] sm:$0xff]
      %v978 = vld [vmem:[%s975 + $0x10] sm:$0xff]
      %v979 = vld [vmem:[%s975 + $0x18] sm:$0xff]
      %v980 = vld [vmem:[%s975 + $0x20] sm:$0xff]
      %v981 = vld [vmem:[%s975 + $0x28] sm:$0xff]
      %v982 = vld [vmem:[%s975 + $0x30] sm:$0xff]
      %v983 = vld [vmem:[%s975 + $0x38] sm:$0xff]
      %v985 = vsel %vm292, %v973, 0
      %v988 = vsel %vm292, %v974, 0
      %v991 = vsel %vm292, %v976, 0
      %v994 = vsel %vm292, %v977, 0
      %v997 = vsel %vm292, %v978, 0
      %v1000 = vsel %vm292, %v979, 0
      %v1003 = vsel %vm292, %v980, 0
      %v1006 = vsel %vm292, %v981, 0
      %v1009 = vsel %vm292, %v982, 0
      %v1012 = vsel %vm292, %v983, 0
      %1014 = vmatpush.xpose.msra.mxu0 0.0
      %1015 = vmatpush.xpose.msra.mxu0 0.0
      %1016 = vmatpush.xpose.msra.mxu0 0.0
      %1017 = vmatpush.xpose.msra.mxu0 0.0
      %1018 = vmatpush.xpose.msra.mxu0 0.0
      %1019 = vmatpush.xpose.msra.mxu0 0.0
      %1020 = vmatpush.xpose.msra.mxu0 0.0
      %1021 = vmatpush.xpose.msra.mxu0 0.0
      %1022 = vmatpush.xpose.msra.mxu0 %v1012
      %1023 = vmatpush.xpose.msra.mxu0 %v1009
      %1024 = vmatpush.xpose.msra.mxu0 %v1006
      %1025 = vmatpush.xpose.msra.mxu0 %v1003
      %1026 = vmatpush.xpose.msra.mxu0 %v1000
      %1027 = vmatpush.xpose.msra.mxu0 %v997
      %1028 = vmatpush.xpose.msra.mxu0 %v994
      %1029 = vmatpush.xpose.msra.mxu0 %v991
      %1030 = vmatmul.f32.gmra.mxu0 %v985
      %v1031 = vpop.f32.mrf.mxu0
      %v1032 = vadd.f32 0.0, %v1031
      %1033 = vmatmul.f32.gmra.mxu0 %v988
      %v1034 = vpop.f32.mrf.mxu0
      %v1035 = vadd.f32 0.0, %v1034
      %1036 = vdwg.mxu0
      %v1037 = vsel %vm385, %v1032, -inf
      %1038 = vmax.xlane.f32.xlu0 %v1037
      %v1039 = vpop.xlane.xlu0 %1038
      %v1040 = vsel %vm385, %v1035, -inf
      %1041 = vmax.xlane.f32.xlu0 %v1040
      %v1042 = vpop.xlane.xlu0 %1041
      %v1043 = vsub.f32 %v1032, %v1039
      %v1044 = vsub.f32 %v1035, %v1042
      %v1045 = vmul.f32 %v1043, 1.442695
      %v1046 = vpow.pop %v1045
      %v1047 = vmul.f32 %v1044, 1.442695
      %v1048 = vpow.pop %v1047
      %v1049 = vsel %vm385, %v1046, 0.0
      %1050 = vadd.xlane.f32.xlu0 %v1049
      %v1051 = vpop.xlane.xlu0 %1050
      %v1052 = vsel %vm385, %v1048, 0.0
      %1053 = vadd.xlane.f32.xlu0 %v1052
      %v1054 = vpop.xlane.xlu0 %1053
      %v1055 = vrcp.pop %v1051
      %v1056 = vmul.f32 %v1051, %v1055
      %v1057 = vsub.f32 1.0, %v1056
      %v1058 = vmul.f32 %v1055, %v1057
      %v1059 = vadd.f32 %v1055, %v1058
      %vm1060 = vweird.f32 %v1051
      %vm1061 = vweird.f32 %v1055
      %vm1062 = vmor %vm1060, %vm1061
      %v1063 = vsel %vm1062, %v1055, %v1059
      %v1064 = vand.u32 2147483647, %v1051
      %vm1065 = vcmp.eq.f32.partialorder %v1064, 8.507059e+37
      %v1066 = vand.u32 %v1051, 2147483648
      %v1067 = vor.u32 1.1754944e-38, %v1066
      %v1068 = vsel %vm1065, %v1067, %v1063
      %v1069 = vmul.f32 %v1046, %v1068
      %v1070 = vrcp.pop %v1054
      %v1071 = vmul.f32 %v1054, %v1070
      %v1072 = vsub.f32 1.0, %v1071
      %v1073 = vmul.f32 %v1070, %v1072
      %v1074 = vadd.f32 %v1070, %v1073
      %vm1075 = vweird.f32 %v1054
      %vm1076 = vweird.f32 %v1070
      %vm1077 = vmor %vm1075, %vm1076
      %v1078 = vsel %vm1077, %v1070, %v1074
      %v1079 = vand.u32 2147483647, %v1054
      %vm1080 = vcmp.eq.f32.partialorder %v1079, 8.507059e+37
      %v1081 = vand.u32 %v1054, 2147483648
      %v1082 = vor.u32 1.1754944e-38, %v1081
      %v1083 = vsel %vm1080, %v1082, %v1078
      %v1084 = vmul.f32 %v1048, %v1083
      %s1085 = scalar_lea.vmem %s2, 192
      %v1086 = vld [vmem:[%s1085] sm:$0xff]
      %v1087 = vld [vmem:[%s1085 + $0x8] sm:$0xff]
      %v1088 = vld [vmem:[%s1085 + $0x10] sm:$0xff]
      %v1089 = vld [vmem:[%s1085 + $0x18] sm:$0xff]
      %v1090 = vld [vmem:[%s1085 + $0x20] sm:$0xff]
      %v1091 = vld [vmem:[%s1085 + $0x28] sm:$0xff]
      %v1092 = vld [vmem:[%s1085 + $0x30] sm:$0xff]
      %v1093 = vld [vmem:[%s1085 + $0x38] sm:$0xff]
      %v1095 = vsel %vm385, %v1069, 0
      %v1098 = vsel %vm385, %v1084, 0
      %1100 = vmatpush.msra.mxu0 0.0
      %1101 = vmatpush.msra.mxu0 0.0
      %1102 = vmatpush.msra.mxu0 0.0
      %1103 = vmatpush.msra.mxu0 0.0
      %1104 = vmatpush.msra.mxu0 0.0
      %1105 = vmatpush.msra.mxu0 0.0
      %1106 = vmatpush.msra.mxu0 0.0
      %1107 = vmatpush.msra.mxu0 0.0
      %1108 = vmatpush.msra.mxu0 %v1093
      %1109 = vmatpush.msra.mxu0 %v1092
      %1110 = vmatpush.msra.mxu0 %v1091
      %1111 = vmatpush.msra.mxu0 %v1090
      %1112 = vmatpush.msra.mxu0 %v1089
      %1113 = vmatpush.msra.mxu0 %v1088
      %1114 = vmatpush.msra.mxu0 %v1087
      %1115 = vmatpush.msra.mxu0 %v1086
      %1116 = vmatmul.f32.gmra.mxu0 %v1095
      %v1117 = vpop.f32.mrf.mxu0
      %v1118 = vadd.f32 0.0, %v1117
      %1119 = vmatmul.f32.gmra.mxu0 %v1098
      %v1120 = vpop.f32.mrf.mxu0
      %v1121 = vadd.f32 0.0, %v1120
      %1122 = vdwg.mxu0
      %s1123 = scalar_lea.vmem %s5, 96
      %v1124 = vld [vmem:[%s1123] sm:$0xff]
      %v1125 = vld [vmem:[%s1123 + $0x8] sm:$0xff]
      %v1126 = vld [vmem:[%s1123 + $0x10] sm:$0xff]
      %v1127 = vld [vmem:[%s1123 + $0x18] sm:$0xff]
      %v1129 = vsel %vm292, %v1118, 0
      %v1132 = vsel %vm292, %v1121, 0
      %1134 = vmatpush.msra.mxu0 0.0
      %1135 = vmatpush.msra.mxu0 0.0
      %1136 = vmatpush.msra.mxu0 0.0
      %1137 = vmatpush.msra.mxu0 0.0
      %1138 = vmatpush.msra.mxu0 0.0
      %1139 = vmatpush.msra.mxu0 0.0
      %1140 = vmatpush.msra.mxu0 0.0
      %1141 = vmatpush.msra.mxu0 0.0
      %1142 = vmatpush.msra.mxu0 0.0
      %1143 = vmatpush.msra.mxu0 0.0
      %1144 = vmatpush.msra.mxu0 0.0
      %1145 = vmatpush.msra.mxu0 0.0
      %1146 = vmatpush.msra.mxu0 %v1127
      %1147 = vmatpush.msra.mxu0 %v1126
      %1148 = vmatpush.msra.mxu0 %v1125
      %1149 = vmatpush.msra.mxu0 %v1124
      %1150 = vmatmul.f32.gmra.mxu0 %v1129
      %v1151 = vpop.f32.mrf.mxu0
      %v1152 = vadd.f32 0.0, %v1151
      %1153 = vmatmul.f32.gmra.mxu0 %v1132
      %v1154 = vpop.f32.mrf.mxu0
      %v1155 = vadd.f32 0.0, %v1154
      %1156 = vdwg.mxu0
      %v1157 = vadd.f32 %v938, %v1152
      %v1158 = vadd.f32 %v939, %v1155
      %v1159 = vld [vmem:[%s6] sm:$0x1]
      %v1161 = vperm.slane %v1159, 0
      %v1163 = vadd.f32 %v1157, %v1161
      %v1164 = vadd.f32 %v1158, %v1161
      %1165 = vst.msk [vmem:[%s280] sm:$0xff] %vm385, %v1163
      %1166 = vst.msk [vmem:[%s280 + $0x8] sm:$0xff] %vm385, %v1164
      %s1167 = smul.u32 2, %s18
      %p1168 = scmp.lt.s32.totalorder %s1167, 3
      %s1169 = scalar_select %p1168, %s1167, 3
      %s1170 = smul.addr %s1169, 8
      %s1171 = scalar_lea.vmem %s7, %s1170
      // Predicated region
      $region49: #{_lambda_.10} parent=47 // pred_check
        %p1172 = pneg %p188
      $region50: #{_lambda_.10} parent=47 // pred_check_branch
        %1174 = sbr.rel (%p1172) target = $region52
      $region51: #{_lambda_.10} parent=47 // pred_region
        %s1175 = smul.u32 2, %s18
      $region52: #{_lambda_.10} parent=47 // pred_fallthru
        _
    $region48: #{_lambda_.10} parent=5 // pred_fallthru
      _
    %p1176 = scmp.le.s32.totalorder 2, %s13
    // Predicated region
    $region53: #{_lambda_.10} parent=5 // pred_check
      %p1177 = pneg %p1176
    $region54: #{_lambda_.10} parent=5 // pred_check_branch
      %1179 = sbr.rel (%p1177) target = $region56
    $region55: #{_lambda_.10} parent=5 // pred_region
      %s1180 = ssub.s32 %s13, 2
      // Predicated region
      $region57: #{_lambda_.10} parent=55 // pred_check
        %p1181 = pneg %p194
      $region58: #{_lambda_.10} parent=55 // pred_check_branch
        %1183 = sbr.rel (%p1181) target = $region60
      $region59: #{_lambda_.10} parent=55 // pred_region
        %s1184 = smul.u32 2, %s19
        %p1185 = scmp.lt.s32.totalorder %s1184, 3
        %s1186 = scalar_select %p1185, %s1184, 3
        %s1187 = smul.addr %s1186, 8
        %s1188 = scalar_lea.vmem %s7, %s1187
      $region60: #{_lambda_.10} parent=55 // pred_fallthru
        _
    $region56: #{_lambda_.10} parent=5 // pred_fallthru
      _
  $region6: #{_lambda_.10} parent=0 // loop_footer
    %s17 = sadd.s32 1, %s13
  $region7: #{_lambda_.10} parent=0 // loop_footer_branch
    %12 = sbr.rel target = $region3
  $region8: #{_lambda_.10} parent=0 // loop_exit
    _

// kernel: _lambda_.11
$region0: #{_lambda_.11}
  #allocation0 [shape = 'u32[]', space=smem, size = 0x4, offset = 0x4, fixed_abs, tag = 'smem constant byte address 0x4 - core index']
  #allocation1 [shape = 'u32[72,128]{1,0:T(1,128)}', space=vmem, size = 0x9000, scoped, tag = 'internal scratch']
  #allocation2 [shape = 'f32[8,128]{1,0:T(8,128)}', space=vmem, size = 0x1000, scoped, tag = 'scratch operand']
  %s0 = inlined_call_operand.vmem [shape: f32[8,128], index: 0, kind: input, shape index: {}]
  %s1 = inlined_call_operand.vmem [shape: f32[128,128], index: 1, kind: input, shape index: {}]
  %s2 = inlined_call_operand.vmem [shape: f32[1,128], index: 2, kind: input, shape index: {}]
  %s3 = inlined_call_operand.vmem [shape: f32[8,128], index: 3, kind: output, shape index: {}]
  %s4 = sld [smem:[#allocation0]]
  $region30: #{_lambda_.11} parent=0
    _
  %s6 = ssub.s32 1, %s4
  %s7 = scalar_select 0, %s6, %s4
  // Predicated region
  $region2: #{_lambda_.11} parent=0 // pred_check
    _
  $region3: #{_lambda_.11} parent=0 // pred_check_branch
    %9 = sbr.rel (0) target = $region5
  $region4: #{_lambda_.11} parent=0 // pred_region
    _
  $region5: #{_lambda_.11} parent=0 // pred_fallthru
    _
  // Predicated region
  $region6: #{_lambda_.11} parent=0 // pred_check
    _
  $region7: #{_lambda_.11} parent=0 // pred_check_branch
    %11 = sbr.rel (0) target = $region9
  $region8: #{_lambda_.11} parent=0 // pred_region
    _
  $region9: #{_lambda_.11} parent=0 // pred_fallthru
    _
  // Predicated region
  $region10: #{_lambda_.11} parent=0 // pred_check
    _
  $region11: #{_lambda_.11} parent=0 // pred_check_branch
    %13 = sbr.rel (0) target = $region13
  $region12: #{_lambda_.11} parent=0 // pred_region
    _
  $region13: #{_lambda_.11} parent=0 // pred_fallthru
    _
  %p14 = scmp.eq.s32.totalorder 0, 0
  // Predicated region
  $region14: #{_lambda_.11} parent=0 // pred_check
    %p15 = pneg %p14
  $region15: #{_lambda_.11} parent=0 // pred_check_branch
    %17 = sbr.rel (%p15) target = $region17
  $region16: #{_lambda_.11} parent=0 // pred_region
    %18 = vst [vmem:[#allocation2] sm:$0xff] 0.0
  $region17: #{_lambda_.11} parent=0 // pred_fallthru
    _
  %v19 = vld [vmem:[%s0] sm:$0xff]
  %v20 = vld [vmem:[%s1] sm:$0xff]
  %v21 = vld [vmem:[%s1 + $0x8] sm:$0xff]
  %v22 = vld [vmem:[%s1 + $0x10] sm:$0xff]
  %v23 = vld [vmem:[%s1 + $0x18] sm:$0xff]
  %v24 = vld [vmem:[%s1 + $0x20] sm:$0xff]
  %v25 = vld [vmem:[%s1 + $0x28] sm:$0xff]
  %v26 = vld [vmem:[%s1 + $0x30] sm:$0xff]
  %v27 = vld [vmem:[%s1 + $0x38] sm:$0xff]
  %v28 = vld [vmem:[%s1 + $0x40] sm:$0xff]
  %v29 = vld [vmem:[%s1 + $0x48] sm:$0xff]
  %v30 = vld [vmem:[%s1 + $0x50] sm:$0xff]
  %v31 = vld [vmem:[%s1 + $0x58] sm:$0xff]
  %v32 = vld [vmem:[%s1 + $0x60] sm:$0xff]
  %v33 = vld [vmem:[%s1 + $0x68] sm:$0xff]
  %v34 = vld [vmem:[%s1 + $0x70] sm:$0xff]
  %v35 = vld [vmem:[%s1 + $0x78] sm:$0xff]
  %v36 = vld [vmem:[#allocation2] sm:$0xff]
  %37 = vmatpush.msra.mxu0 %v35
  %38 = vmatpush.msra.mxu0 %v34
  %39 = vmatpush.msra.mxu0 %v33
  %40 = vmatpush.msra.mxu0 %v32
  %41 = vmatpush.msra.mxu0 %v31
  %42 = vmatpush.msra.mxu0 %v30
  %43 = vmatpush.msra.mxu0 %v29
  %44 = vmatpush.msra.mxu0 %v28
  %45 = vmatpush.msra.mxu0 %v27
  %46 = vmatpush.msra.mxu0 %v26
  %47 = vmatpush.msra.mxu0 %v25
  %48 = vmatpush.msra.mxu0 %v24
  %49 = vmatpush.msra.mxu0 %v23
  %50 = vmatpush.msra.mxu0 %v22
  %51 = vmatpush.msra.mxu0 %v21
  %52 = vmatpush.msra.mxu0 %v20
  %53 = vmatmul.f32.gmra.mxu0 %v19
  %v54 = vpop.f32.mrf.mxu0
  %v55 = vadd.f32 0.0, %v54
  %56 = vdwg.mxu0
  %v57 = vadd.f32 %v36, %v55
  %58 = vst [vmem:[#allocation2] sm:$0xff] %v57
  // Predicated region
  $region18: #{_lambda_.11} parent=0 // pred_check
    %p59 = pneg %p14
  $region19: #{_lambda_.11} parent=0 // pred_check_branch
    %61 = sbr.rel (%p59) target = $region21
  $region20: #{_lambda_.11} parent=0 // pred_region
    %v62 = vld [vmem:[#allocation2] sm:$0xff]
    %v63 = vld [vmem:[%s2] sm:$0x1]
    %v65 = vperm.slane %v63, 0
    %v67 = vadd.f32 %v62, %v65
    %68 = vst [vmem:[%s3] sm:$0xff] %v67
  $region21: #{_lambda_.11} parent=0 // pred_fallthru
    _
  // Predicated region
  $region22: #{_lambda_.11} parent=0 // pred_check
    _
  $region23: #{_lambda_.11} parent=0 // pred_check_branch
    %70 = sbr.rel (0) target = $region25
  $region24: #{_lambda_.11} parent=0 // pred_region
    _
  $region25: #{_lambda_.11} parent=0 // pred_fallthru
    _
  // Predicated region
  $region26: #{_lambda_.11} parent=0 // pred_check
    _
  $region27: #{_lambda_.11} parent=0 // pred_check_branch
    %72 = sbr.rel (0) target = $region29
  $region28: #{_lambda_.11} parent=0 // pred_region
    _
  $region29: #{_lambda_.11} parent=0 // pred_fallthru
    _

</llo_original>
